<compile_context>
chip_gen: v7x
topology: tpu7x:2x2x1
jax: 0.10.0
libtpu: 0.0.40
codegen_flags: <defaults>
</compile_context>

<pallas_src>
import math

import jax
import jax.numpy as jnp
from jax.experimental import pallas as pl
from jax.experimental.pallas import tpu as pltpu

# ---- model hyper-parameters (small, BERT-like) -------------------------------------
B, S, H = 2, 8, 32          # batch, seq len, hidden size
NUM_HEADS = 4
HEAD_DIM = H // NUM_HEADS
FFN = 4 * H                 # intermediate size (= 128, lane-dense)
N_LAYERS = 2                # encoder.layer[:n_layers]
LN_EPS = 1e-12              # HF BERT LayerNorm eps
ATTN_SCALE = 1.0 / math.sqrt(HEAD_DIM)
BS = B * S                  # flattened (batch * seq) rows


def _layer_norm(x, gamma, beta):
    mu = jnp.mean(x, axis=-1, keepdims=True)
    var = jnp.mean((x - mu) ** 2, axis=-1, keepdims=True)
    inv = jax.lax.rsqrt(var + LN_EPS)
    return (x - mu) * inv * gamma + beta


def bert_encoder_kernel(x_ref, wqkv_ref, wo_ref, wi_ref, wd_ref, vec_ref, out_ref):
    h = x_ref[...].astype(jnp.float32)                                  # (BS, H) f32

    for layer in range(N_LAYERS):                                       # static unroll
        wqkv = wqkv_ref[layer]                                          # (H, 3H) bf16
        wo = wo_ref[layer]                                              # (H, H)  bf16
        wi = wi_ref[layer]                                              # (H, FFN) bf16
        wd = wd_ref[layer]                                              # (FFN, H) bf16
        vec = vec_ref[layer]                                            # (8, FFN) f32
        bqkv = vec[0:1, :3 * H]                                         # scale folded
        bo = vec[1:2, :H]
        g1, b1 = vec[2:3, :H], vec[3:4, :H]
        bi = vec[4:5, :FFN]
        bd = vec[5:6, :H]
        g2, b2 = vec[6:7, :H], vec[7:8, :H]

        # ---- fused QKV projection: one (BS,H)@(H,3H) MXU matmul ---------------------
        qkv = jnp.dot(h.astype(jnp.bfloat16), wqkv,
                      preferred_element_type=jnp.float32) + bqkv        # (BS, 3H)
        qkv = qkv.reshape(B, S, 3 * H)

        # ---- head-batched attention over B*NUM_HEADS: stack heads on the batch axis -
        def head_stack(off):
            return jnp.concatenate(
                [qkv[:, :, off + hd * HEAD_DIM: off + (hd + 1) * HEAD_DIM]
                 for hd in range(NUM_HEADS)], axis=0)                   # (NH*B, S, HD)

        qh = head_stack(0)           # already scaled (scale folded into Wq/bq)
        kh = head_stack(H)
        vh = head_stack(2 * H)

        s = jnp.einsum('bqd,bkd->bqk', qh, kh,
                       preferred_element_type=jnp.float32)              # (NH*B, S, S)
        s = s - jnp.max(s, axis=-1, keepdims=True)
        p = jnp.exp(s)
        p = p * pl.reciprocal(jnp.sum(p, axis=-1, keepdims=True), approx=True)
        ctx = jnp.einsum('bqk,bkd->bqd', p, vh,
                         preferred_element_type=jnp.float32)            # (NH*B, S, HD)

        # re-assemble heads along lanes -> (B,S,H) -> (BS,H); single Wo matmul
        ctx = jnp.concatenate(
            [ctx[hd * B:(hd + 1) * B] for hd in range(NUM_HEADS)], axis=-1)
        ctx = ctx.reshape(BS, H)
        attn_out = jnp.dot(ctx.astype(jnp.bfloat16), wo,
                           preferred_element_type=jnp.float32) + bo

        # residual + LayerNorm (post-LN, BERT style)
        h1 = _layer_norm(h + attn_out, g1, b1)

        # ---- feed-forward ------------------------------------------------------------
        inter = jnp.dot(h1.astype(jnp.bfloat16), wi,
                        preferred_element_type=jnp.float32) + bi
        # tanh-approx GELU (EUP); use approximate=False for bit-parity with HF "gelu".
        inter = jax.nn.gelu(inter, approximate=True)
        ffn_out = jnp.dot(inter.astype(jnp.bfloat16), wd,
                          preferred_element_type=jnp.float32) + bd

        h = _layer_norm(h1 + ffn_out, g2, b2)

    out_ref[...] = h.astype(out_ref.dtype)


@jax.jit
def bert_encoder(x, packed_params):
    """Equivalent of `self.encoder(x)[0]`: last hidden state after N_LAYERS blocks."""
    wqkv, wo, wi, wd, vec = packed_params
    x2 = x.reshape(BS, H)

    mm_flops = (2 * BS * H * 3 * H                       # QKV
                + 2 * 2 * B * NUM_HEADS * S * S * HEAD_DIM   # scores + ctx
                + 2 * BS * H * H                         # Wo
                + 2 * BS * H * FFN                       # Wi
                + 2 * BS * FFN * H)                      # Wd
    trans = B * NUM_HEADS * S * S + BS * FFN + 2 * BS + B * NUM_HEADS * S
    w_bytes = 2 * (H * 3 * H + H * H + H * FFN + FFN * H) + 4 * 8 * FFN
    cost = pl.CostEstimate(
        flops=N_LAYERS * mm_flops,
        transcendentals=N_LAYERS * trans,
        bytes_accessed=N_LAYERS * w_bytes + 2 * BS * H * 4,
    )

    vmem_spec = pl.BlockSpec(memory_space=pltpu.MemorySpace.VMEM)
    out = pl.pallas_call(
        bert_encoder_kernel,
        out_shape=jax.ShapeDtypeStruct((BS, H), x.dtype),
        in_specs=[vmem_spec] * 6,
        out_specs=vmem_spec,
        cost_estimate=cost,
    )(x2, wqkv, wo, wi, wd, vec)
    return out.reshape(B, S, H)


# ---- parameters ---------------------------------------------------------------------
def init_params(key):
    """Deterministic synthetic BERT-layer params (raw / HF-style), stacked per layer.

    Linear weights are stored [in_features, out_features] (transpose of torch
    nn.Linear.weight) so both kernel and reference compute x @ W + b.
    """
    def w(k, shape, scale=0.02):
        return scale * jax.random.normal(k, shape, dtype=jnp.float32)

    per_layer = []
    for _ in range(N_LAYERS):
        key, *ks = jax.random.split(key, 17)
        per_layer.append((
            w(ks[0], (H, H)), w(ks[1], (1, H), 0.01),            # Wq, bq
            w(ks[2], (H, H)), w(ks[3], (1, H), 0.01),            # Wk, bk
            w(ks[4], (H, H)), w(ks[5], (1, H), 0.01),            # Wv, bv
            w(ks[6], (H, H)), w(ks[7], (1, H), 0.01),            # Wo, bo
            1.0 + w(ks[8], (1, H), 0.05), w(ks[9], (1, H), 0.02),    # LN1 gamma, beta
            w(ks[10], (H, FFN)), w(ks[11], (1, FFN), 0.01),      # Wi, bi
            w(ks[12], (FFN, H)), w(ks[13], (1, H), 0.01),        # Wd, bd
            1.0 + w(ks[14], (1, H), 0.05), w(ks[15], (1, H), 0.02),  # LN2 gamma, beta
        ))
    return tuple(jnp.stack([layer[i] for layer in per_layer], axis=0)
                 for i in range(len(per_layer[0])))


def pack_params(raw):
    """One-time transform of raw params into the kernel format:
    bf16 fused QKV / Wo / Wi / Wd weights (attention scale folded into Wq, bq)
    plus one lane-dense (N_LAYERS, 8, FFN) f32 slab of all biases / LN params."""
    (wq, bq, wk, bk, wv, bv, wo, bo, g1, b1,
     wi, bi, wd, bd, g2, b2) = raw

    wqkv = jnp.concatenate([wq * ATTN_SCALE, wk, wv], axis=-1)           # (L, H, 3H)

    def row(v):  # (L, 1, n) -> (L, 1, FFN), zero padded on lanes
        return jnp.pad(v, ((0, 0), (0, 0), (0, FFN - v.shape[-1])))

    vec = jnp.concatenate([
        row(jnp.concatenate([bq * ATTN_SCALE, bk, bv], axis=-1)),       # row 0: bqkv
        row(bo), row(g1), row(b1),                                       # rows 1-3
        row(bi), row(bd), row(g2), row(b2),                              # rows 4-7
    ], axis=1).astype(jnp.float32)                                       # (L, 8, FFN)

    return (wqkv.astype(jnp.bfloat16), wo.astype(jnp.bfloat16),
            wi.astype(jnp.bfloat16), wd.astype(jnp.bfloat16), vec)


# ---- pure-JAX reference (exact softmax, exact erf GELU, f32 weights) -----------------
def bert_encoder_ref(x, raw):
    h = x.astype(jnp.float32)
    for l in range(N_LAYERS):
        (wq, bq, wk, bk, wv, bv, wo, bo, g1, b1,
         wi, bi, wd, bd, g2, b2) = (p[l] for p in raw)
        q = jnp.einsum('bsh,hk->bsk', h, wq) + bq
        k = jnp.einsum('bsh,hk->bsk', h, wk) + bk
        v = jnp.einsum('bsh,hk->bsk', h, wv) + bv
        q = q.reshape(B, S, NUM_HEADS, HEAD_DIM).transpose(0, 2, 1, 3)
        k = k.reshape(B, S, NUM_HEADS, HEAD_DIM).transpose(0, 2, 1, 3)
        v = v.reshape(B, S, NUM_HEADS, HEAD_DIM).transpose(0, 2, 1, 3)
        s = jnp.einsum('bhqd,bhkd->bhqk', q, k) * ATTN_SCALE
        p = jax.nn.softmax(s, axis=-1)
        ctx = jnp.einsum('bhqk,bhkd->bhqd', p, v).transpose(0, 2, 1, 3).reshape(B, S, H)
        attn = jnp.einsum('bsh,hk->bsk', ctx, wo) + bo
        h1 = _layer_norm(h + attn, g1, b1)
        inter = jax.nn.gelu(jnp.einsum('bsh,hf->bsf', h1, wi) + bi, approximate=False)
        ffn = jnp.einsum('bsf,fh->bsh', inter, wd) + bd
        h = _layer_norm(h1 + ffn, g2, b2)
    return h


if __name__ == "__main__":
    key = jax.random.PRNGKey(0)
    k_x, k_p = jax.random.split(key)
    x = jax.random.normal(k_x, (B, S, H), dtype=jnp.float32)

    raw_params = init_params(k_p)
    packed = pack_params(raw_params)

    out = bert_encoder(x, packed)
    jax.block_until_ready(out)
    assert out.shape == (B, S, H)

    ref = bert_encoder_ref(x, raw_params)
    max_err = float(jnp.max(jnp.abs(out - ref)))
    assert max_err < 1e-2, f"mismatch vs reference: max abs err {max_err}"
    print("KERNEL_OK")
</pallas_src>

<mosaic_0001>
module attributes {stable_mosaic.version = 11 : i64} {
  func.func @bert_encoder_kernel(%arg0: memref<16x32xf32, #tpu.memory_space<vmem>>, %arg1: memref<2x32x96xbf16, #tpu.memory_space<vmem>>, %arg2: memref<2x32x32xbf16, #tpu.memory_space<vmem>>, %arg3: memref<2x32x128xbf16, #tpu.memory_space<vmem>>, %arg4: memref<2x128x32xbf16, #tpu.memory_space<vmem>>, %arg5: memref<2x8x128xf32, #tpu.memory_space<vmem>>, %arg6: memref<16x32xf32, #tpu.memory_space<vmem>>) attributes {dimension_semantics = [], scalar_prefetch = 0 : i64, scratch_operands = 0 : i64, tpu.core_type = #tpu.core_type<tc>} {
    %c0 = arith.constant 0 : index
    %c0_0 = arith.constant 0 : index
    %0 = vector.load %arg0[%c0, %c0_0] : memref<16x32xf32, #tpu.memory_space<vmem>>, vector<16x32xf32>
    %c0_1 = arith.constant 0 : index
    %c0_2 = arith.constant 0 : index
    %c0_3 = arith.constant 0 : index
    %1 = vector.load %arg1[%c0_1, %c0_2, %c0_3] : memref<2x32x96xbf16, #tpu.memory_space<vmem>>, vector<1x32x96xbf16>
    %2 = vector.shape_cast %1 : vector<1x32x96xbf16> to vector<32x96xbf16>
    %c0_4 = arith.constant 0 : index
    %c0_5 = arith.constant 0 : index
    %c0_6 = arith.constant 0 : index
    %3 = vector.load %arg2[%c0_4, %c0_5, %c0_6] : memref<2x32x32xbf16, #tpu.memory_space<vmem>>, vector<1x32x32xbf16>
    %4 = vector.shape_cast %3 : vector<1x32x32xbf16> to vector<32x32xbf16>
    %c0_7 = arith.constant 0 : index
    %c0_8 = arith.constant 0 : index
    %c0_9 = arith.constant 0 : index
    %5 = vector.load %arg3[%c0_7, %c0_8, %c0_9] : memref<2x32x128xbf16, #tpu.memory_space<vmem>>, vector<1x32x128xbf16>
    %6 = vector.shape_cast %5 : vector<1x32x128xbf16> to vector<32x128xbf16>
    %c0_10 = arith.constant 0 : index
    %c0_11 = arith.constant 0 : index
    %c0_12 = arith.constant 0 : index
    %7 = vector.load %arg4[%c0_10, %c0_11, %c0_12] : memref<2x128x32xbf16, #tpu.memory_space<vmem>>, vector<1x128x32xbf16>
    %8 = vector.shape_cast %7 : vector<1x128x32xbf16> to vector<128x32xbf16>
    %c0_13 = arith.constant 0 : index
    %c0_14 = arith.constant 0 : index
    %c0_15 = arith.constant 0 : index
    %9 = vector.load %arg5[%c0_13, %c0_14, %c0_15] : memref<2x8x128xf32, #tpu.memory_space<vmem>>, vector<1x8x128xf32>
    %10 = vector.shape_cast %9 : vector<1x8x128xf32> to vector<8x128xf32>
    %11 = vector.extract_strided_slice %10 {offsets = [0, 0], sizes = [1, 96], strides = [1, 1]} : vector<8x128xf32> to vector<1x96xf32>
    %12 = vector.extract_strided_slice %10 {offsets = [1, 0], sizes = [1, 32], strides = [1, 1]} : vector<8x128xf32> to vector<1x32xf32>
    %13 = vector.extract_strided_slice %10 {offsets = [2, 0], sizes = [1, 32], strides = [1, 1]} : vector<8x128xf32> to vector<1x32xf32>
    %14 = vector.extract_strided_slice %10 {offsets = [3, 0], sizes = [1, 32], strides = [1, 1]} : vector<8x128xf32> to vector<1x32xf32>
    %15 = vector.extract_strided_slice %10 {offsets = [4, 0], sizes = [1, 128], strides = [1, 1]} : vector<8x128xf32> to vector<1x128xf32>
    %16 = vector.extract_strided_slice %10 {offsets = [5, 0], sizes = [1, 32], strides = [1, 1]} : vector<8x128xf32> to vector<1x32xf32>
    %17 = vector.extract_strided_slice %10 {offsets = [6, 0], sizes = [1, 32], strides = [1, 1]} : vector<8x128xf32> to vector<1x32xf32>
    %18 = vector.extract_strided_slice %10 {offsets = [7, 0], sizes = [1, 32], strides = [1, 1]} : vector<8x128xf32> to vector<1x32xf32>
    %19 = arith.truncf %0 : vector<16x32xf32> to vector<16x32xbf16>
    %cst = arith.constant dense<0.000000e+00> : vector<16x96xf32>
    %20 = tpu.matmul %19, %2, %cst {dimension_numbers = #tpu.dot_dimension_numbers<[1], [0], [0], [1], [0, 0, 1, 1], [], []>} : vector<16x32xbf16>, vector<32x96xbf16>, vector<16x96xf32> -> vector<16x96xf32>
    %21 = vector.broadcast %11 : vector<1x96xf32> to vector<16x96xf32>
    %22 = arith.addf %20, %21 : vector<16x96xf32>
    %23 = vector.shape_cast %22 : vector<16x96xf32> to vector<2x8x96xf32>
    %24 = vector.extract_strided_slice %23 {offsets = [0, 0, 0], sizes = [2, 8, 8], strides = [1, 1, 1]} : vector<2x8x96xf32> to vector<2x8x8xf32>
    %25 = vector.extract_strided_slice %23 {offsets = [0, 0, 8], sizes = [2, 8, 8], strides = [1, 1, 1]} : vector<2x8x96xf32> to vector<2x8x8xf32>
    %26 = vector.extract_strided_slice %23 {offsets = [0, 0, 16], sizes = [2, 8, 8], strides = [1, 1, 1]} : vector<2x8x96xf32> to vector<2x8x8xf32>
    %27 = vector.extract_strided_slice %23 {offsets = [0, 0, 24], sizes = [2, 8, 8], strides = [1, 1, 1]} : vector<2x8x96xf32> to vector<2x8x8xf32>
    %28 = tpu.concatenate %24, %25, %26, %27 in 0 : vector<2x8x8xf32>, vector<2x8x8xf32>, vector<2x8x8xf32>, vector<2x8x8xf32> -> vector<8x8x8xf32>
    %29 = vector.extract_strided_slice %23 {offsets = [0, 0, 32], sizes = [2, 8, 8], strides = [1, 1, 1]} : vector<2x8x96xf32> to vector<2x8x8xf32>
    %30 = vector.extract_strided_slice %23 {offsets = [0, 0, 40], sizes = [2, 8, 8], strides = [1, 1, 1]} : vector<2x8x96xf32> to vector<2x8x8xf32>
    %31 = vector.extract_strided_slice %23 {offsets = [0, 0, 48], sizes = [2, 8, 8], strides = [1, 1, 1]} : vector<2x8x96xf32> to vector<2x8x8xf32>
    %32 = vector.extract_strided_slice %23 {offsets = [0, 0, 56], sizes = [2, 8, 8], strides = [1, 1, 1]} : vector<2x8x96xf32> to vector<2x8x8xf32>
    %33 = tpu.concatenate %29, %30, %31, %32 in 0 : vector<2x8x8xf32>, vector<2x8x8xf32>, vector<2x8x8xf32>, vector<2x8x8xf32> -> vector<8x8x8xf32>
    %34 = vector.extract_strided_slice %23 {offsets = [0, 0, 64], sizes = [2, 8, 8], strides = [1, 1, 1]} : vector<2x8x96xf32> to vector<2x8x8xf32>
    %35 = vector.extract_strided_slice %23 {offsets = [0, 0, 72], sizes = [2, 8, 8], strides = [1, 1, 1]} : vector<2x8x96xf32> to vector<2x8x8xf32>
    %36 = vector.extract_strided_slice %23 {offsets = [0, 0, 80], sizes = [2, 8, 8], strides = [1, 1, 1]} : vector<2x8x96xf32> to vector<2x8x8xf32>
    %37 = vector.extract_strided_slice %23 {offsets = [0, 0, 88], sizes = [2, 8, 8], strides = [1, 1, 1]} : vector<2x8x96xf32> to vector<2x8x8xf32>
    %38 = tpu.concatenate %34, %35, %36, %37 in 0 : vector<2x8x8xf32>, vector<2x8x8xf32>, vector<2x8x8xf32>, vector<2x8x8xf32> -> vector<8x8x8xf32>
    "tpu.trace_start"() <{level = 10 : i32, message = "bqd,bkd->bqk"}> : () -> ()
    %cst_16 = arith.constant dense<0.000000e+00> : vector<8x8x8xf32>
    %39 = tpu.matmul %28, %33, %cst_16 {dimension_numbers = #tpu.dot_dimension_numbers<[2], [2], [1], [1], [0, 0, 0, 1, 1, 1], [0], [0]>} : vector<8x8x8xf32>, vector<8x8x8xf32>, vector<8x8x8xf32> -> vector<8x8x8xf32>
    "tpu.trace_stop"() : () -> ()
    %cst_17 = arith.constant dense<0xFF800000> : vector<8x8xf32>
    %40 = vector.multi_reduction <maximumf>, %39, %cst_17 [2] : vector<8x8x8xf32> to vector<8x8xf32>
    %41 = vector.shape_cast %40 : vector<8x8xf32> to vector<8x8x1xf32>
    %42 = vector.broadcast %41 : vector<8x8x1xf32> to vector<8x8x8xf32>
    %43 = arith.subf %39, %42 : vector<8x8x8xf32>
    %44 = math.exp %43 : vector<8x8x8xf32>
    %cst_18 = arith.constant dense<0.000000e+00> : vector<8x8xf32>
    %45 = vector.multi_reduction <add>, %44, %cst_18 [2] : vector<8x8x8xf32> to vector<8x8xf32>
    %46 = vector.shape_cast %45 : vector<8x8xf32> to vector<8x8x1xf32>
    %47 = tpu.reciprocal %46 {approx = true} : vector<8x8x1xf32> -> vector<8x8x1xf32>
    %48 = vector.broadcast %47 : vector<8x8x1xf32> to vector<8x8x8xf32>
    %49 = arith.mulf %44, %48 : vector<8x8x8xf32>
    "tpu.trace_start"() <{level = 10 : i32, message = "bqk,bkd->bqd"}> : () -> ()
    %cst_19 = arith.constant dense<0.000000e+00> : vector<8x8x8xf32>
    %50 = tpu.matmul %49, %38, %cst_19 {dimension_numbers = #tpu.dot_dimension_numbers<[2], [1], [1], [2], [0, 0, 0, 1, 1, 2], [0], [0]>} : vector<8x8x8xf32>, vector<8x8x8xf32>, vector<8x8x8xf32> -> vector<8x8x8xf32>
    "tpu.trace_stop"() : () -> ()
    %51 = vector.extract_strided_slice %50 {offsets = [0, 0, 0], sizes = [2, 8, 8], strides = [1, 1, 1]} : vector<8x8x8xf32> to vector<2x8x8xf32>
    %52 = vector.extract_strided_slice %50 {offsets = [2, 0, 0], sizes = [2, 8, 8], strides = [1, 1, 1]} : vector<8x8x8xf32> to vector<2x8x8xf32>
    %53 = vector.extract_strided_slice %50 {offsets = [4, 0, 0], sizes = [2, 8, 8], strides = [1, 1, 1]} : vector<8x8x8xf32> to vector<2x8x8xf32>
    %54 = vector.extract_strided_slice %50 {offsets = [6, 0, 0], sizes = [2, 8, 8], strides = [1, 1, 1]} : vector<8x8x8xf32> to vector<2x8x8xf32>
    %55 = tpu.concatenate %51, %52, %53, %54 in 2 : vector<2x8x8xf32>, vector<2x8x8xf32>, vector<2x8x8xf32>, vector<2x8x8xf32> -> vector<2x8x32xf32>
    %56 = vector.shape_cast %55 : vector<2x8x32xf32> to vector<16x32xf32>
    %57 = arith.truncf %56 : vector<16x32xf32> to vector<16x32xbf16>
    %cst_20 = arith.constant dense<0.000000e+00> : vector<16x32xf32>
    %58 = tpu.matmul %57, %4, %cst_20 {dimension_numbers = #tpu.dot_dimension_numbers<[1], [0], [0], [1], [0, 0, 1, 1], [], []>} : vector<16x32xbf16>, vector<32x32xbf16>, vector<16x32xf32> -> vector<16x32xf32>
    %59 = vector.broadcast %12 : vector<1x32xf32> to vector<16x32xf32>
    %60 = arith.addf %58, %59 : vector<16x32xf32>
    %61 = arith.addf %0, %60 : vector<16x32xf32>
    %cst_21 = arith.constant dense<0.000000e+00> : vector<16xf32>
    %62 = vector.multi_reduction <add>, %61, %cst_21 [1] : vector<16x32xf32> to vector<16xf32>
    %63 = vector.shape_cast %62 : vector<16xf32> to vector<16x1xf32>
    %cst_22 = arith.constant 3.200000e+01 : f32
    %64 = vector.broadcast %cst_22 : f32 to vector<16x1xf32>
    %65 = arith.divf %63, %64 : vector<16x1xf32>
    %66 = vector.broadcast %65 : vector<16x1xf32> to vector<16x32xf32>
    %67 = arith.subf %61, %66 : vector<16x32xf32>
    %68 = arith.mulf %67, %67 : vector<16x32xf32>
    %cst_23 = arith.constant dense<0.000000e+00> : vector<16xf32>
    %69 = vector.multi_reduction <add>, %68, %cst_23 [1] : vector<16x32xf32> to vector<16xf32>
    %70 = vector.shape_cast %69 : vector<16xf32> to vector<16x1xf32>
    %cst_24 = arith.constant 3.200000e+01 : f32
    %71 = vector.broadcast %cst_24 : f32 to vector<16x1xf32>
    %72 = arith.divf %70, %71 : vector<16x1xf32>
    %cst_25 = arith.constant 9.99999996E-13 : f32
    %73 = vector.broadcast %cst_25 : f32 to vector<16x1xf32>
    %74 = arith.addf %72, %73 : vector<16x1xf32>
    %75 = math.rsqrt %74 : vector<16x1xf32>
    %76 = vector.broadcast %65 : vector<16x1xf32> to vector<16x32xf32>
    %77 = arith.subf %61, %76 : vector<16x32xf32>
    %78 = vector.broadcast %75 : vector<16x1xf32> to vector<16x32xf32>
    %79 = arith.mulf %77, %78 : vector<16x32xf32>
    %80 = vector.broadcast %13 : vector<1x32xf32> to vector<16x32xf32>
    %81 = arith.mulf %79, %80 : vector<16x32xf32>
    %82 = vector.broadcast %14 : vector<1x32xf32> to vector<16x32xf32>
    %83 = arith.addf %81, %82 : vector<16x32xf32>
    %84 = arith.truncf %83 : vector<16x32xf32> to vector<16x32xbf16>
    %cst_26 = arith.constant dense<0.000000e+00> : vector<16x128xf32>
    %85 = tpu.matmul %84, %6, %cst_26 {dimension_numbers = #tpu.dot_dimension_numbers<[1], [0], [0], [1], [0, 0, 1, 1], [], []>} : vector<16x32xbf16>, vector<32x128xbf16>, vector<16x128xf32> -> vector<16x128xf32>
    %86 = vector.broadcast %15 : vector<1x128xf32> to vector<16x128xf32>
    %87 = arith.addf %85, %86 : vector<16x128xf32>
    %88 = arith.mulf %87, %87 : vector<16x128xf32>
    %89 = arith.mulf %87, %88 : vector<16x128xf32>
    %cst_27 = arith.constant 4.471500e-02 : f32
    %90 = vector.broadcast %cst_27 : f32 to vector<16x128xf32>
    %91 = arith.mulf %90, %89 : vector<16x128xf32>
    %92 = arith.addf %87, %91 : vector<16x128xf32>
    %cst_28 = arith.constant 0.797884583 : f32
    %93 = vector.broadcast %cst_28 : f32 to vector<16x128xf32>
    %94 = arith.mulf %93, %92 : vector<16x128xf32>
    %95 = math.tanh %94 : vector<16x128xf32>
    %cst_29 = arith.constant 1.000000e+00 : f32
    %96 = vector.broadcast %cst_29 : f32 to vector<16x128xf32>
    %97 = arith.addf %96, %95 : vector<16x128xf32>
    %cst_30 = arith.constant 5.000000e-01 : f32
    %98 = vector.broadcast %cst_30 : f32 to vector<16x128xf32>
    %99 = arith.mulf %98, %97 : vector<16x128xf32>
    %100 = arith.mulf %87, %99 : vector<16x128xf32>
    %101 = arith.truncf %100 : vector<16x128xf32> to vector<16x128xbf16>
    %cst_31 = arith.constant dense<0.000000e+00> : vector<16x32xf32>
    %102 = tpu.matmul %101, %8, %cst_31 {dimension_numbers = #tpu.dot_dimension_numbers<[1], [0], [0], [1], [0, 0, 1, 1], [], []>} : vector<16x128xbf16>, vector<128x32xbf16>, vector<16x32xf32> -> vector<16x32xf32>
    %103 = vector.broadcast %16 : vector<1x32xf32> to vector<16x32xf32>
    %104 = arith.addf %102, %103 : vector<16x32xf32>
    %105 = arith.addf %83, %104 : vector<16x32xf32>
    %cst_32 = arith.constant dense<0.000000e+00> : vector<16xf32>
    %106 = vector.multi_reduction <add>, %105, %cst_32 [1] : vector<16x32xf32> to vector<16xf32>
    %107 = vector.shape_cast %106 : vector<16xf32> to vector<16x1xf32>
    %cst_33 = arith.constant 3.200000e+01 : f32
    %108 = vector.broadcast %cst_33 : f32 to vector<16x1xf32>
    %109 = arith.divf %107, %108 : vector<16x1xf32>
    %110 = vector.broadcast %109 : vector<16x1xf32> to vector<16x32xf32>
    %111 = arith.subf %105, %110 : vector<16x32xf32>
    %112 = arith.mulf %111, %111 : vector<16x32xf32>
    %cst_34 = arith.constant dense<0.000000e+00> : vector<16xf32>
    %113 = vector.multi_reduction <add>, %112, %cst_34 [1] : vector<16x32xf32> to vector<16xf32>
    %114 = vector.shape_cast %113 : vector<16xf32> to vector<16x1xf32>
    %cst_35 = arith.constant 3.200000e+01 : f32
    %115 = vector.broadcast %cst_35 : f32 to vector<16x1xf32>
    %116 = arith.divf %114, %115 : vector<16x1xf32>
    %cst_36 = arith.constant 9.99999996E-13 : f32
    %117 = vector.broadcast %cst_36 : f32 to vector<16x1xf32>
    %118 = arith.addf %116, %117 : vector<16x1xf32>
    %119 = math.rsqrt %118 : vector<16x1xf32>
    %120 = vector.broadcast %109 : vector<16x1xf32> to vector<16x32xf32>
    %121 = arith.subf %105, %120 : vector<16x32xf32>
    %122 = vector.broadcast %119 : vector<16x1xf32> to vector<16x32xf32>
    %123 = arith.mulf %121, %122 : vector<16x32xf32>
    %124 = vector.broadcast %17 : vector<1x32xf32> to vector<16x32xf32>
    %125 = arith.mulf %123, %124 : vector<16x32xf32>
    %126 = vector.broadcast %18 : vector<1x32xf32> to vector<16x32xf32>
    %127 = arith.addf %125, %126 : vector<16x32xf32>
    %c1 = arith.constant 1 : index
    %c0_37 = arith.constant 0 : index
    %c0_38 = arith.constant 0 : index
    %128 = vector.load %arg1[%c1, %c0_37, %c0_38] : memref<2x32x96xbf16, #tpu.memory_space<vmem>>, vector<1x32x96xbf16>
    %129 = vector.shape_cast %128 : vector<1x32x96xbf16> to vector<32x96xbf16>
    %c1_39 = arith.constant 1 : index
    %c0_40 = arith.constant 0 : index
    %c0_41 = arith.constant 0 : index
    %130 = vector.load %arg2[%c1_39, %c0_40, %c0_41] : memref<2x32x32xbf16, #tpu.memory_space<vmem>>, vector<1x32x32xbf16>
    %131 = vector.shape_cast %130 : vector<1x32x32xbf16> to vector<32x32xbf16>
    %c1_42 = arith.constant 1 : index
    %c0_43 = arith.constant 0 : index
    %c0_44 = arith.constant 0 : index
    %132 = vector.load %arg3[%c1_42, %c0_43, %c0_44] : memref<2x32x128xbf16, #tpu.memory_space<vmem>>, vector<1x32x128xbf16>
    %133 = vector.shape_cast %132 : vector<1x32x128xbf16> to vector<32x128xbf16>
    %c1_45 = arith.constant 1 : index
    %c0_46 = arith.constant 0 : index
    %c0_47 = arith.constant 0 : index
    %134 = vector.load %arg4[%c1_45, %c0_46, %c0_47] : memref<2x128x32xbf16, #tpu.memory_space<vmem>>, vector<1x128x32xbf16>
    %135 = vector.shape_cast %134 : vector<1x128x32xbf16> to vector<128x32xbf16>
    %c1_48 = arith.constant 1 : index
    %c0_49 = arith.constant 0 : index
    %c0_50 = arith.constant 0 : index
    %136 = vector.load %arg5[%c1_48, %c0_49, %c0_50] : memref<2x8x128xf32, #tpu.memory_space<vmem>>, vector<1x8x128xf32>
    %137 = vector.shape_cast %136 : vector<1x8x128xf32> to vector<8x128xf32>
    %138 = vector.extract_strided_slice %137 {offsets = [0, 0], sizes = [1, 96], strides = [1, 1]} : vector<8x128xf32> to vector<1x96xf32>
    %139 = vector.extract_strided_slice %137 {offsets = [1, 0], sizes = [1, 32], strides = [1, 1]} : vector<8x128xf32> to vector<1x32xf32>
    %140 = vector.extract_strided_slice %137 {offsets = [2, 0], sizes = [1, 32], strides = [1, 1]} : vector<8x128xf32> to vector<1x32xf32>
    %141 = vector.extract_strided_slice %137 {offsets = [3, 0], sizes = [1, 32], strides = [1, 1]} : vector<8x128xf32> to vector<1x32xf32>
    %142 = vector.extract_strided_slice %137 {offsets = [4, 0], sizes = [1, 128], strides = [1, 1]} : vector<8x128xf32> to vector<1x128xf32>
    %143 = vector.extract_strided_slice %137 {offsets = [5, 0], sizes = [1, 32], strides = [1, 1]} : vector<8x128xf32> to vector<1x32xf32>
    %144 = vector.extract_strided_slice %137 {offsets = [6, 0], sizes = [1, 32], strides = [1, 1]} : vector<8x128xf32> to vector<1x32xf32>
    %145 = vector.extract_strided_slice %137 {offsets = [7, 0], sizes = [1, 32], strides = [1, 1]} : vector<8x128xf32> to vector<1x32xf32>
    %146 = arith.truncf %127 : vector<16x32xf32> to vector<16x32xbf16>
    %cst_51 = arith.constant dense<0.000000e+00> : vector<16x96xf32>
    %147 = tpu.matmul %146, %129, %cst_51 {dimension_numbers = #tpu.dot_dimension_numbers<[1], [0], [0], [1], [0, 0, 1, 1], [], []>} : vector<16x32xbf16>, vector<32x96xbf16>, vector<16x96xf32> -> vector<16x96xf32>
    %148 = vector.broadcast %138 : vector<1x96xf32> to vector<16x96xf32>
    %149 = arith.addf %147, %148 : vector<16x96xf32>
    %150 = vector.shape_cast %149 : vector<16x96xf32> to vector<2x8x96xf32>
    %151 = vector.extract_strided_slice %150 {offsets = [0, 0, 0], sizes = [2, 8, 8], strides = [1, 1, 1]} : vector<2x8x96xf32> to vector<2x8x8xf32>
    %152 = vector.extract_strided_slice %150 {offsets = [0, 0, 8], sizes = [2, 8, 8], strides = [1, 1, 1]} : vector<2x8x96xf32> to vector<2x8x8xf32>
    %153 = vector.extract_strided_slice %150 {offsets = [0, 0, 16], sizes = [2, 8, 8], strides = [1, 1, 1]} : vector<2x8x96xf32> to vector<2x8x8xf32>
    %154 = vector.extract_strided_slice %150 {offsets = [0, 0, 24], sizes = [2, 8, 8], strides = [1, 1, 1]} : vector<2x8x96xf32> to vector<2x8x8xf32>
    %155 = tpu.concatenate %151, %152, %153, %154 in 0 : vector<2x8x8xf32>, vector<2x8x8xf32>, vector<2x8x8xf32>, vector<2x8x8xf32> -> vector<8x8x8xf32>
    %156 = vector.extract_strided_slice %150 {offsets = [0, 0, 32], sizes = [2, 8, 8], strides = [1, 1, 1]} : vector<2x8x96xf32> to vector<2x8x8xf32>
    %157 = vector.extract_strided_slice %150 {offsets = [0, 0, 40], sizes = [2, 8, 8], strides = [1, 1, 1]} : vector<2x8x96xf32> to vector<2x8x8xf32>
    %158 = vector.extract_strided_slice %150 {offsets = [0, 0, 48], sizes = [2, 8, 8], strides = [1, 1, 1]} : vector<2x8x96xf32> to vector<2x8x8xf32>
    %159 = vector.extract_strided_slice %150 {offsets = [0, 0, 56], sizes = [2, 8, 8], strides = [1, 1, 1]} : vector<2x8x96xf32> to vector<2x8x8xf32>
    %160 = tpu.concatenate %156, %157, %158, %159 in 0 : vector<2x8x8xf32>, vector<2x8x8xf32>, vector<2x8x8xf32>, vector<2x8x8xf32> -> vector<8x8x8xf32>
    %161 = vector.extract_strided_slice %150 {offsets = [0, 0, 64], sizes = [2, 8, 8], strides = [1, 1, 1]} : vector<2x8x96xf32> to vector<2x8x8xf32>
    %162 = vector.extract_strided_slice %150 {offsets = [0, 0, 72], sizes = [2, 8, 8], strides = [1, 1, 1]} : vector<2x8x96xf32> to vector<2x8x8xf32>
    %163 = vector.extract_strided_slice %150 {offsets = [0, 0, 80], sizes = [2, 8, 8], strides = [1, 1, 1]} : vector<2x8x96xf32> to vector<2x8x8xf32>
    %164 = vector.extract_strided_slice %150 {offsets = [0, 0, 88], sizes = [2, 8, 8], strides = [1, 1, 1]} : vector<2x8x96xf32> to vector<2x8x8xf32>
    %165 = tpu.concatenate %161, %162, %163, %164 in 0 : vector<2x8x8xf32>, vector<2x8x8xf32>, vector<2x8x8xf32>, vector<2x8x8xf32> -> vector<8x8x8xf32>
    "tpu.trace_start"() <{level = 10 : i32, message = "bqd,bkd->bqk"}> : () -> ()
    %cst_52 = arith.constant dense<0.000000e+00> : vector<8x8x8xf32>
    %166 = tpu.matmul %155, %160, %cst_52 {dimension_numbers = #tpu.dot_dimension_numbers<[2], [2], [1], [1], [0, 0, 0, 1, 1, 1], [0], [0]>} : vector<8x8x8xf32>, vector<8x8x8xf32>, vector<8x8x8xf32> -> vector<8x8x8xf32>
    "tpu.trace_stop"() : () -> ()
    %cst_53 = arith.constant dense<0xFF800000> : vector<8x8xf32>
    %167 = vector.multi_reduction <maximumf>, %166, %cst_53 [2] : vector<8x8x8xf32> to vector<8x8xf32>
    %168 = vector.shape_cast %167 : vector<8x8xf32> to vector<8x8x1xf32>
    %169 = vector.broadcast %168 : vector<8x8x1xf32> to vector<8x8x8xf32>
    %170 = arith.subf %166, %169 : vector<8x8x8xf32>
    %171 = math.exp %170 : vector<8x8x8xf32>
    %cst_54 = arith.constant dense<0.000000e+00> : vector<8x8xf32>
    %172 = vector.multi_reduction <add>, %171, %cst_54 [2] : vector<8x8x8xf32> to vector<8x8xf32>
    %173 = vector.shape_cast %172 : vector<8x8xf32> to vector<8x8x1xf32>
    %174 = tpu.reciprocal %173 {approx = true} : vector<8x8x1xf32> -> vector<8x8x1xf32>
    %175 = vector.broadcast %174 : vector<8x8x1xf32> to vector<8x8x8xf32>
    %176 = arith.mulf %171, %175 : vector<8x8x8xf32>
    "tpu.trace_start"() <{level = 10 : i32, message = "bqk,bkd->bqd"}> : () -> ()
    %cst_55 = arith.constant dense<0.000000e+00> : vector<8x8x8xf32>
    %177 = tpu.matmul %176, %165, %cst_55 {dimension_numbers = #tpu.dot_dimension_numbers<[2], [1], [1], [2], [0, 0, 0, 1, 1, 2], [0], [0]>} : vector<8x8x8xf32>, vector<8x8x8xf32>, vector<8x8x8xf32> -> vector<8x8x8xf32>
    "tpu.trace_stop"() : () -> ()
    %178 = vector.extract_strided_slice %177 {offsets = [0, 0, 0], sizes = [2, 8, 8], strides = [1, 1, 1]} : vector<8x8x8xf32> to vector<2x8x8xf32>
    %179 = vector.extract_strided_slice %177 {offsets = [2, 0, 0], sizes = [2, 8, 8], strides = [1, 1, 1]} : vector<8x8x8xf32> to vector<2x8x8xf32>
    %180 = vector.extract_strided_slice %177 {offsets = [4, 0, 0], sizes = [2, 8, 8], strides = [1, 1, 1]} : vector<8x8x8xf32> to vector<2x8x8xf32>
    %181 = vector.extract_strided_slice %177 {offsets = [6, 0, 0], sizes = [2, 8, 8], strides = [1, 1, 1]} : vector<8x8x8xf32> to vector<2x8x8xf32>
    %182 = tpu.concatenate %178, %179, %180, %181 in 2 : vector<2x8x8xf32>, vector<2x8x8xf32>, vector<2x8x8xf32>, vector<2x8x8xf32> -> vector<2x8x32xf32>
    %183 = vector.shape_cast %182 : vector<2x8x32xf32> to vector<16x32xf32>
    %184 = arith.truncf %183 : vector<16x32xf32> to vector<16x32xbf16>
    %cst_56 = arith.constant dense<0.000000e+00> : vector<16x32xf32>
    %185 = tpu.matmul %184, %131, %cst_56 {dimension_numbers = #tpu.dot_dimension_numbers<[1], [0], [0], [1], [0, 0, 1, 1], [], []>} : vector<16x32xbf16>, vector<32x32xbf16>, vector<16x32xf32> -> vector<16x32xf32>
    %186 = vector.broadcast %139 : vector<1x32xf32> to vector<16x32xf32>
    %187 = arith.addf %185, %186 : vector<16x32xf32>
    %188 = arith.addf %127, %187 : vector<16x32xf32>
    %cst_57 = arith.constant dense<0.000000e+00> : vector<16xf32>
    %189 = vector.multi_reduction <add>, %188, %cst_57 [1] : vector<16x32xf32> to vector<16xf32>
    %190 = vector.shape_cast %189 : vector<16xf32> to vector<16x1xf32>
    %cst_58 = arith.constant 3.200000e+01 : f32
    %191 = vector.broadcast %cst_58 : f32 to vector<16x1xf32>
    %192 = arith.divf %190, %191 : vector<16x1xf32>
    %193 = vector.broadcast %192 : vector<16x1xf32> to vector<16x32xf32>
    %194 = arith.subf %188, %193 : vector<16x32xf32>
    %195 = arith.mulf %194, %194 : vector<16x32xf32>
    %cst_59 = arith.constant dense<0.000000e+00> : vector<16xf32>
    %196 = vector.multi_reduction <add>, %195, %cst_59 [1] : vector<16x32xf32> to vector<16xf32>
    %197 = vector.shape_cast %196 : vector<16xf32> to vector<16x1xf32>
    %cst_60 = arith.constant 3.200000e+01 : f32
    %198 = vector.broadcast %cst_60 : f32 to vector<16x1xf32>
    %199 = arith.divf %197, %198 : vector<16x1xf32>
    %cst_61 = arith.constant 9.99999996E-13 : f32
    %200 = vector.broadcast %cst_61 : f32 to vector<16x1xf32>
    %201 = arith.addf %199, %200 : vector<16x1xf32>
    %202 = math.rsqrt %201 : vector<16x1xf32>
    %203 = vector.broadcast %192 : vector<16x1xf32> to vector<16x32xf32>
    %204 = arith.subf %188, %203 : vector<16x32xf32>
    %205 = vector.broadcast %202 : vector<16x1xf32> to vector<16x32xf32>
    %206 = arith.mulf %204, %205 : vector<16x32xf32>
    %207 = vector.broadcast %140 : vector<1x32xf32> to vector<16x32xf32>
    %208 = arith.mulf %206, %207 : vector<16x32xf32>
    %209 = vector.broadcast %141 : vector<1x32xf32> to vector<16x32xf32>
    %210 = arith.addf %208, %209 : vector<16x32xf32>
    %211 = arith.truncf %210 : vector<16x32xf32> to vector<16x32xbf16>
    %cst_62 = arith.constant dense<0.000000e+00> : vector<16x128xf32>
    %212 = tpu.matmul %211, %133, %cst_62 {dimension_numbers = #tpu.dot_dimension_numbers<[1], [0], [0], [1], [0, 0, 1, 1], [], []>} : vector<16x32xbf16>, vector<32x128xbf16>, vector<16x128xf32> -> vector<16x128xf32>
    %213 = vector.broadcast %142 : vector<1x128xf32> to vector<16x128xf32>
    %214 = arith.addf %212, %213 : vector<16x128xf32>
    %215 = arith.mulf %214, %214 : vector<16x128xf32>
    %216 = arith.mulf %214, %215 : vector<16x128xf32>
    %cst_63 = arith.constant 4.471500e-02 : f32
    %217 = vector.broadcast %cst_63 : f32 to vector<16x128xf32>
    %218 = arith.mulf %217, %216 : vector<16x128xf32>
    %219 = arith.addf %214, %218 : vector<16x128xf32>
    %cst_64 = arith.constant 0.797884583 : f32
    %220 = vector.broadcast %cst_64 : f32 to vector<16x128xf32>
    %221 = arith.mulf %220, %219 : vector<16x128xf32>
    %222 = math.tanh %221 : vector<16x128xf32>
    %cst_65 = arith.constant 1.000000e+00 : f32
    %223 = vector.broadcast %cst_65 : f32 to vector<16x128xf32>
    %224 = arith.addf %223, %222 : vector<16x128xf32>
    %cst_66 = arith.constant 5.000000e-01 : f32
    %225 = vector.broadcast %cst_66 : f32 to vector<16x128xf32>
    %226 = arith.mulf %225, %224 : vector<16x128xf32>
    %227 = arith.mulf %214, %226 : vector<16x128xf32>
    %228 = arith.truncf %227 : vector<16x128xf32> to vector<16x128xbf16>
    %cst_67 = arith.constant dense<0.000000e+00> : vector<16x32xf32>
    %229 = tpu.matmul %228, %135, %cst_67 {dimension_numbers = #tpu.dot_dimension_numbers<[1], [0], [0], [1], [0, 0, 1, 1], [], []>} : vector<16x128xbf16>, vector<128x32xbf16>, vector<16x32xf32> -> vector<16x32xf32>
    %230 = vector.broadcast %143 : vector<1x32xf32> to vector<16x32xf32>
    %231 = arith.addf %229, %230 : vector<16x32xf32>
    %232 = arith.addf %210, %231 : vector<16x32xf32>
    %cst_68 = arith.constant dense<0.000000e+00> : vector<16xf32>
    %233 = vector.multi_reduction <add>, %232, %cst_68 [1] : vector<16x32xf32> to vector<16xf32>
    %234 = vector.shape_cast %233 : vector<16xf32> to vector<16x1xf32>
    %cst_69 = arith.constant 3.200000e+01 : f32
    %235 = vector.broadcast %cst_69 : f32 to vector<16x1xf32>
    %236 = arith.divf %234, %235 : vector<16x1xf32>
    %237 = vector.broadcast %236 : vector<16x1xf32> to vector<16x32xf32>
    %238 = arith.subf %232, %237 : vector<16x32xf32>
    %239 = arith.mulf %238, %238 : vector<16x32xf32>
    %cst_70 = arith.constant dense<0.000000e+00> : vector<16xf32>
    %240 = vector.multi_reduction <add>, %239, %cst_70 [1] : vector<16x32xf32> to vector<16xf32>
    %241 = vector.shape_cast %240 : vector<16xf32> to vector<16x1xf32>
    %cst_71 = arith.constant 3.200000e+01 : f32
    %242 = vector.broadcast %cst_71 : f32 to vector<16x1xf32>
    %243 = arith.divf %241, %242 : vector<16x1xf32>
    %cst_72 = arith.constant 9.99999996E-13 : f32
    %244 = vector.broadcast %cst_72 : f32 to vector<16x1xf32>
    %245 = arith.addf %243, %244 : vector<16x1xf32>
    %246 = math.rsqrt %245 : vector<16x1xf32>
    %247 = vector.broadcast %236 : vector<16x1xf32> to vector<16x32xf32>
    %248 = arith.subf %232, %247 : vector<16x32xf32>
    %249 = vector.broadcast %246 : vector<16x1xf32> to vector<16x32xf32>
    %250 = arith.mulf %248, %249 : vector<16x32xf32>
    %251 = vector.broadcast %144 : vector<1x32xf32> to vector<16x32xf32>
    %252 = arith.mulf %250, %251 : vector<16x32xf32>
    %253 = vector.broadcast %145 : vector<1x32xf32> to vector<16x32xf32>
    %254 = arith.addf %252, %253 : vector<16x32xf32>
    %c0_73 = arith.constant 0 : index
    %c0_74 = arith.constant 0 : index
    %255 = vector.load %arg6[%c0_73, %c0_74] : memref<16x32xf32, #tpu.memory_space<vmem>>, vector<16x32xf32>
    tpu.vector_store %arg6[%c0_73, %c0_74], %254 {strides = array<i32>} : memref<16x32xf32, #tpu.memory_space<vmem>>, vector<16x32xf32>,
    return
  }
}

</mosaic_0001>

<llo_original>
// kernel: bert_encoder.1
$region0: #{bert_encoder.1}
  #allocation0 [shape = 'u32[]', space=smem, size = 0x4, offset = 0x4, fixed_abs, tag = 'smem constant byte address 0x4 - core index']
  #allocation1 [shape = 'u32[144,128]{1,0:T(1,128)}', space=vmem, size = 0x12000, scoped, tag = 'internal scratch']
  %s0 = inlined_call_operand.vmem [shape: f32[16,32], index: 0, kind: input, shape index: {}]
  %s1 = inlined_call_operand.vmem [shape: bf16[2,32,96], index: 1, kind: input, shape index: {}]
  %s2 = inlined_call_operand.vmem [shape: bf16[2,32,32], index: 2, kind: input, shape index: {}]
  %s3 = inlined_call_operand.vmem [shape: bf16[2,32,128], index: 3, kind: input, shape index: {}]
  %s4 = inlined_call_operand.vmem [shape: bf16[2,128,32], index: 4, kind: input, shape index: {}]
  %s5 = inlined_call_operand.vmem [shape: f32[2,8,128], index: 5, kind: input, shape index: {}]
  %s6 = inlined_call_operand.hbm [shape: f32[16,32], index: 6, kind: output, shape index: {}]
  %s7 = sld [smem:[#allocation0]]
  $region34: #{bert_encoder.1} parent=0
    _
  %s9 = ssub.s32 1, %s7
  %s10 = scalar_select 0, %s9, %s7
  $region1: #{bert_encoder.1} parent=0
    #allocation2 [shape = 'u8[8192]{0}', space=vmem, size = 0x2000, scoped, tag = 'output window, operand 0, single buffered']
    #allocation3 [shape = 's32[1]{0}', space=sflag, size = 0x4, scoped, tag = 'scoped memory for bert_encoder.1']
    %11 = vsyncpa [#allocation3], 0
    // Predicated region
    $region2: #{bert_encoder.1} parent=1 // pred_check
      _
    $region3: #{bert_encoder.1} parent=1 // pred_check_branch
      %13 = sbr.rel (0) target = $region5
    $region4: #{bert_encoder.1} parent=1 // pred_region
      _
    $region5: #{bert_encoder.1} parent=1 // pred_fallthru
      _
    // Predicated region
    $region6: #{bert_encoder.1} parent=1 // pred_check
      _
    $region7: #{bert_encoder.1} parent=1 // pred_check_branch
      %15 = sbr.rel (0) target = $region9
    $region8: #{bert_encoder.1} parent=1 // pred_region
      _
    $region9: #{bert_encoder.1} parent=1 // pred_fallthru
      _
    // Predicated region
    $region10: #{bert_encoder.1} parent=1 // pred_check
      _
    $region11: #{bert_encoder.1} parent=1 // pred_check_branch
      %17 = sbr.rel (0) target = $region13
    $region12: #{bert_encoder.1} parent=1 // pred_region
      _
    $region13: #{bert_encoder.1} parent=1 // pred_fallthru
      _
    // Predicated region
    $region14: #{bert_encoder.1} parent=1 // pred_check
      _
    $region15: #{bert_encoder.1} parent=1 // pred_check_branch
      %19 = sbr.rel (0) target = $region17
    $region16: #{bert_encoder.1} parent=1 // pred_region
      _
    $region17: #{bert_encoder.1} parent=1 // pred_fallthru
      _
    // Predicated region
    $region18: #{bert_encoder.1} parent=1 // pred_check
      _
    $region19: #{bert_encoder.1} parent=1 // pred_check_branch
      %21 = sbr.rel (0) target = $region21
    $region20: #{bert_encoder.1} parent=1 // pred_region
      _
    $region21: #{bert_encoder.1} parent=1 // pred_fallthru
      _
    // Predicated region
    $region22: #{bert_encoder.1} parent=1 // pred_check
      _
    $region23: #{bert_encoder.1} parent=1 // pred_check_branch
      %23 = sbr.rel (0) target = $region25
    $region24: #{bert_encoder.1} parent=1 // pred_region
      _
    $region25: #{bert_encoder.1} parent=1 // pred_fallthru
      _
    %v25 = vld [vmem:[%s0] sm:$0xff]
    %v26 = vld [vmem:[%s0 + $0x8] sm:$0xff]
    %v27 = vld [vmem:[%s1] sm:$0xf]
    %v28 = vld [vmem:[%s1 + $0x4] sm:$0xf]
    %v29 = vld [vmem:[%s1 + $0x8] sm:$0xf]
    %v30 = vld [vmem:[%s1 + $0xc] sm:$0xf]
    %v31 = vld [vmem:[%s2] sm:$0xf]
    %v32 = vld [vmem:[%s2 + $0x4] sm:$0xf]
    %v33 = vld [vmem:[%s2 + $0x8] sm:$0xf]
    %v34 = vld [vmem:[%s2 + $0xc] sm:$0xf]
    %v35 = vld [vmem:[%s3] sm:$0xf]
    %v36 = vld [vmem:[%s3 + $0x4] sm:$0xf]
    %v37 = vld [vmem:[%s3 + $0x8] sm:$0xf]
    %v38 = vld [vmem:[%s3 + $0xc] sm:$0xf]
    %v39 = vld [vmem:[%s4] sm:$0xf]
    %v40 = vld [vmem:[%s4 + $0x4] sm:$0xf]
    %v41 = vld [vmem:[%s4 + $0x8] sm:$0xf]
    %v42 = vld [vmem:[%s4 + $0xc] sm:$0xf]
    %v43 = vld [vmem:[%s4 + $0x10] sm:$0xf]
    %v44 = vld [vmem:[%s4 + $0x14] sm:$0xf]
    %v45 = vld [vmem:[%s4 + $0x18] sm:$0xf]
    %v46 = vld [vmem:[%s4 + $0x1c] sm:$0xf]
    %v47 = vld [vmem:[%s4 + $0x20] sm:$0xf]
    %v48 = vld [vmem:[%s4 + $0x24] sm:$0xf]
    %v49 = vld [vmem:[%s4 + $0x28] sm:$0xf]
    %v50 = vld [vmem:[%s4 + $0x2c] sm:$0xf]
    %v51 = vld [vmem:[%s4 + $0x30] sm:$0xf]
    %v52 = vld [vmem:[%s4 + $0x34] sm:$0xf]
    %v53 = vld [vmem:[%s4 + $0x38] sm:$0xf]
    %v54 = vld [vmem:[%s4 + $0x3c] sm:$0xf]
    %v55 = vld [vmem:[%s5] sm:$0xff]
    %v56 = vpack.c.bf16 %v26, %v25
    %v57 = vlaneseq
    %v58 = vshrl.u32 %v57, 7
    %v59 = vsub.s32 0, %v58
    %v60 = vrot.slane %v55, %v59
    %v65 = vunpack.c.l.b16 %v27
    %v66 = vunpack.c.l.b16 %v28
    %v67 = vunpack.c.l.b16 %v29
    %v68 = vunpack.c.l.b16 %v30
    %v69 = vpack.c.b16 %v66, %v65
    %v70 = vpack.c.b16 %v68, %v67
    %vm73 = vcmask 261120
    %v75 = vsel %vm73, %v56, 0
    %77 = vmatprep.subr.bf16.mxu0 0
    %78 = vmatpush1.bf16.msra.mxu0 %v69
    %79 = vmatprep.subr.bf16.mxu0 0
    %80 = vmatpush1.bf16.msra.mxu0 %v70
    %81 = vmatprep.subr.bf16.mxu0 0
    %82 = vmatpush1.bf16.msra.mxu0 0
    %83 = vmatprep.subr.bf16.mxu0 0
    %84 = vmatpush1.bf16.msra.mxu0 0
    %85 = vmatprep.subr.bf16.mxu0 0
    %86 = vmatpush1.bf16.msra.mxu0 0
    %87 = vmatprep.subr.bf16.mxu0 0
    %88 = vmatpush1.bf16.msra.mxu0 0
    %89 = vmatprep.subr.bf16.mxu0 0
    %90 = vmatpush1.bf16.msra.mxu0 0
    %91 = vmatprep.subr.bf16.mxu0 0
    %92 = vmatpush1.bf16.msra.mxu0 0
    %93 = vmatprep.subr.bf16.mxu0 0
    %94 = vmatpush1.bf16.msra.mxu0 0
    %95 = vmatprep.subr.bf16.mxu0 0
    %96 = vmatpush1.bf16.msra.mxu0 0
    %97 = vmatprep.subr.bf16.mxu0 0
    %98 = vmatpush1.bf16.msra.mxu0 0
    %99 = vmatprep.subr.bf16.mxu0 0
    %100 = vmatpush1.bf16.msra.mxu0 0
    %101 = vmatprep.subr.bf16.mxu0 0
    %102 = vmatpush1.bf16.msra.mxu0 0
    %103 = vmatprep.subr.bf16.mxu0 0
    %104 = vmatpush1.bf16.msra.mxu0 0
    %105 = vmatprep.subr.bf16.mxu0 0
    %106 = vmatpush1.bf16.msra.mxu0 0
    %107 = vmatprep.subr.bf16.mxu0 0
    %108 = vmatpush1.bf16.msra.mxu0 0
    %109 = vmatprep.mubr.bf16.mxu0 0
    %110 = vmatmul.mubr.bf16.gmra.mrb[0].mxu0 %v75
    %v111 = vpop.f32.mrb[0].mxu0
    %v112 = vadd.f32 %v60, %v111
    %v113 = vpop.f32.mrb[0].mxu0
    %v114 = vpop.f32.mrb[0].mxu0
    %v115 = vadd.f32 %v60, %v114
    %v116 = vpop.f32.mrb[0].mxu0
    %117 = vdwg.mxu0
    %120 = vrot.lane.b32.xlu0 %v112, 120
    %v121 = vpop.permute.xlu0 %120
    %122 = vrot.lane.b32.xlu0 %v115, 120
    %v123 = vpop.permute.xlu0 %122
    %124 = vrot.lane.b32.xlu0 %v112, 112
    %v125 = vpop.permute.xlu0 %124
    %126 = vrot.lane.b32.xlu0 %v115, 112
    %v127 = vpop.permute.xlu0 %126
    %128 = vrot.lane.b32.xlu0 %v112, 104
    %v129 = vpop.permute.xlu0 %128
    %130 = vrot.lane.b32.xlu0 %v115, 104
    %v131 = vpop.permute.xlu0 %130
    %132 = vrot.lane.b32.xlu0 %v112, 96
    %v133 = vpop.permute.xlu0 %132
    %vm134 = vcmask 64512
    %v135 = vsel %vm134, %v112, 0
    %v137 = vsel %vm134, %v133, 0
    %139 = vmatprep.subr.mxu0 0.0
    %140 = vmatpush1.xpose.msra.mxu0 %v137
    %141 = vmatprep.subr.mxu0 0.0
    %142 = vmatpush1.xpose.msra.mxu0 0.0
    %143 = vmatprep.subr.mxu0 0.0
    %144 = vmatpush1.xpose.msra.mxu0 0.0
    %145 = vmatprep.subr.mxu0 0.0
    %146 = vmatpush1.xpose.msra.mxu0 0.0
    %147 = vmatprep.subr.mxu0 0.0
    %148 = vmatpush1.xpose.msra.mxu0 0.0
    %149 = vmatprep.subr.mxu0 0.0
    %150 = vmatpush1.xpose.msra.mxu0 0.0
    %151 = vmatprep.subr.mxu0 0.0
    %152 = vmatpush1.xpose.msra.mxu0 0.0
    %153 = vmatprep.subr.mxu0 0.0
    %154 = vmatpush1.xpose.msra.mxu0 0.0
    %155 = vmatprep.subr.mxu0 0.0
    %156 = vmatpush1.xpose.msra.mxu0 0.0
    %157 = vmatprep.subr.mxu0 0.0
    %158 = vmatpush1.xpose.msra.mxu0 0.0
    %159 = vmatprep.subr.mxu0 0.0
    %160 = vmatpush1.xpose.msra.mxu0 0.0
    %161 = vmatprep.subr.mxu0 0.0
    %162 = vmatpush1.xpose.msra.mxu0 0.0
    %163 = vmatprep.subr.mxu0 0.0
    %164 = vmatpush1.xpose.msra.mxu0 0.0
    %165 = vmatprep.subr.mxu0 0.0
    %166 = vmatpush1.xpose.msra.mxu0 0.0
    %167 = vmatprep.subr.mxu0 0.0
    %168 = vmatpush1.xpose.msra.mxu0 0.0
    %169 = vmatprep.subr.mxu0 0.0
    %170 = vmatpush1.xpose.msra.mxu0 0.0
    %171 = vmatprep.subr.mxu0 0.0
    %172 = vmatpush1.xpose.msra.mxu0 0.0
    %173 = vmatprep.subr.mxu0 0.0
    %174 = vmatpush1.xpose.msra.mxu0 0.0
    %175 = vmatprep.subr.mxu0 0.0
    %176 = vmatpush1.xpose.msra.mxu0 0.0
    %177 = vmatprep.subr.mxu0 0.0
    %178 = vmatpush1.xpose.msra.mxu0 0.0
    %179 = vmatprep.subr.mxu0 0.0
    %180 = vmatpush1.xpose.msra.mxu0 0.0
    %181 = vmatprep.subr.mxu0 0.0
    %182 = vmatpush1.xpose.msra.mxu0 0.0
    %183 = vmatprep.subr.mxu0 0.0
    %184 = vmatpush1.xpose.msra.mxu0 0.0
    %185 = vmatprep.subr.mxu0 0.0
    %186 = vmatpush1.xpose.msra.mxu0 0.0
    %187 = vmatprep.subr.mxu0 0.0
    %188 = vmatpush1.xpose.msra.mxu0 0.0
    %189 = vmatprep.subr.mxu0 0.0
    %190 = vmatpush1.xpose.msra.mxu0 0.0
    %191 = vmatprep.subr.mxu0 0.0
    %192 = vmatpush1.xpose.msra.mxu0 0.0
    %193 = vmatprep.subr.mxu0 0.0
    %194 = vmatpush1.xpose.msra.mxu0 0.0
    %195 = vmatprep.subr.mxu0 0.0
    %196 = vmatpush1.xpose.msra.mxu0 0.0
    %197 = vmatprep.subr.mxu0 0.0
    %198 = vmatpush1.xpose.msra.mxu0 0.0
    %199 = vmatprep.subr.mxu0 0.0
    %200 = vmatpush1.xpose.msra.mxu0 0.0
    %201 = vmatprep.subr.mxu0 0.0
    %202 = vmatpush1.xpose.msra.mxu0 0.0
    %203 = vmatprep.mubr.f32.mxu0 0.0
    %204 = vmatmul.mubr.f32.gmra.mrb[0].mxu0 %v135
    %v205 = vpop.f32.mrb[0].mxu0
    %v206 = vadd.f32 0.0, %v205
    %v207 = vpop.f32.mrb[0].mxu0
    %208 = vdwg.mxu0
    %209 = vrot.lane.b32.xlu0 %v115, 96
    %v210 = vpop.permute.xlu0 %209
    %v211 = vsel %vm134, %v115, 0
    %v213 = vsel %vm134, %v210, 0
    %215 = vmatprep.subr.mxu0 0.0
    %216 = vmatpush1.xpose.msra.mxu0 %v213
    %217 = vmatprep.subr.mxu0 0.0
    %218 = vmatpush1.xpose.msra.mxu0 0.0
    %219 = vmatprep.subr.mxu0 0.0
    %220 = vmatpush1.xpose.msra.mxu0 0.0
    %221 = vmatprep.subr.mxu0 0.0
    %222 = vmatpush1.xpose.msra.mxu0 0.0
    %223 = vmatprep.subr.mxu0 0.0
    %224 = vmatpush1.xpose.msra.mxu0 0.0
    %225 = vmatprep.subr.mxu0 0.0
    %226 = vmatpush1.xpose.msra.mxu0 0.0
    %227 = vmatprep.subr.mxu0 0.0
    %228 = vmatpush1.xpose.msra.mxu0 0.0
    %229 = vmatprep.subr.mxu0 0.0
    %230 = vmatpush1.xpose.msra.mxu0 0.0
    %231 = vmatprep.subr.mxu0 0.0
    %232 = vmatpush1.xpose.msra.mxu0 0.0
    %233 = vmatprep.subr.mxu0 0.0
    %234 = vmatpush1.xpose.msra.mxu0 0.0
    %235 = vmatprep.subr.mxu0 0.0
    %236 = vmatpush1.xpose.msra.mxu0 0.0
    %237 = vmatprep.subr.mxu0 0.0
    %238 = vmatpush1.xpose.msra.mxu0 0.0
    %239 = vmatprep.subr.mxu0 0.0
    %240 = vmatpush1.xpose.msra.mxu0 0.0
    %241 = vmatprep.subr.mxu0 0.0
    %242 = vmatpush1.xpose.msra.mxu0 0.0
    %243 = vmatprep.subr.mxu0 0.0
    %244 = vmatpush1.xpose.msra.mxu0 0.0
    %245 = vmatprep.subr.mxu0 0.0
    %246 = vmatpush1.xpose.msra.mxu0 0.0
    %247 = vmatprep.subr.mxu0 0.0
    %248 = vmatpush1.xpose.msra.mxu0 0.0
    %249 = vmatprep.subr.mxu0 0.0
    %250 = vmatpush1.xpose.msra.mxu0 0.0
    %251 = vmatprep.subr.mxu0 0.0
    %252 = vmatpush1.xpose.msra.mxu0 0.0
    %253 = vmatprep.subr.mxu0 0.0
    %254 = vmatpush1.xpose.msra.mxu0 0.0
    %255 = vmatprep.subr.mxu0 0.0
    %256 = vmatpush1.xpose.msra.mxu0 0.0
    %257 = vmatprep.subr.mxu0 0.0
    %258 = vmatpush1.xpose.msra.mxu0 0.0
    %259 = vmatprep.subr.mxu0 0.0
    %260 = vmatpush1.xpose.msra.mxu0 0.0
    %261 = vmatprep.subr.mxu0 0.0
    %262 = vmatpush1.xpose.msra.mxu0 0.0
    %263 = vmatprep.subr.mxu0 0.0
    %264 = vmatpush1.xpose.msra.mxu0 0.0
    %265 = vmatprep.subr.mxu0 0.0
    %266 = vmatpush1.xpose.msra.mxu0 0.0
    %267 = vmatprep.subr.mxu0 0.0
    %268 = vmatpush1.xpose.msra.mxu0 0.0
    %269 = vmatprep.subr.mxu0 0.0
    %270 = vmatpush1.xpose.msra.mxu0 0.0
    %271 = vmatprep.subr.mxu0 0.0
    %272 = vmatpush1.xpose.msra.mxu0 0.0
    %273 = vmatprep.subr.mxu0 0.0
    %274 = vmatpush1.xpose.msra.mxu0 0.0
    %275 = vmatprep.subr.mxu0 0.0
    %276 = vmatpush1.xpose.msra.mxu0 0.0
    %277 = vmatprep.subr.mxu0 0.0
    %278 = vmatpush1.xpose.msra.mxu0 0.0
    %279 = vmatprep.mubr.f32.mxu0 0.0
    %280 = vmatmul.mubr.f32.gmra.mrb[0].mxu0 %v211
    %v281 = vpop.f32.mrb[0].mxu0
    %v282 = vadd.f32 0.0, %v281
    %v283 = vpop.f32.mrb[0].mxu0
    %284 = vdwg.mxu0
    %285 = vrot.lane.b32.xlu0 %v121, 96
    %v286 = vpop.permute.xlu0 %285
    %v287 = vsel %vm134, %v121, 0
    %v289 = vsel %vm134, %v286, 0
    %291 = vmatprep.subr.mxu0 0.0
    %292 = vmatpush1.xpose.msra.mxu0 %v289
    %293 = vmatprep.subr.mxu0 0.0
    %294 = vmatpush1.xpose.msra.mxu0 0.0
    %295 = vmatprep.subr.mxu0 0.0
    %296 = vmatpush1.xpose.msra.mxu0 0.0
    %297 = vmatprep.subr.mxu0 0.0
    %298 = vmatpush1.xpose.msra.mxu0 0.0
    %299 = vmatprep.subr.mxu0 0.0
    %300 = vmatpush1.xpose.msra.mxu0 0.0
    %301 = vmatprep.subr.mxu0 0.0
    %302 = vmatpush1.xpose.msra.mxu0 0.0
    %303 = vmatprep.subr.mxu0 0.0
    %304 = vmatpush1.xpose.msra.mxu0 0.0
    %305 = vmatprep.subr.mxu0 0.0
    %306 = vmatpush1.xpose.msra.mxu0 0.0
    %307 = vmatprep.subr.mxu0 0.0
    %308 = vmatpush1.xpose.msra.mxu0 0.0
    %309 = vmatprep.subr.mxu0 0.0
    %310 = vmatpush1.xpose.msra.mxu0 0.0
    %311 = vmatprep.subr.mxu0 0.0
    %312 = vmatpush1.xpose.msra.mxu0 0.0
    %313 = vmatprep.subr.mxu0 0.0
    %314 = vmatpush1.xpose.msra.mxu0 0.0
    %315 = vmatprep.subr.mxu0 0.0
    %316 = vmatpush1.xpose.msra.mxu0 0.0
    %317 = vmatprep.subr.mxu0 0.0
    %318 = vmatpush1.xpose.msra.mxu0 0.0
    %319 = vmatprep.subr.mxu0 0.0
    %320 = vmatpush1.xpose.msra.mxu0 0.0
    %321 = vmatprep.subr.mxu0 0.0
    %322 = vmatpush1.xpose.msra.mxu0 0.0
    %323 = vmatprep.subr.mxu0 0.0
    %324 = vmatpush1.xpose.msra.mxu0 0.0
    %325 = vmatprep.subr.mxu0 0.0
    %326 = vmatpush1.xpose.msra.mxu0 0.0
    %327 = vmatprep.subr.mxu0 0.0
    %328 = vmatpush1.xpose.msra.mxu0 0.0
    %329 = vmatprep.subr.mxu0 0.0
    %330 = vmatpush1.xpose.msra.mxu0 0.0
    %331 = vmatprep.subr.mxu0 0.0
    %332 = vmatpush1.xpose.msra.mxu0 0.0
    %333 = vmatprep.subr.mxu0 0.0
    %334 = vmatpush1.xpose.msra.mxu0 0.0
    %335 = vmatprep.subr.mxu0 0.0
    %336 = vmatpush1.xpose.msra.mxu0 0.0
    %337 = vmatprep.subr.mxu0 0.0
    %338 = vmatpush1.xpose.msra.mxu0 0.0
    %339 = vmatprep.subr.mxu0 0.0
    %340 = vmatpush1.xpose.msra.mxu0 0.0
    %341 = vmatprep.subr.mxu0 0.0
    %342 = vmatpush1.xpose.msra.mxu0 0.0
    %343 = vmatprep.subr.mxu0 0.0
    %344 = vmatpush1.xpose.msra.mxu0 0.0
    %345 = vmatprep.subr.mxu0 0.0
    %346 = vmatpush1.xpose.msra.mxu0 0.0
    %347 = vmatprep.subr.mxu0 0.0
    %348 = vmatpush1.xpose.msra.mxu0 0.0
    %349 = vmatprep.subr.mxu0 0.0
    %350 = vmatpush1.xpose.msra.mxu0 0.0
    %351 = vmatprep.subr.mxu0 0.0
    %352 = vmatpush1.xpose.msra.mxu0 0.0
    %353 = vmatprep.subr.mxu0 0.0
    %354 = vmatpush1.xpose.msra.mxu0 0.0
    %355 = vmatprep.mubr.f32.mxu0 0.0
    %356 = vmatmul.mubr.f32.gmra.mrb[0].mxu0 %v287
    %v357 = vpop.f32.mrb[0].mxu0
    %v358 = vadd.f32 0.0, %v357
    %v359 = vpop.f32.mrb[0].mxu0
    %360 = vdwg.mxu0
    %361 = vrot.lane.b32.xlu0 %v123, 96
    %v362 = vpop.permute.xlu0 %361
    %v363 = vsel %vm134, %v123, 0
    %v365 = vsel %vm134, %v362, 0
    %367 = vmatprep.subr.mxu0 0.0
    %368 = vmatpush1.xpose.msra.mxu0 %v365
    %369 = vmatprep.subr.mxu0 0.0
    %370 = vmatpush1.xpose.msra.mxu0 0.0
    %371 = vmatprep.subr.mxu0 0.0
    %372 = vmatpush1.xpose.msra.mxu0 0.0
    %373 = vmatprep.subr.mxu0 0.0
    %374 = vmatpush1.xpose.msra.mxu0 0.0
    %375 = vmatprep.subr.mxu0 0.0
    %376 = vmatpush1.xpose.msra.mxu0 0.0
    %377 = vmatprep.subr.mxu0 0.0
    %378 = vmatpush1.xpose.msra.mxu0 0.0
    %379 = vmatprep.subr.mxu0 0.0
    %380 = vmatpush1.xpose.msra.mxu0 0.0
    %381 = vmatprep.subr.mxu0 0.0
    %382 = vmatpush1.xpose.msra.mxu0 0.0
    %383 = vmatprep.subr.mxu0 0.0
    %384 = vmatpush1.xpose.msra.mxu0 0.0
    %385 = vmatprep.subr.mxu0 0.0
    %386 = vmatpush1.xpose.msra.mxu0 0.0
    %387 = vmatprep.subr.mxu0 0.0
    %388 = vmatpush1.xpose.msra.mxu0 0.0
    %389 = vmatprep.subr.mxu0 0.0
    %390 = vmatpush1.xpose.msra.mxu0 0.0
    %391 = vmatprep.subr.mxu0 0.0
    %392 = vmatpush1.xpose.msra.mxu0 0.0
    %393 = vmatprep.subr.mxu0 0.0
    %394 = vmatpush1.xpose.msra.mxu0 0.0
    %395 = vmatprep.subr.mxu0 0.0
    %396 = vmatpush1.xpose.msra.mxu0 0.0
    %397 = vmatprep.subr.mxu0 0.0
    %398 = vmatpush1.xpose.msra.mxu0 0.0
    %399 = vmatprep.subr.mxu0 0.0
    %400 = vmatpush1.xpose.msra.mxu0 0.0
    %401 = vmatprep.subr.mxu0 0.0
    %402 = vmatpush1.xpose.msra.mxu0 0.0
    %403 = vmatprep.subr.mxu0 0.0
    %404 = vmatpush1.xpose.msra.mxu0 0.0
    %405 = vmatprep.subr.mxu0 0.0
    %406 = vmatpush1.xpose.msra.mxu0 0.0
    %407 = vmatprep.subr.mxu0 0.0
    %408 = vmatpush1.xpose.msra.mxu0 0.0
    %409 = vmatprep.subr.mxu0 0.0
    %410 = vmatpush1.xpose.msra.mxu0 0.0
    %411 = vmatprep.subr.mxu0 0.0
    %412 = vmatpush1.xpose.msra.mxu0 0.0
    %413 = vmatprep.subr.mxu0 0.0
    %414 = vmatpush1.xpose.msra.mxu0 0.0
    %415 = vmatprep.subr.mxu0 0.0
    %416 = vmatpush1.xpose.msra.mxu0 0.0
    %417 = vmatprep.subr.mxu0 0.0
    %418 = vmatpush1.xpose.msra.mxu0 0.0
    %419 = vmatprep.subr.mxu0 0.0
    %420 = vmatpush1.xpose.msra.mxu0 0.0
    %421 = vmatprep.subr.mxu0 0.0
    %422 = vmatpush1.xpose.msra.mxu0 0.0
    %423 = vmatprep.subr.mxu0 0.0
    %424 = vmatpush1.xpose.msra.mxu0 0.0
    %425 = vmatprep.subr.mxu0 0.0
    %426 = vmatpush1.xpose.msra.mxu0 0.0
    %427 = vmatprep.subr.mxu0 0.0
    %428 = vmatpush1.xpose.msra.mxu0 0.0
    %429 = vmatprep.subr.mxu0 0.0
    %430 = vmatpush1.xpose.msra.mxu0 0.0
    %431 = vmatprep.mubr.f32.mxu0 0.0
    %432 = vmatmul.mubr.f32.gmra.mrb[0].mxu0 %v363
    %v433 = vpop.f32.mrb[0].mxu0
    %v434 = vadd.f32 0.0, %v433
    %v435 = vpop.f32.mrb[0].mxu0
    %436 = vdwg.mxu0
    %437 = vrot.lane.b32.xlu0 %v125, 96
    %v438 = vpop.permute.xlu0 %437
    %v439 = vsel %vm134, %v125, 0
    %v441 = vsel %vm134, %v438, 0
    %443 = vmatprep.subr.mxu0 0.0
    %444 = vmatpush1.xpose.msra.mxu0 %v441
    %445 = vmatprep.subr.mxu0 0.0
    %446 = vmatpush1.xpose.msra.mxu0 0.0
    %447 = vmatprep.subr.mxu0 0.0
    %448 = vmatpush1.xpose.msra.mxu0 0.0
    %449 = vmatprep.subr.mxu0 0.0
    %450 = vmatpush1.xpose.msra.mxu0 0.0
    %451 = vmatprep.subr.mxu0 0.0
    %452 = vmatpush1.xpose.msra.mxu0 0.0
    %453 = vmatprep.subr.mxu0 0.0
    %454 = vmatpush1.xpose.msra.mxu0 0.0
    %455 = vmatprep.subr.mxu0 0.0
    %456 = vmatpush1.xpose.msra.mxu0 0.0
    %457 = vmatprep.subr.mxu0 0.0
    %458 = vmatpush1.xpose.msra.mxu0 0.0
    %459 = vmatprep.subr.mxu0 0.0
    %460 = vmatpush1.xpose.msra.mxu0 0.0
    %461 = vmatprep.subr.mxu0 0.0
    %462 = vmatpush1.xpose.msra.mxu0 0.0
    %463 = vmatprep.subr.mxu0 0.0
    %464 = vmatpush1.xpose.msra.mxu0 0.0
    %465 = vmatprep.subr.mxu0 0.0
    %466 = vmatpush1.xpose.msra.mxu0 0.0
    %467 = vmatprep.subr.mxu0 0.0
    %468 = vmatpush1.xpose.msra.mxu0 0.0
    %469 = vmatprep.subr.mxu0 0.0
    %470 = vmatpush1.xpose.msra.mxu0 0.0
    %471 = vmatprep.subr.mxu0 0.0
    %472 = vmatpush1.xpose.msra.mxu0 0.0
    %473 = vmatprep.subr.mxu0 0.0
    %474 = vmatpush1.xpose.msra.mxu0 0.0
    %475 = vmatprep.subr.mxu0 0.0
    %476 = vmatpush1.xpose.msra.mxu0 0.0
    %477 = vmatprep.subr.mxu0 0.0
    %478 = vmatpush1.xpose.msra.mxu0 0.0
    %479 = vmatprep.subr.mxu0 0.0
    %480 = vmatpush1.xpose.msra.mxu0 0.0
    %481 = vmatprep.subr.mxu0 0.0
    %482 = vmatpush1.xpose.msra.mxu0 0.0
    %483 = vmatprep.subr.mxu0 0.0
    %484 = vmatpush1.xpose.msra.mxu0 0.0
    %485 = vmatprep.subr.mxu0 0.0
    %486 = vmatpush1.xpose.msra.mxu0 0.0
    %487 = vmatprep.subr.mxu0 0.0
    %488 = vmatpush1.xpose.msra.mxu0 0.0
    %489 = vmatprep.subr.mxu0 0.0
    %490 = vmatpush1.xpose.msra.mxu0 0.0
    %491 = vmatprep.subr.mxu0 0.0
    %492 = vmatpush1.xpose.msra.mxu0 0.0
    %493 = vmatprep.subr.mxu0 0.0
    %494 = vmatpush1.xpose.msra.mxu0 0.0
    %495 = vmatprep.subr.mxu0 0.0
    %496 = vmatpush1.xpose.msra.mxu0 0.0
    %497 = vmatprep.subr.mxu0 0.0
    %498 = vmatpush1.xpose.msra.mxu0 0.0
    %499 = vmatprep.subr.mxu0 0.0
    %500 = vmatpush1.xpose.msra.mxu0 0.0
    %501 = vmatprep.subr.mxu0 0.0
    %502 = vmatpush1.xpose.msra.mxu0 0.0
    %503 = vmatprep.subr.mxu0 0.0
    %504 = vmatpush1.xpose.msra.mxu0 0.0
    %505 = vmatprep.subr.mxu0 0.0
    %506 = vmatpush1.xpose.msra.mxu0 0.0
    %507 = vmatprep.mubr.f32.mxu0 0.0
    %508 = vmatmul.mubr.f32.gmra.mrb[0].mxu0 %v439
    %v509 = vpop.f32.mrb[0].mxu0
    %v510 = vadd.f32 0.0, %v509
    %v511 = vpop.f32.mrb[0].mxu0
    %512 = vdwg.mxu0
    %513 = vrot.lane.b32.xlu0 %v127, 96
    %v514 = vpop.permute.xlu0 %513
    %v515 = vsel %vm134, %v127, 0
    %v517 = vsel %vm134, %v514, 0
    %519 = vmatprep.subr.mxu0 0.0
    %520 = vmatpush1.xpose.msra.mxu0 %v517
    %521 = vmatprep.subr.mxu0 0.0
    %522 = vmatpush1.xpose.msra.mxu0 0.0
    %523 = vmatprep.subr.mxu0 0.0
    %524 = vmatpush1.xpose.msra.mxu0 0.0
    %525 = vmatprep.subr.mxu0 0.0
    %526 = vmatpush1.xpose.msra.mxu0 0.0
    %527 = vmatprep.subr.mxu0 0.0
    %528 = vmatpush1.xpose.msra.mxu0 0.0
    %529 = vmatprep.subr.mxu0 0.0
    %530 = vmatpush1.xpose.msra.mxu0 0.0
    %531 = vmatprep.subr.mxu0 0.0
    %532 = vmatpush1.xpose.msra.mxu0 0.0
    %533 = vmatprep.subr.mxu0 0.0
    %534 = vmatpush1.xpose.msra.mxu0 0.0
    %535 = vmatprep.subr.mxu0 0.0
    %536 = vmatpush1.xpose.msra.mxu0 0.0
    %537 = vmatprep.subr.mxu0 0.0
    %538 = vmatpush1.xpose.msra.mxu0 0.0
    %539 = vmatprep.subr.mxu0 0.0
    %540 = vmatpush1.xpose.msra.mxu0 0.0
    %541 = vmatprep.subr.mxu0 0.0
    %542 = vmatpush1.xpose.msra.mxu0 0.0
    %543 = vmatprep.subr.mxu0 0.0
    %544 = vmatpush1.xpose.msra.mxu0 0.0
    %545 = vmatprep.subr.mxu0 0.0
    %546 = vmatpush1.xpose.msra.mxu0 0.0
    %547 = vmatprep.subr.mxu0 0.0
    %548 = vmatpush1.xpose.msra.mxu0 0.0
    %549 = vmatprep.subr.mxu0 0.0
    %550 = vmatpush1.xpose.msra.mxu0 0.0
    %551 = vmatprep.subr.mxu0 0.0
    %552 = vmatpush1.xpose.msra.mxu0 0.0
    %553 = vmatprep.subr.mxu0 0.0
    %554 = vmatpush1.xpose.msra.mxu0 0.0
    %555 = vmatprep.subr.mxu0 0.0
    %556 = vmatpush1.xpose.msra.mxu0 0.0
    %557 = vmatprep.subr.mxu0 0.0
    %558 = vmatpush1.xpose.msra.mxu0 0.0
    %559 = vmatprep.subr.mxu0 0.0
    %560 = vmatpush1.xpose.msra.mxu0 0.0
    %561 = vmatprep.subr.mxu0 0.0
    %562 = vmatpush1.xpose.msra.mxu0 0.0
    %563 = vmatprep.subr.mxu0 0.0
    %564 = vmatpush1.xpose.msra.mxu0 0.0
    %565 = vmatprep.subr.mxu0 0.0
    %566 = vmatpush1.xpose.msra.mxu0 0.0
    %567 = vmatprep.subr.mxu0 0.0
    %568 = vmatpush1.xpose.msra.mxu0 0.0
    %569 = vmatprep.subr.mxu0 0.0
    %570 = vmatpush1.xpose.msra.mxu0 0.0
    %571 = vmatprep.subr.mxu0 0.0
    %572 = vmatpush1.xpose.msra.mxu0 0.0
    %573 = vmatprep.subr.mxu0 0.0
    %574 = vmatpush1.xpose.msra.mxu0 0.0
    %575 = vmatprep.subr.mxu0 0.0
    %576 = vmatpush1.xpose.msra.mxu0 0.0
    %577 = vmatprep.subr.mxu0 0.0
    %578 = vmatpush1.xpose.msra.mxu0 0.0
    %579 = vmatprep.subr.mxu0 0.0
    %580 = vmatpush1.xpose.msra.mxu0 0.0
    %581 = vmatprep.subr.mxu0 0.0
    %582 = vmatpush1.xpose.msra.mxu0 0.0
    %583 = vmatprep.mubr.f32.mxu0 0.0
    %584 = vmatmul.mubr.f32.gmra.mrb[0].mxu0 %v515
    %v585 = vpop.f32.mrb[0].mxu0
    %v586 = vadd.f32 0.0, %v585
    %v587 = vpop.f32.mrb[0].mxu0
    %588 = vdwg.mxu0
    %589 = vrot.lane.b32.xlu0 %v129, 96
    %v590 = vpop.permute.xlu0 %589
    %v591 = vsel %vm134, %v129, 0
    %v593 = vsel %vm134, %v590, 0
    %595 = vmatprep.subr.mxu0 0.0
    %596 = vmatpush1.xpose.msra.mxu0 %v593
    %597 = vmatprep.subr.mxu0 0.0
    %598 = vmatpush1.xpose.msra.mxu0 0.0
    %599 = vmatprep.subr.mxu0 0.0
    %600 = vmatpush1.xpose.msra.mxu0 0.0
    %601 = vmatprep.subr.mxu0 0.0
    %602 = vmatpush1.xpose.msra.mxu0 0.0
    %603 = vmatprep.subr.mxu0 0.0
    %604 = vmatpush1.xpose.msra.mxu0 0.0
    %605 = vmatprep.subr.mxu0 0.0
    %606 = vmatpush1.xpose.msra.mxu0 0.0
    %607 = vmatprep.subr.mxu0 0.0
    %608 = vmatpush1.xpose.msra.mxu0 0.0
    %609 = vmatprep.subr.mxu0 0.0
    %610 = vmatpush1.xpose.msra.mxu0 0.0
    %611 = vmatprep.subr.mxu0 0.0
    %612 = vmatpush1.xpose.msra.mxu0 0.0
    %613 = vmatprep.subr.mxu0 0.0
    %614 = vmatpush1.xpose.msra.mxu0 0.0
    %615 = vmatprep.subr.mxu0 0.0
    %616 = vmatpush1.xpose.msra.mxu0 0.0
    %617 = vmatprep.subr.mxu0 0.0
    %618 = vmatpush1.xpose.msra.mxu0 0.0
    %619 = vmatprep.subr.mxu0 0.0
    %620 = vmatpush1.xpose.msra.mxu0 0.0
    %621 = vmatprep.subr.mxu0 0.0
    %622 = vmatpush1.xpose.msra.mxu0 0.0
    %623 = vmatprep.subr.mxu0 0.0
    %624 = vmatpush1.xpose.msra.mxu0 0.0
    %625 = vmatprep.subr.mxu0 0.0
    %626 = vmatpush1.xpose.msra.mxu0 0.0
    %627 = vmatprep.subr.mxu0 0.0
    %628 = vmatpush1.xpose.msra.mxu0 0.0
    %629 = vmatprep.subr.mxu0 0.0
    %630 = vmatpush1.xpose.msra.mxu0 0.0
    %631 = vmatprep.subr.mxu0 0.0
    %632 = vmatpush1.xpose.msra.mxu0 0.0
    %633 = vmatprep.subr.mxu0 0.0
    %634 = vmatpush1.xpose.msra.mxu0 0.0
    %635 = vmatprep.subr.mxu0 0.0
    %636 = vmatpush1.xpose.msra.mxu0 0.0
    %637 = vmatprep.subr.mxu0 0.0
    %638 = vmatpush1.xpose.msra.mxu0 0.0
    %639 = vmatprep.subr.mxu0 0.0
    %640 = vmatpush1.xpose.msra.mxu0 0.0
    %641 = vmatprep.subr.mxu0 0.0
    %642 = vmatpush1.xpose.msra.mxu0 0.0
    %643 = vmatprep.subr.mxu0 0.0
    %644 = vmatpush1.xpose.msra.mxu0 0.0
    %645 = vmatprep.subr.mxu0 0.0
    %646 = vmatpush1.xpose.msra.mxu0 0.0
    %647 = vmatprep.subr.mxu0 0.0
    %648 = vmatpush1.xpose.msra.mxu0 0.0
    %649 = vmatprep.subr.mxu0 0.0
    %650 = vmatpush1.xpose.msra.mxu0 0.0
    %651 = vmatprep.subr.mxu0 0.0
    %652 = vmatpush1.xpose.msra.mxu0 0.0
    %653 = vmatprep.subr.mxu0 0.0
    %654 = vmatpush1.xpose.msra.mxu0 0.0
    %655 = vmatprep.subr.mxu0 0.0
    %656 = vmatpush1.xpose.msra.mxu0 0.0
    %657 = vmatprep.subr.mxu0 0.0
    %658 = vmatpush1.xpose.msra.mxu0 0.0
    %659 = vmatprep.mubr.f32.mxu0 0.0
    %660 = vmatmul.mubr.f32.gmra.mrb[0].mxu0 %v591
    %v661 = vpop.f32.mrb[0].mxu0
    %v662 = vadd.f32 0.0, %v661
    %v663 = vpop.f32.mrb[0].mxu0
    %664 = vdwg.mxu0
    %665 = vrot.lane.b32.xlu0 %v131, 96
    %v666 = vpop.permute.xlu0 %665
    %v667 = vsel %vm134, %v131, 0
    %v669 = vsel %vm134, %v666, 0
    %671 = vmatprep.subr.mxu0 0.0
    %672 = vmatpush1.xpose.msra.mxu0 %v669
    %673 = vmatprep.subr.mxu0 0.0
    %674 = vmatpush1.xpose.msra.mxu0 0.0
    %675 = vmatprep.subr.mxu0 0.0
    %676 = vmatpush1.xpose.msra.mxu0 0.0
    %677 = vmatprep.subr.mxu0 0.0
    %678 = vmatpush1.xpose.msra.mxu0 0.0
    %679 = vmatprep.subr.mxu0 0.0
    %680 = vmatpush1.xpose.msra.mxu0 0.0
    %681 = vmatprep.subr.mxu0 0.0
    %682 = vmatpush1.xpose.msra.mxu0 0.0
    %683 = vmatprep.subr.mxu0 0.0
    %684 = vmatpush1.xpose.msra.mxu0 0.0
    %685 = vmatprep.subr.mxu0 0.0
    %686 = vmatpush1.xpose.msra.mxu0 0.0
    %687 = vmatprep.subr.mxu0 0.0
    %688 = vmatpush1.xpose.msra.mxu0 0.0
    %689 = vmatprep.subr.mxu0 0.0
    %690 = vmatpush1.xpose.msra.mxu0 0.0
    %691 = vmatprep.subr.mxu0 0.0
    %692 = vmatpush1.xpose.msra.mxu0 0.0
    %693 = vmatprep.subr.mxu0 0.0
    %694 = vmatpush1.xpose.msra.mxu0 0.0
    %695 = vmatprep.subr.mxu0 0.0
    %696 = vmatpush1.xpose.msra.mxu0 0.0
    %697 = vmatprep.subr.mxu0 0.0
    %698 = vmatpush1.xpose.msra.mxu0 0.0
    %699 = vmatprep.subr.mxu0 0.0
    %700 = vmatpush1.xpose.msra.mxu0 0.0
    %701 = vmatprep.subr.mxu0 0.0
    %702 = vmatpush1.xpose.msra.mxu0 0.0
    %703 = vmatprep.subr.mxu0 0.0
    %704 = vmatpush1.xpose.msra.mxu0 0.0
    %705 = vmatprep.subr.mxu0 0.0
    %706 = vmatpush1.xpose.msra.mxu0 0.0
    %707 = vmatprep.subr.mxu0 0.0
    %708 = vmatpush1.xpose.msra.mxu0 0.0
    %709 = vmatprep.subr.mxu0 0.0
    %710 = vmatpush1.xpose.msra.mxu0 0.0
    %711 = vmatprep.subr.mxu0 0.0
    %712 = vmatpush1.xpose.msra.mxu0 0.0
    %713 = vmatprep.subr.mxu0 0.0
    %714 = vmatpush1.xpose.msra.mxu0 0.0
    %715 = vmatprep.subr.mxu0 0.0
    %716 = vmatpush1.xpose.msra.mxu0 0.0
    %717 = vmatprep.subr.mxu0 0.0
    %718 = vmatpush1.xpose.msra.mxu0 0.0
    %719 = vmatprep.subr.mxu0 0.0
    %720 = vmatpush1.xpose.msra.mxu0 0.0
    %721 = vmatprep.subr.mxu0 0.0
    %722 = vmatpush1.xpose.msra.mxu0 0.0
    %723 = vmatprep.subr.mxu0 0.0
    %724 = vmatpush1.xpose.msra.mxu0 0.0
    %725 = vmatprep.subr.mxu0 0.0
    %726 = vmatpush1.xpose.msra.mxu0 0.0
    %727 = vmatprep.subr.mxu0 0.0
    %728 = vmatpush1.xpose.msra.mxu0 0.0
    %729 = vmatprep.subr.mxu0 0.0
    %730 = vmatpush1.xpose.msra.mxu0 0.0
    %731 = vmatprep.subr.mxu0 0.0
    %732 = vmatpush1.xpose.msra.mxu0 0.0
    %733 = vmatprep.subr.mxu0 0.0
    %734 = vmatpush1.xpose.msra.mxu0 0.0
    %735 = vmatprep.mubr.f32.mxu0 0.0
    %736 = vmatmul.mubr.f32.gmra.mrb[0].mxu0 %v667
    %v737 = vpop.f32.mrb[0].mxu0
    %v738 = vadd.f32 0.0, %v737
    %v739 = vpop.f32.mrb[0].mxu0
    %740 = vdwg.mxu0
    %v741 = vsel %vm134, %v206, -inf
    %742 = vmax.xlane.f32.xlu0 %v741
    %v743 = vpop.xlane.xlu0 %742
    %v744 = vsel %vm134, %v282, -inf
    %745 = vmax.xlane.f32.xlu0 %v744
    %v746 = vpop.xlane.xlu0 %745
    %v747 = vsel %vm134, %v358, -inf
    %748 = vmax.xlane.f32.xlu0 %v747
    %v749 = vpop.xlane.xlu0 %748
    %v750 = vsel %vm134, %v434, -inf
    %751 = vmax.xlane.f32.xlu0 %v750
    %v752 = vpop.xlane.xlu0 %751
    %v753 = vsel %vm134, %v510, -inf
    %754 = vmax.xlane.f32.xlu0 %v753
    %v755 = vpop.xlane.xlu0 %754
    %v756 = vsel %vm134, %v586, -inf
    %757 = vmax.xlane.f32.xlu0 %v756
    %v758 = vpop.xlane.xlu0 %757
    %v759 = vsel %vm134, %v662, -inf
    %760 = vmax.xlane.f32.xlu0 %v759
    %v761 = vpop.xlane.xlu0 %760
    %v762 = vsel %vm134, %v738, -inf
    %763 = vmax.xlane.f32.xlu0 %v762
    %v764 = vpop.xlane.xlu0 %763
    %v765 = vsub.f32 %v206, %v743
    %v766 = vsub.f32 %v282, %v746
    %v767 = vsub.f32 %v358, %v749
    %v768 = vsub.f32 %v434, %v752
    %v769 = vsub.f32 %v510, %v755
    %v770 = vsub.f32 %v586, %v758
    %v771 = vsub.f32 %v662, %v761
    %v772 = vsub.f32 %v738, %v764
    %v773 = vmul.f32 %v765, 1.442695
    %v774 = vpow.pop %v773
    %v775 = vmul.f32 %v766, 1.442695
    %v776 = vpow.pop %v775
    %v777 = vmul.f32 %v767, 1.442695
    %v778 = vpow.pop %v777
    %v779 = vmul.f32 %v768, 1.442695
    %v780 = vpow.pop %v779
    %v781 = vmul.f32 %v769, 1.442695
    %v782 = vpow.pop %v781
    %v783 = vmul.f32 %v770, 1.442695
    %v784 = vpow.pop %v783
    %v785 = vmul.f32 %v771, 1.442695
    %v786 = vpow.pop %v785
    %v787 = vmul.f32 %v772, 1.442695
    %v788 = vpow.pop %v787
    %v789 = vsel %vm134, %v774, 0.0
    %790 = vadd.xlane.f32.xlu0 %v789
    %v791 = vpop.xlane.xlu0 %790
    %v792 = vsel %vm134, %v776, 0.0
    %793 = vadd.xlane.f32.xlu0 %v792
    %v794 = vpop.xlane.xlu0 %793
    %v795 = vsel %vm134, %v778, 0.0
    %796 = vadd.xlane.f32.xlu0 %v795
    %v797 = vpop.xlane.xlu0 %796
    %v798 = vsel %vm134, %v780, 0.0
    %799 = vadd.xlane.f32.xlu0 %v798
    %v800 = vpop.xlane.xlu0 %799
    %v801 = vsel %vm134, %v782, 0.0
    %802 = vadd.xlane.f32.xlu0 %v801
    %v803 = vpop.xlane.xlu0 %802
    %v804 = vsel %vm134, %v784, 0.0
    %805 = vadd.xlane.f32.xlu0 %v804
    %v806 = vpop.xlane.xlu0 %805
    %v807 = vsel %vm134, %v786, 0.0
    %808 = vadd.xlane.f32.xlu0 %v807
    %v809 = vpop.xlane.xlu0 %808
    %v810 = vsel %vm134, %v788, 0.0
    %811 = vadd.xlane.f32.xlu0 %v810
    %v812 = vpop.xlane.xlu0 %811
    %v813 = vrcp.pop %v791
    %v814 = vrcp.pop %v794
    %v815 = vrcp.pop %v797
    %v816 = vrcp.pop %v800
    %v817 = vrcp.pop %v803
    %v818 = vrcp.pop %v806
    %v819 = vrcp.pop %v809
    %v820 = vrcp.pop %v812
    %v821 = vmul.f32 %v774, %v813
    %v822 = vmul.f32 %v776, %v814
    %v823 = vmul.f32 %v778, %v815
    %v824 = vmul.f32 %v780, %v816
    %v825 = vmul.f32 %v782, %v817
    %v826 = vmul.f32 %v784, %v818
    %v827 = vmul.f32 %v786, %v819
    %v828 = vmul.f32 %v788, %v820
    %829 = vrot.lane.b32.xlu0 %v112, 64
    %v830 = vpop.permute.xlu0 %829
    %v833 = vsel %vm134, %v821, 0
    %835 = vmatprep.subr.mxu0 0.0
    %836 = vmatpush1.msra.mxu0 %v830
    %837 = vmatprep.subr.mxu0 0.0
    %838 = vmatpush1.msra.mxu0 0.0
    %839 = vmatprep.subr.mxu0 0.0
    %840 = vmatpush1.msra.mxu0 0.0
    %841 = vmatprep.subr.mxu0 0.0
    %842 = vmatpush1.msra.mxu0 0.0
    %843 = vmatprep.subr.mxu0 0.0
    %844 = vmatpush1.msra.mxu0 0.0
    %845 = vmatprep.subr.mxu0 0.0
    %846 = vmatpush1.msra.mxu0 0.0
    %847 = vmatprep.subr.mxu0 0.0
    %848 = vmatpush1.msra.mxu0 0.0
    %849 = vmatprep.subr.mxu0 0.0
    %850 = vmatpush1.msra.mxu0 0.0
    %851 = vmatprep.subr.mxu0 0.0
    %852 = vmatpush1.msra.mxu0 0.0
    %853 = vmatprep.subr.mxu0 0.0
    %854 = vmatpush1.msra.mxu0 0.0
    %855 = vmatprep.subr.mxu0 0.0
    %856 = vmatpush1.msra.mxu0 0.0
    %857 = vmatprep.subr.mxu0 0.0
    %858 = vmatpush1.msra.mxu0 0.0
    %859 = vmatprep.subr.mxu0 0.0
    %860 = vmatpush1.msra.mxu0 0.0
    %861 = vmatprep.subr.mxu0 0.0
    %862 = vmatpush1.msra.mxu0 0.0
    %863 = vmatprep.subr.mxu0 0.0
    %864 = vmatpush1.msra.mxu0 0.0
    %865 = vmatprep.subr.mxu0 0.0
    %866 = vmatpush1.msra.mxu0 0.0
    %867 = vmatprep.subr.mxu0 0.0
    %868 = vmatpush1.msra.mxu0 0.0
    %869 = vmatprep.subr.mxu0 0.0
    %870 = vmatpush1.msra.mxu0 0.0
    %871 = vmatprep.subr.mxu0 0.0
    %872 = vmatpush1.msra.mxu0 0.0
    %873 = vmatprep.subr.mxu0 0.0
    %874 = vmatpush1.msra.mxu0 0.0
    %875 = vmatprep.subr.mxu0 0.0
    %876 = vmatpush1.msra.mxu0 0.0
    %877 = vmatprep.subr.mxu0 0.0
    %878 = vmatpush1.msra.mxu0 0.0
    %879 = vmatprep.subr.mxu0 0.0
    %880 = vmatpush1.msra.mxu0 0.0
    %881 = vmatprep.subr.mxu0 0.0
    %882 = vmatpush1.msra.mxu0 0.0
    %883 = vmatprep.subr.mxu0 0.0
    %884 = vmatpush1.msra.mxu0 0.0
    %885 = vmatprep.subr.mxu0 0.0
    %886 = vmatpush1.msra.mxu0 0.0
    %887 = vmatprep.subr.mxu0 0.0
    %888 = vmatpush1.msra.mxu0 0.0
    %889 = vmatprep.subr.mxu0 0.0
    %890 = vmatpush1.msra.mxu0 0.0
    %891 = vmatprep.subr.mxu0 0.0
    %892 = vmatpush1.msra.mxu0 0.0
    %893 = vmatprep.subr.mxu0 0.0
    %894 = vmatpush1.msra.mxu0 0.0
    %895 = vmatprep.subr.mxu0 0.0
    %896 = vmatpush1.msra.mxu0 0.0
    %897 = vmatprep.subr.mxu0 0.0
    %898 = vmatpush1.msra.mxu0 0.0
    %899 = vmatprep.mubr.f32.mxu0 0.0
    %900 = vmatmul.mubr.f32.gmra.mrb[0].mxu0 %v833
    %v901 = vpop.f32.mrb[0].mxu0
    %v902 = vadd.f32 0.0, %v901
    %v903 = vpop.f32.mrb[0].mxu0
    %904 = vdwg.mxu0
    %905 = vrot.lane.b32.xlu0 %v115, 64
    %v906 = vpop.permute.xlu0 %905
    %v909 = vsel %vm134, %v822, 0
    %911 = vmatprep.subr.mxu0 0.0
    %912 = vmatpush1.msra.mxu0 %v906
    %913 = vmatprep.subr.mxu0 0.0
    %914 = vmatpush1.msra.mxu0 0.0
    %915 = vmatprep.subr.mxu0 0.0
    %916 = vmatpush1.msra.mxu0 0.0
    %917 = vmatprep.subr.mxu0 0.0
    %918 = vmatpush1.msra.mxu0 0.0
    %919 = vmatprep.subr.mxu0 0.0
    %920 = vmatpush1.msra.mxu0 0.0
    %921 = vmatprep.subr.mxu0 0.0
    %922 = vmatpush1.msra.mxu0 0.0
    %923 = vmatprep.subr.mxu0 0.0
    %924 = vmatpush1.msra.mxu0 0.0
    %925 = vmatprep.subr.mxu0 0.0
    %926 = vmatpush1.msra.mxu0 0.0
    %927 = vmatprep.subr.mxu0 0.0
    %928 = vmatpush1.msra.mxu0 0.0
    %929 = vmatprep.subr.mxu0 0.0
    %930 = vmatpush1.msra.mxu0 0.0
    %931 = vmatprep.subr.mxu0 0.0
    %932 = vmatpush1.msra.mxu0 0.0
    %933 = vmatprep.subr.mxu0 0.0
    %934 = vmatpush1.msra.mxu0 0.0
    %935 = vmatprep.subr.mxu0 0.0
    %936 = vmatpush1.msra.mxu0 0.0
    %937 = vmatprep.subr.mxu0 0.0
    %938 = vmatpush1.msra.mxu0 0.0
    %939 = vmatprep.subr.mxu0 0.0
    %940 = vmatpush1.msra.mxu0 0.0
    %941 = vmatprep.subr.mxu0 0.0
    %942 = vmatpush1.msra.mxu0 0.0
    %943 = vmatprep.subr.mxu0 0.0
    %944 = vmatpush1.msra.mxu0 0.0
    %945 = vmatprep.subr.mxu0 0.0
    %946 = vmatpush1.msra.mxu0 0.0
    %947 = vmatprep.subr.mxu0 0.0
    %948 = vmatpush1.msra.mxu0 0.0
    %949 = vmatprep.subr.mxu0 0.0
    %950 = vmatpush1.msra.mxu0 0.0
    %951 = vmatprep.subr.mxu0 0.0
    %952 = vmatpush1.msra.mxu0 0.0
    %953 = vmatprep.subr.mxu0 0.0
    %954 = vmatpush1.msra.mxu0 0.0
    %955 = vmatprep.subr.mxu0 0.0
    %956 = vmatpush1.msra.mxu0 0.0
    %957 = vmatprep.subr.mxu0 0.0
    %958 = vmatpush1.msra.mxu0 0.0
    %959 = vmatprep.subr.mxu0 0.0
    %960 = vmatpush1.msra.mxu0 0.0
    %961 = vmatprep.subr.mxu0 0.0
    %962 = vmatpush1.msra.mxu0 0.0
    %963 = vmatprep.subr.mxu0 0.0
    %964 = vmatpush1.msra.mxu0 0.0
    %965 = vmatprep.subr.mxu0 0.0
    %966 = vmatpush1.msra.mxu0 0.0
    %967 = vmatprep.subr.mxu0 0.0
    %968 = vmatpush1.msra.mxu0 0.0
    %969 = vmatprep.subr.mxu0 0.0
    %970 = vmatpush1.msra.mxu0 0.0
    %971 = vmatprep.subr.mxu0 0.0
    %972 = vmatpush1.msra.mxu0 0.0
    %973 = vmatprep.subr.mxu0 0.0
    %974 = vmatpush1.msra.mxu0 0.0
    %975 = vmatprep.mubr.f32.mxu0 0.0
    %976 = vmatmul.mubr.f32.gmra.mrb[0].mxu0 %v909
    %v977 = vpop.f32.mrb[0].mxu0
    %v978 = vadd.f32 0.0, %v977
    %v979 = vpop.f32.mrb[0].mxu0
    %980 = vdwg.mxu0
    %981 = vrot.lane.b32.xlu0 %v121, 64
    %v982 = vpop.permute.xlu0 %981
    %v985 = vsel %vm134, %v823, 0
    %987 = vmatprep.subr.mxu0 0.0
    %988 = vmatpush1.msra.mxu0 %v982
    %989 = vmatprep.subr.mxu0 0.0
    %990 = vmatpush1.msra.mxu0 0.0
    %991 = vmatprep.subr.mxu0 0.0
    %992 = vmatpush1.msra.mxu0 0.0
    %993 = vmatprep.subr.mxu0 0.0
    %994 = vmatpush1.msra.mxu0 0.0
    %995 = vmatprep.subr.mxu0 0.0
    %996 = vmatpush1.msra.mxu0 0.0
    %997 = vmatprep.subr.mxu0 0.0
    %998 = vmatpush1.msra.mxu0 0.0
    %999 = vmatprep.subr.mxu0 0.0
    %1000 = vmatpush1.msra.mxu0 0.0
    %1001 = vmatprep.subr.mxu0 0.0
    %1002 = vmatpush1.msra.mxu0 0.0
    %1003 = vmatprep.subr.mxu0 0.0
    %1004 = vmatpush1.msra.mxu0 0.0
    %1005 = vmatprep.subr.mxu0 0.0
    %1006 = vmatpush1.msra.mxu0 0.0
    %1007 = vmatprep.subr.mxu0 0.0
    %1008 = vmatpush1.msra.mxu0 0.0
    %1009 = vmatprep.subr.mxu0 0.0
    %1010 = vmatpush1.msra.mxu0 0.0
    %1011 = vmatprep.subr.mxu0 0.0
    %1012 = vmatpush1.msra.mxu0 0.0
    %1013 = vmatprep.subr.mxu0 0.0
    %1014 = vmatpush1.msra.mxu0 0.0
    %1015 = vmatprep.subr.mxu0 0.0
    %1016 = vmatpush1.msra.mxu0 0.0
    %1017 = vmatprep.subr.mxu0 0.0
    %1018 = vmatpush1.msra.mxu0 0.0
    %1019 = vmatprep.subr.mxu0 0.0
    %1020 = vmatpush1.msra.mxu0 0.0
    %1021 = vmatprep.subr.mxu0 0.0
    %1022 = vmatpush1.msra.mxu0 0.0
    %1023 = vmatprep.subr.mxu0 0.0
    %1024 = vmatpush1.msra.mxu0 0.0
    %1025 = vmatprep.subr.mxu0 0.0
    %1026 = vmatpush1.msra.mxu0 0.0
    %1027 = vmatprep.subr.mxu0 0.0
    %1028 = vmatpush1.msra.mxu0 0.0
    %1029 = vmatprep.subr.mxu0 0.0
    %1030 = vmatpush1.msra.mxu0 0.0
    %1031 = vmatprep.subr.mxu0 0.0
    %1032 = vmatpush1.msra.mxu0 0.0
    %1033 = vmatprep.subr.mxu0 0.0
    %1034 = vmatpush1.msra.mxu0 0.0
    %1035 = vmatprep.subr.mxu0 0.0
    %1036 = vmatpush1.msra.mxu0 0.0
    %1037 = vmatprep.subr.mxu0 0.0
    %1038 = vmatpush1.msra.mxu0 0.0
    %1039 = vmatprep.subr.mxu0 0.0
    %1040 = vmatpush1.msra.mxu0 0.0
    %1041 = vmatprep.subr.mxu0 0.0
    %1042 = vmatpush1.msra.mxu0 0.0
    %1043 = vmatprep.subr.mxu0 0.0
    %1044 = vmatpush1.msra.mxu0 0.0
    %1045 = vmatprep.subr.mxu0 0.0
    %1046 = vmatpush1.msra.mxu0 0.0
    %1047 = vmatprep.subr.mxu0 0.0
    %1048 = vmatpush1.msra.mxu0 0.0
    %1049 = vmatprep.subr.mxu0 0.0
    %1050 = vmatpush1.msra.mxu0 0.0
    %1051 = vmatprep.mubr.f32.mxu0 0.0
    %1052 = vmatmul.mubr.f32.gmra.mrb[0].mxu0 %v985
    %v1053 = vpop.f32.mrb[0].mxu0
    %v1054 = vadd.f32 0.0, %v1053
    %v1055 = vpop.f32.mrb[0].mxu0
    %1056 = vdwg.mxu0
    %1057 = vrot.lane.b32.xlu0 %v123, 64
    %v1058 = vpop.permute.xlu0 %1057
    %v1061 = vsel %vm134, %v824, 0
    %1063 = vmatprep.subr.mxu0 0.0
    %1064 = vmatpush1.msra.mxu0 %v1058
    %1065 = vmatprep.subr.mxu0 0.0
    %1066 = vmatpush1.msra.mxu0 0.0
    %1067 = vmatprep.subr.mxu0 0.0
    %1068 = vmatpush1.msra.mxu0 0.0
    %1069 = vmatprep.subr.mxu0 0.0
    %1070 = vmatpush1.msra.mxu0 0.0
    %1071 = vmatprep.subr.mxu0 0.0
    %1072 = vmatpush1.msra.mxu0 0.0
    %1073 = vmatprep.subr.mxu0 0.0
    %1074 = vmatpush1.msra.mxu0 0.0
    %1075 = vmatprep.subr.mxu0 0.0
    %1076 = vmatpush1.msra.mxu0 0.0
    %1077 = vmatprep.subr.mxu0 0.0
    %1078 = vmatpush1.msra.mxu0 0.0
    %1079 = vmatprep.subr.mxu0 0.0
    %1080 = vmatpush1.msra.mxu0 0.0
    %1081 = vmatprep.subr.mxu0 0.0
    %1082 = vmatpush1.msra.mxu0 0.0
    %1083 = vmatprep.subr.mxu0 0.0
    %1084 = vmatpush1.msra.mxu0 0.0
    %1085 = vmatprep.subr.mxu0 0.0
    %1086 = vmatpush1.msra.mxu0 0.0
    %1087 = vmatprep.subr.mxu0 0.0
    %1088 = vmatpush1.msra.mxu0 0.0
    %1089 = vmatprep.subr.mxu0 0.0
    %1090 = vmatpush1.msra.mxu0 0.0
    %1091 = vmatprep.subr.mxu0 0.0
    %1092 = vmatpush1.msra.mxu0 0.0
    %1093 = vmatprep.subr.mxu0 0.0
    %1094 = vmatpush1.msra.mxu0 0.0
    %1095 = vmatprep.subr.mxu0 0.0
    %1096 = vmatpush1.msra.mxu0 0.0
    %1097 = vmatprep.subr.mxu0 0.0
    %1098 = vmatpush1.msra.mxu0 0.0
    %1099 = vmatprep.subr.mxu0 0.0
    %1100 = vmatpush1.msra.mxu0 0.0
    %1101 = vmatprep.subr.mxu0 0.0
    %1102 = vmatpush1.msra.mxu0 0.0
    %1103 = vmatprep.subr.mxu0 0.0
    %1104 = vmatpush1.msra.mxu0 0.0
    %1105 = vmatprep.subr.mxu0 0.0
    %1106 = vmatpush1.msra.mxu0 0.0
    %1107 = vmatprep.subr.mxu0 0.0
    %1108 = vmatpush1.msra.mxu0 0.0
    %1109 = vmatprep.subr.mxu0 0.0
    %1110 = vmatpush1.msra.mxu0 0.0
    %1111 = vmatprep.subr.mxu0 0.0
    %1112 = vmatpush1.msra.mxu0 0.0
    %1113 = vmatprep.subr.mxu0 0.0
    %1114 = vmatpush1.msra.mxu0 0.0
    %1115 = vmatprep.subr.mxu0 0.0
    %1116 = vmatpush1.msra.mxu0 0.0
    %1117 = vmatprep.subr.mxu0 0.0
    %1118 = vmatpush1.msra.mxu0 0.0
    %1119 = vmatprep.subr.mxu0 0.0
    %1120 = vmatpush1.msra.mxu0 0.0
    %1121 = vmatprep.subr.mxu0 0.0
    %1122 = vmatpush1.msra.mxu0 0.0
    %1123 = vmatprep.subr.mxu0 0.0
    %1124 = vmatpush1.msra.mxu0 0.0
    %1125 = vmatprep.subr.mxu0 0.0
    %1126 = vmatpush1.msra.mxu0 0.0
    %1127 = vmatprep.mubr.f32.mxu0 0.0
    %1128 = vmatmul.mubr.f32.gmra.mrb[0].mxu0 %v1061
    %v1129 = vpop.f32.mrb[0].mxu0
    %v1130 = vadd.f32 0.0, %v1129
    %v1131 = vpop.f32.mrb[0].mxu0
    %1132 = vdwg.mxu0
    %1133 = vrot.lane.b32.xlu0 %v125, 64
    %v1134 = vpop.permute.xlu0 %1133
    %v1137 = vsel %vm134, %v825, 0
    %1139 = vmatprep.subr.mxu0 0.0
    %1140 = vmatpush1.msra.mxu0 %v1134
    %1141 = vmatprep.subr.mxu0 0.0
    %1142 = vmatpush1.msra.mxu0 0.0
    %1143 = vmatprep.subr.mxu0 0.0
    %1144 = vmatpush1.msra.mxu0 0.0
    %1145 = vmatprep.subr.mxu0 0.0
    %1146 = vmatpush1.msra.mxu0 0.0
    %1147 = vmatprep.subr.mxu0 0.0
    %1148 = vmatpush1.msra.mxu0 0.0
    %1149 = vmatprep.subr.mxu0 0.0
    %1150 = vmatpush1.msra.mxu0 0.0
    %1151 = vmatprep.subr.mxu0 0.0
    %1152 = vmatpush1.msra.mxu0 0.0
    %1153 = vmatprep.subr.mxu0 0.0
    %1154 = vmatpush1.msra.mxu0 0.0
    %1155 = vmatprep.subr.mxu0 0.0
    %1156 = vmatpush1.msra.mxu0 0.0
    %1157 = vmatprep.subr.mxu0 0.0
    %1158 = vmatpush1.msra.mxu0 0.0
    %1159 = vmatprep.subr.mxu0 0.0
    %1160 = vmatpush1.msra.mxu0 0.0
    %1161 = vmatprep.subr.mxu0 0.0
    %1162 = vmatpush1.msra.mxu0 0.0
    %1163 = vmatprep.subr.mxu0 0.0
    %1164 = vmatpush1.msra.mxu0 0.0
    %1165 = vmatprep.subr.mxu0 0.0
    %1166 = vmatpush1.msra.mxu0 0.0
    %1167 = vmatprep.subr.mxu0 0.0
    %1168 = vmatpush1.msra.mxu0 0.0
    %1169 = vmatprep.subr.mxu0 0.0
    %1170 = vmatpush1.msra.mxu0 0.0
    %1171 = vmatprep.subr.mxu0 0.0
    %1172 = vmatpush1.msra.mxu0 0.0
    %1173 = vmatprep.subr.mxu0 0.0
    %1174 = vmatpush1.msra.mxu0 0.0
    %1175 = vmatprep.subr.mxu0 0.0
    %1176 = vmatpush1.msra.mxu0 0.0
    %1177 = vmatprep.subr.mxu0 0.0
    %1178 = vmatpush1.msra.mxu0 0.0
    %1179 = vmatprep.subr.mxu0 0.0
    %1180 = vmatpush1.msra.mxu0 0.0
    %1181 = vmatprep.subr.mxu0 0.0
    %1182 = vmatpush1.msra.mxu0 0.0
    %1183 = vmatprep.subr.mxu0 0.0
    %1184 = vmatpush1.msra.mxu0 0.0
    %1185 = vmatprep.subr.mxu0 0.0
    %1186 = vmatpush1.msra.mxu0 0.0
    %1187 = vmatprep.subr.mxu0 0.0
    %1188 = vmatpush1.msra.mxu0 0.0
    %1189 = vmatprep.subr.mxu0 0.0
    %1190 = vmatpush1.msra.mxu0 0.0
    %1191 = vmatprep.subr.mxu0 0.0
    %1192 = vmatpush1.msra.mxu0 0.0
    %1193 = vmatprep.subr.mxu0 0.0
    %1194 = vmatpush1.msra.mxu0 0.0
    %1195 = vmatprep.subr.mxu0 0.0
    %1196 = vmatpush1.msra.mxu0 0.0
    %1197 = vmatprep.subr.mxu0 0.0
    %1198 = vmatpush1.msra.mxu0 0.0
    %1199 = vmatprep.subr.mxu0 0.0
    %1200 = vmatpush1.msra.mxu0 0.0
    %1201 = vmatprep.subr.mxu0 0.0
    %1202 = vmatpush1.msra.mxu0 0.0
    %1203 = vmatprep.mubr.f32.mxu0 0.0
    %1204 = vmatmul.mubr.f32.gmra.mrb[0].mxu0 %v1137
    %v1205 = vpop.f32.mrb[0].mxu0
    %v1206 = vadd.f32 0.0, %v1205
    %v1207 = vpop.f32.mrb[0].mxu0
    %1208 = vdwg.mxu0
    %1209 = vrot.lane.b32.xlu0 %v127, 64
    %v1210 = vpop.permute.xlu0 %1209
    %v1213 = vsel %vm134, %v826, 0
    %1215 = vmatprep.subr.mxu0 0.0
    %1216 = vmatpush1.msra.mxu0 %v1210
    %1217 = vmatprep.subr.mxu0 0.0
    %1218 = vmatpush1.msra.mxu0 0.0
    %1219 = vmatprep.subr.mxu0 0.0
    %1220 = vmatpush1.msra.mxu0 0.0
    %1221 = vmatprep.subr.mxu0 0.0
    %1222 = vmatpush1.msra.mxu0 0.0
    %1223 = vmatprep.subr.mxu0 0.0
    %1224 = vmatpush1.msra.mxu0 0.0
    %1225 = vmatprep.subr.mxu0 0.0
    %1226 = vmatpush1.msra.mxu0 0.0
    %1227 = vmatprep.subr.mxu0 0.0
    %1228 = vmatpush1.msra.mxu0 0.0
    %1229 = vmatprep.subr.mxu0 0.0
    %1230 = vmatpush1.msra.mxu0 0.0
    %1231 = vmatprep.subr.mxu0 0.0
    %1232 = vmatpush1.msra.mxu0 0.0
    %1233 = vmatprep.subr.mxu0 0.0
    %1234 = vmatpush1.msra.mxu0 0.0
    %1235 = vmatprep.subr.mxu0 0.0
    %1236 = vmatpush1.msra.mxu0 0.0
    %1237 = vmatprep.subr.mxu0 0.0
    %1238 = vmatpush1.msra.mxu0 0.0
    %1239 = vmatprep.subr.mxu0 0.0
    %1240 = vmatpush1.msra.mxu0 0.0
    %1241 = vmatprep.subr.mxu0 0.0
    %1242 = vmatpush1.msra.mxu0 0.0
    %1243 = vmatprep.subr.mxu0 0.0
    %1244 = vmatpush1.msra.mxu0 0.0
    %1245 = vmatprep.subr.mxu0 0.0
    %1246 = vmatpush1.msra.mxu0 0.0
    %1247 = vmatprep.subr.mxu0 0.0
    %1248 = vmatpush1.msra.mxu0 0.0
    %1249 = vmatprep.subr.mxu0 0.0
    %1250 = vmatpush1.msra.mxu0 0.0
    %1251 = vmatprep.subr.mxu0 0.0
    %1252 = vmatpush1.msra.mxu0 0.0
    %1253 = vmatprep.subr.mxu0 0.0
    %1254 = vmatpush1.msra.mxu0 0.0
    %1255 = vmatprep.subr.mxu0 0.0
    %1256 = vmatpush1.msra.mxu0 0.0
    %1257 = vmatprep.subr.mxu0 0.0
    %1258 = vmatpush1.msra.mxu0 0.0
    %1259 = vmatprep.subr.mxu0 0.0
    %1260 = vmatpush1.msra.mxu0 0.0
    %1261 = vmatprep.subr.mxu0 0.0
    %1262 = vmatpush1.msra.mxu0 0.0
    %1263 = vmatprep.subr.mxu0 0.0
    %1264 = vmatpush1.msra.mxu0 0.0
    %1265 = vmatprep.subr.mxu0 0.0
    %1266 = vmatpush1.msra.mxu0 0.0
    %1267 = vmatprep.subr.mxu0 0.0
    %1268 = vmatpush1.msra.mxu0 0.0
    %1269 = vmatprep.subr.mxu0 0.0
    %1270 = vmatpush1.msra.mxu0 0.0
    %1271 = vmatprep.subr.mxu0 0.0
    %1272 = vmatpush1.msra.mxu0 0.0
    %1273 = vmatprep.subr.mxu0 0.0
    %1274 = vmatpush1.msra.mxu0 0.0
    %1275 = vmatprep.subr.mxu0 0.0
    %1276 = vmatpush1.msra.mxu0 0.0
    %1277 = vmatprep.subr.mxu0 0.0
    %1278 = vmatpush1.msra.mxu0 0.0
    %1279 = vmatprep.mubr.f32.mxu0 0.0
    %1280 = vmatmul.mubr.f32.gmra.mrb[0].mxu0 %v1213
    %v1281 = vpop.f32.mrb[0].mxu0
    %v1282 = vadd.f32 0.0, %v1281
    %v1283 = vpop.f32.mrb[0].mxu0
    %1284 = vdwg.mxu0
    %1285 = vrot.lane.b32.xlu0 %v129, 64
    %v1286 = vpop.permute.xlu0 %1285
    %v1289 = vsel %vm134, %v827, 0
    %1291 = vmatprep.subr.mxu0 0.0
    %1292 = vmatpush1.msra.mxu0 %v1286
    %1293 = vmatprep.subr.mxu0 0.0
    %1294 = vmatpush1.msra.mxu0 0.0
    %1295 = vmatprep.subr.mxu0 0.0
    %1296 = vmatpush1.msra.mxu0 0.0
    %1297 = vmatprep.subr.mxu0 0.0
    %1298 = vmatpush1.msra.mxu0 0.0
    %1299 = vmatprep.subr.mxu0 0.0
    %1300 = vmatpush1.msra.mxu0 0.0
    %1301 = vmatprep.subr.mxu0 0.0
    %1302 = vmatpush1.msra.mxu0 0.0
    %1303 = vmatprep.subr.mxu0 0.0
    %1304 = vmatpush1.msra.mxu0 0.0
    %1305 = vmatprep.subr.mxu0 0.0
    %1306 = vmatpush1.msra.mxu0 0.0
    %1307 = vmatprep.subr.mxu0 0.0
    %1308 = vmatpush1.msra.mxu0 0.0
    %1309 = vmatprep.subr.mxu0 0.0
    %1310 = vmatpush1.msra.mxu0 0.0
    %1311 = vmatprep.subr.mxu0 0.0
    %1312 = vmatpush1.msra.mxu0 0.0
    %1313 = vmatprep.subr.mxu0 0.0
    %1314 = vmatpush1.msra.mxu0 0.0
    %1315 = vmatprep.subr.mxu0 0.0
    %1316 = vmatpush1.msra.mxu0 0.0
    %1317 = vmatprep.subr.mxu0 0.0
    %1318 = vmatpush1.msra.mxu0 0.0
    %1319 = vmatprep.subr.mxu0 0.0
    %1320 = vmatpush1.msra.mxu0 0.0
    %1321 = vmatprep.subr.mxu0 0.0
    %1322 = vmatpush1.msra.mxu0 0.0
    %1323 = vmatprep.subr.mxu0 0.0
    %1324 = vmatpush1.msra.mxu0 0.0
    %1325 = vmatprep.subr.mxu0 0.0
    %1326 = vmatpush1.msra.mxu0 0.0
    %1327 = vmatprep.subr.mxu0 0.0
    %1328 = vmatpush1.msra.mxu0 0.0
    %1329 = vmatprep.subr.mxu0 0.0
    %1330 = vmatpush1.msra.mxu0 0.0
    %1331 = vmatprep.subr.mxu0 0.0
    %1332 = vmatpush1.msra.mxu0 0.0
    %1333 = vmatprep.subr.mxu0 0.0
    %1334 = vmatpush1.msra.mxu0 0.0
    %1335 = vmatprep.subr.mxu0 0.0
    %1336 = vmatpush1.msra.mxu0 0.0
    %1337 = vmatprep.subr.mxu0 0.0
    %1338 = vmatpush1.msra.mxu0 0.0
    %1339 = vmatprep.subr.mxu0 0.0
    %1340 = vmatpush1.msra.mxu0 0.0
    %1341 = vmatprep.subr.mxu0 0.0
    %1342 = vmatpush1.msra.mxu0 0.0
    %1343 = vmatprep.subr.mxu0 0.0
    %1344 = vmatpush1.msra.mxu0 0.0
    %1345 = vmatprep.subr.mxu0 0.0
    %1346 = vmatpush1.msra.mxu0 0.0
    %1347 = vmatprep.subr.mxu0 0.0
    %1348 = vmatpush1.msra.mxu0 0.0
    %1349 = vmatprep.subr.mxu0 0.0
    %1350 = vmatpush1.msra.mxu0 0.0
    %1351 = vmatprep.subr.mxu0 0.0
    %1352 = vmatpush1.msra.mxu0 0.0
    %1353 = vmatprep.subr.mxu0 0.0
    %1354 = vmatpush1.msra.mxu0 0.0
    %1355 = vmatprep.mubr.f32.mxu0 0.0
    %1356 = vmatmul.mubr.f32.gmra.mrb[0].mxu0 %v1289
    %v1357 = vpop.f32.mrb[0].mxu0
    %v1358 = vadd.f32 0.0, %v1357
    %v1359 = vpop.f32.mrb[0].mxu0
    %1360 = vdwg.mxu0
    %1361 = vrot.lane.b32.xlu0 %v131, 64
    %v1362 = vpop.permute.xlu0 %1361
    %v1365 = vsel %vm134, %v828, 0
    %1367 = vmatprep.subr.mxu0 0.0
    %1368 = vmatpush1.msra.mxu0 %v1362
    %1369 = vmatprep.subr.mxu0 0.0
    %1370 = vmatpush1.msra.mxu0 0.0
    %1371 = vmatprep.subr.mxu0 0.0
    %1372 = vmatpush1.msra.mxu0 0.0
    %1373 = vmatprep.subr.mxu0 0.0
    %1374 = vmatpush1.msra.mxu0 0.0
    %1375 = vmatprep.subr.mxu0 0.0
    %1376 = vmatpush1.msra.mxu0 0.0
    %1377 = vmatprep.subr.mxu0 0.0
    %1378 = vmatpush1.msra.mxu0 0.0
    %1379 = vmatprep.subr.mxu0 0.0
    %1380 = vmatpush1.msra.mxu0 0.0
    %1381 = vmatprep.subr.mxu0 0.0
    %1382 = vmatpush1.msra.mxu0 0.0
    %1383 = vmatprep.subr.mxu0 0.0
    %1384 = vmatpush1.msra.mxu0 0.0
    %1385 = vmatprep.subr.mxu0 0.0
    %1386 = vmatpush1.msra.mxu0 0.0
    %1387 = vmatprep.subr.mxu0 0.0
    %1388 = vmatpush1.msra.mxu0 0.0
    %1389 = vmatprep.subr.mxu0 0.0
    %1390 = vmatpush1.msra.mxu0 0.0
    %1391 = vmatprep.subr.mxu0 0.0
    %1392 = vmatpush1.msra.mxu0 0.0
    %1393 = vmatprep.subr.mxu0 0.0
    %1394 = vmatpush1.msra.mxu0 0.0
    %1395 = vmatprep.subr.mxu0 0.0
    %1396 = vmatpush1.msra.mxu0 0.0
    %1397 = vmatprep.subr.mxu0 0.0
    %1398 = vmatpush1.msra.mxu0 0.0
    %1399 = vmatprep.subr.mxu0 0.0
    %1400 = vmatpush1.msra.mxu0 0.0
    %1401 = vmatprep.subr.mxu0 0.0
    %1402 = vmatpush1.msra.mxu0 0.0
    %1403 = vmatprep.subr.mxu0 0.0
    %1404 = vmatpush1.msra.mxu0 0.0
    %1405 = vmatprep.subr.mxu0 0.0
    %1406 = vmatpush1.msra.mxu0 0.0
    %1407 = vmatprep.subr.mxu0 0.0
    %1408 = vmatpush1.msra.mxu0 0.0
    %1409 = vmatprep.subr.mxu0 0.0
    %1410 = vmatpush1.msra.mxu0 0.0
    %1411 = vmatprep.subr.mxu0 0.0
    %1412 = vmatpush1.msra.mxu0 0.0
    %1413 = vmatprep.subr.mxu0 0.0
    %1414 = vmatpush1.msra.mxu0 0.0
    %1415 = vmatprep.subr.mxu0 0.0
    %1416 = vmatpush1.msra.mxu0 0.0
    %1417 = vmatprep.subr.mxu0 0.0
    %1418 = vmatpush1.msra.mxu0 0.0
    %1419 = vmatprep.subr.mxu0 0.0
    %1420 = vmatpush1.msra.mxu0 0.0
    %1421 = vmatprep.subr.mxu0 0.0
    %1422 = vmatpush1.msra.mxu0 0.0
    %1423 = vmatprep.subr.mxu0 0.0
    %1424 = vmatpush1.msra.mxu0 0.0
    %1425 = vmatprep.subr.mxu0 0.0
    %1426 = vmatpush1.msra.mxu0 0.0
    %1427 = vmatprep.subr.mxu0 0.0
    %1428 = vmatpush1.msra.mxu0 0.0
    %1429 = vmatprep.subr.mxu0 0.0
    %1430 = vmatpush1.msra.mxu0 0.0
    %1431 = vmatprep.mubr.f32.mxu0 0.0
    %1432 = vmatmul.mubr.f32.gmra.mrb[0].mxu0 %v1365
    %v1433 = vpop.f32.mrb[0].mxu0
    %v1434 = vadd.f32 0.0, %v1433
    %v1435 = vpop.f32.mrb[0].mxu0
    %1436 = vdwg.mxu0
    %1439 = vrot.lane.b32.xlu0 %v1054, 8
    %v1440 = vpop.permute.xlu0 %1439
    %1441 = vrot.lane.b32.xlu0 %v1130, 8
    %v1442 = vpop.permute.xlu0 %1441
    %1447 = vrot.lane.b32.xlu0 %v1206, 16
    %v1448 = vpop.permute.xlu0 %1447
    %1449 = vrot.lane.b32.xlu0 %v1282, 16
    %v1450 = vpop.permute.xlu0 %1449
    %1455 = vrot.lane.b32.xlu0 %v1358, 24
    %v1456 = vpop.permute.xlu0 %1455
    %1457 = vrot.lane.b32.xlu0 %v1434, 24
    %v1458 = vpop.permute.xlu0 %1457
    %v1461 = vsel %vm134, %v902, %v1440
    %v1462 = vsel %vm134, %v978, %v1442
    %vm1463 = vcmask 130048
    %v1464 = vsel %vm1463, %v1461, %v1448
    %v1465 = vsel %vm1463, %v1462, %v1450
    %vm1466 = vcmask 195584
    %v1467 = vsel %vm1466, %v1464, %v1456
    %v1468 = vsel %vm1466, %v1465, %v1458
    %v1469 = vpack.c.bf16 %v1468, %v1467
    %v1470 = vlaneseq
    %v1471 = vshrl.u32 %v1470, 7
    %v1472 = vsub.s32 1, %v1471
    %v1473 = vrot.slane %v55, %v1472
    %v1478 = vunpack.c.l.b16 %v31
    %v1479 = vunpack.c.l.b16 %v32
    %v1480 = vunpack.c.l.b16 %v33
    %v1481 = vunpack.c.l.b16 %v34
    %v1482 = vpack.c.b16 %v1479, %v1478
    %v1483 = vpack.c.b16 %v1481, %v1480
    %v1487 = vsel %vm73, %v1469, 0
    %1489 = vmatprep.subr.bf16.mxu0 0
    %1490 = vmatpush1.bf16.msra.mxu0 %v1482
    %1491 = vmatprep.subr.bf16.mxu0 0
    %1492 = vmatpush1.bf16.msra.mxu0 %v1483
    %1493 = vmatprep.subr.bf16.mxu0 0
    %1494 = vmatpush1.bf16.msra.mxu0 0
    %1495 = vmatprep.subr.bf16.mxu0 0
    %1496 = vmatpush1.bf16.msra.mxu0 0
    %1497 = vmatprep.subr.bf16.mxu0 0
    %1498 = vmatpush1.bf16.msra.mxu0 0
    %1499 = vmatprep.subr.bf16.mxu0 0
    %1500 = vmatpush1.bf16.msra.mxu0 0
    %1501 = vmatprep.subr.bf16.mxu0 0
    %1502 = vmatpush1.bf16.msra.mxu0 0
    %1503 = vmatprep.subr.bf16.mxu0 0
    %1504 = vmatpush1.bf16.msra.mxu0 0
    %1505 = vmatprep.subr.bf16.mxu0 0
    %1506 = vmatpush1.bf16.msra.mxu0 0
    %1507 = vmatprep.subr.bf16.mxu0 0
    %1508 = vmatpush1.bf16.msra.mxu0 0
    %1509 = vmatprep.subr.bf16.mxu0 0
    %1510 = vmatpush1.bf16.msra.mxu0 0
    %1511 = vmatprep.subr.bf16.mxu0 0
    %1512 = vmatpush1.bf16.msra.mxu0 0
    %1513 = vmatprep.subr.bf16.mxu0 0
    %1514 = vmatpush1.bf16.msra.mxu0 0
    %1515 = vmatprep.subr.bf16.mxu0 0
    %1516 = vmatpush1.bf16.msra.mxu0 0
    %1517 = vmatprep.subr.bf16.mxu0 0
    %1518 = vmatpush1.bf16.msra.mxu0 0
    %1519 = vmatprep.subr.bf16.mxu0 0
    %1520 = vmatpush1.bf16.msra.mxu0 0
    %1521 = vmatprep.mubr.bf16.mxu0 0
    %1522 = vmatmul.mubr.bf16.gmra.mrb[0].mxu0 %v1487
    %v1523 = vpop.f32.mrb[0].mxu0
    %v1524 = vadd.f32 %v1473, %v1523
    %v1525 = vpop.f32.mrb[0].mxu0
    %v1526 = vpop.f32.mrb[0].mxu0
    %v1527 = vadd.f32 %v1473, %v1526
    %v1528 = vpop.f32.mrb[0].mxu0
    %1529 = vdwg.mxu0
    %v1530 = vadd.f32 %v25, %v1524
    %v1531 = vadd.f32 %v26, %v1527
    %v1532 = vsel %vm73, %v1530, 0.0
    %1533 = vadd.xlane.f32.xlu0 %v1532
    %v1534 = vpop.xlane.xlu0 %1533
    %v1535 = vsel %vm73, %v1531, 0.0
    %1536 = vadd.xlane.f32.xlu0 %v1535
    %v1537 = vpop.xlane.xlu0 %1536
    %v1538 = vrcp.pop 32.0
    %v1539 = vmul.f32 %v1534, %v1538
    %v1540 = vmul.f32 %v1537, %v1538
    %v1541 = vsub.f32 %v1530, %v1539
    %v1542 = vsub.f32 %v1531, %v1540
    %v1543 = vmul.f32 %v1541, %v1541
    %v1544 = vmul.f32 %v1542, %v1542
    %v1545 = vsel %vm73, %v1543, 0.0
    %1546 = vadd.xlane.f32.xlu0 %v1545
    %v1547 = vpop.xlane.xlu0 %1546
    %v1548 = vsel %vm73, %v1544, 0.0
    %1549 = vadd.xlane.f32.xlu0 %v1548
    %v1550 = vpop.xlane.xlu0 %1549
    %v1551 = vmul.f32 %v1547, %v1538
    %v1552 = vmul.f32 %v1550, %v1538
    %v1553 = vadd.f32 %v1551, 1e-12
    %v1554 = vadd.f32 %v1552, 1e-12
    %v1555 = vrsqrt.pop %v1553
    %v1556 = vrsqrt.pop %v1554
    %v1557 = vmul.f32 %v1541, %v1555
    %v1558 = vmul.f32 %v1542, %v1556
    %v1559 = vlaneseq
    %v1560 = vshrl.u32 %v1559, 7
    %v1561 = vsub.s32 2, %v1560
    %v1562 = vrot.slane %v55, %v1561
    %v1563 = vmul.f32 %v1557, %v1562
    %v1564 = vmul.f32 %v1558, %v1562
    %v1565 = vlaneseq
    %v1566 = vshrl.u32 %v1565, 7
    %v1567 = vsub.s32 3, %v1566
    %v1568 = vrot.slane %v55, %v1567
    %v1569 = vadd.f32 %v1563, %v1568
    %v1570 = vadd.f32 %v1564, %v1568
    %v1571 = vpack.c.bf16 %v1570, %v1569
    %v1572 = vlaneseq
    %v1573 = vshrl.u32 %v1572, 7
    %v1574 = vsub.s32 4, %v1573
    %v1575 = vrot.slane %v55, %v1574
    %v1580 = vunpack.c.l.b16 %v35
    %v1581 = vunpack.c.l.b16 %v36
    %v1582 = vunpack.c.l.b16 %v37
    %v1583 = vunpack.c.l.b16 %v38
    %v1584 = vpack.c.b16 %v1581, %v1580
    %v1585 = vpack.c.b16 %v1583, %v1582
    %v1589 = vsel %vm73, %v1571, 0
    %1591 = vmatprep.subr.bf16.mxu0 0
    %1592 = vmatpush1.bf16.msra.mxu0 %v1584
    %1593 = vmatprep.subr.bf16.mxu0 0
    %1594 = vmatpush1.bf16.msra.mxu0 %v1585
    %1595 = vmatprep.subr.bf16.mxu0 0
    %1596 = vmatpush1.bf16.msra.mxu0 0
    %1597 = vmatprep.subr.bf16.mxu0 0
    %1598 = vmatpush1.bf16.msra.mxu0 0
    %1599 = vmatprep.subr.bf16.mxu0 0
    %1600 = vmatpush1.bf16.msra.mxu0 0
    %1601 = vmatprep.subr.bf16.mxu0 0
    %1602 = vmatpush1.bf16.msra.mxu0 0
    %1603 = vmatprep.subr.bf16.mxu0 0
    %1604 = vmatpush1.bf16.msra.mxu0 0
    %1605 = vmatprep.subr.bf16.mxu0 0
    %1606 = vmatpush1.bf16.msra.mxu0 0
    %1607 = vmatprep.subr.bf16.mxu0 0
    %1608 = vmatpush1.bf16.msra.mxu0 0
    %1609 = vmatprep.subr.bf16.mxu0 0
    %1610 = vmatpush1.bf16.msra.mxu0 0
    %1611 = vmatprep.subr.bf16.mxu0 0
    %1612 = vmatpush1.bf16.msra.mxu0 0
    %1613 = vmatprep.subr.bf16.mxu0 0
    %1614 = vmatpush1.bf16.msra.mxu0 0
    %1615 = vmatprep.subr.bf16.mxu0 0
    %1616 = vmatpush1.bf16.msra.mxu0 0
    %1617 = vmatprep.subr.bf16.mxu0 0
    %1618 = vmatpush1.bf16.msra.mxu0 0
    %1619 = vmatprep.subr.bf16.mxu0 0
    %1620 = vmatpush1.bf16.msra.mxu0 0
    %1621 = vmatprep.subr.bf16.mxu0 0
    %1622 = vmatpush1.bf16.msra.mxu0 0
    %1623 = vmatprep.mubr.bf16.mxu0 0
    %1624 = vmatmul.mubr.bf16.gmra.mrb[0].mxu0 %v1589
    %v1625 = vpop.f32.mrb[0].mxu0
    %v1626 = vadd.f32 %v1575, %v1625
    %v1627 = vpop.f32.mrb[0].mxu0
    %v1628 = vpop.f32.mrb[0].mxu0
    %v1629 = vadd.f32 %v1575, %v1628
    %v1630 = vpop.f32.mrb[0].mxu0
    %1631 = vdwg.mxu0
    %v1632 = vmul.f32 %v1626, %v1626
    %v1633 = vmul.f32 %v1629, %v1629
    %v1634 = vmul.f32 %v1626, %v1632
    %v1635 = vmul.f32 %v1629, %v1633
    %v1636 = vmul.f32 %v1634, 0.044715
    %v1637 = vmul.f32 %v1635, 0.044715
    %v1638 = vadd.f32 %v1626, %v1636
    %v1639 = vadd.f32 %v1629, %v1637
    %v1640 = vmul.f32 %v1638, 0.7978846
    %v1641 = vmul.f32 %v1639, 0.7978846
    %v1642 = vtanh.pop %v1640
    %v1643 = vtanh.pop %v1641
    %v1644 = vadd.f32 %v1642, 1.0
    %v1645 = vadd.f32 %v1643, 1.0
    %v1646 = vmul.f32 %v1644, 0.5
    %v1647 = vmul.f32 %v1645, 0.5
    %v1648 = vmul.f32 %v1626, %v1646
    %v1649 = vmul.f32 %v1629, %v1647
    %v1650 = vpack.c.bf16 %v1649, %v1648
    %v1651 = vlaneseq
    %v1652 = vshrl.u32 %v1651, 7
    %v1653 = vsub.s32 5, %v1652
    %v1654 = vrot.slane %v55, %v1653
    %v1671 = vunpack.c.l.b16 %v39
    %v1672 = vunpack.c.l.b16 %v40
    %v1673 = vunpack.c.l.b16 %v41
    %v1674 = vunpack.c.l.b16 %v42
    %v1675 = vunpack.c.l.b16 %v43
    %v1676 = vunpack.c.l.b16 %v44
    %v1677 = vunpack.c.l.b16 %v45
    %v1678 = vunpack.c.l.b16 %v46
    %v1679 = vunpack.c.l.b16 %v47
    %v1680 = vunpack.c.l.b16 %v48
    %v1681 = vunpack.c.l.b16 %v49
    %v1682 = vunpack.c.l.b16 %v50
    %v1683 = vunpack.c.l.b16 %v51
    %v1684 = vunpack.c.l.b16 %v52
    %v1685 = vunpack.c.l.b16 %v53
    %v1686 = vunpack.c.l.b16 %v54
    %v1687 = vpack.c.b16 %v1672, %v1671
    %v1688 = vpack.c.b16 %v1674, %v1673
    %v1689 = vpack.c.b16 %v1676, %v1675
    %v1690 = vpack.c.b16 %v1678, %v1677
    %v1691 = vpack.c.b16 %v1680, %v1679
    %v1692 = vpack.c.b16 %v1682, %v1681
    %v1693 = vpack.c.b16 %v1684, %v1683
    %v1694 = vpack.c.b16 %v1686, %v1685
    %1703 = vmatprep.subr.bf16.mxu0 0
    %1704 = vmatpush1.bf16.msra.mxu0 %v1687
    %1705 = vmatprep.subr.bf16.mxu0 0
    %1706 = vmatpush1.bf16.msra.mxu0 %v1688
    %1707 = vmatprep.subr.bf16.mxu0 0
    %1708 = vmatpush1.bf16.msra.mxu0 %v1689
    %1709 = vmatprep.subr.bf16.mxu0 0
    %1710 = vmatpush1.bf16.msra.mxu0 %v1690
    %1711 = vmatprep.subr.bf16.mxu0 0
    %1712 = vmatpush1.bf16.msra.mxu0 %v1691
    %1713 = vmatprep.subr.bf16.mxu0 0
    %1714 = vmatpush1.bf16.msra.mxu0 %v1692
    %1715 = vmatprep.subr.bf16.mxu0 0
    %1716 = vmatpush1.bf16.msra.mxu0 %v1693
    %1717 = vmatprep.subr.bf16.mxu0 0
    %1718 = vmatpush1.bf16.msra.mxu0 %v1694
    %1719 = vmatprep.subr.bf16.mxu0 0
    %1720 = vmatpush1.bf16.msra.mxu0 0
    %1721 = vmatprep.subr.bf16.mxu0 0
    %1722 = vmatpush1.bf16.msra.mxu0 0
    %1723 = vmatprep.subr.bf16.mxu0 0
    %1724 = vmatpush1.bf16.msra.mxu0 0
    %1725 = vmatprep.subr.bf16.mxu0 0
    %1726 = vmatpush1.bf16.msra.mxu0 0
    %1727 = vmatprep.subr.bf16.mxu0 0
    %1728 = vmatpush1.bf16.msra.mxu0 0
    %1729 = vmatprep.subr.bf16.mxu0 0
    %1730 = vmatpush1.bf16.msra.mxu0 0
    %1731 = vmatprep.subr.bf16.mxu0 0
    %1732 = vmatpush1.bf16.msra.mxu0 0
    %1733 = vmatprep.subr.bf16.mxu0 0
    %1734 = vmatpush1.bf16.msra.mxu0 0
    %1735 = vmatprep.mubr.bf16.mxu0 0
    %1736 = vmatmul.mubr.bf16.gmra.mrb[0].mxu0 %v1650
    %v1737 = vpop.f32.mrb[0].mxu0
    %v1738 = vadd.f32 %v1654, %v1737
    %v1739 = vpop.f32.mrb[0].mxu0
    %v1740 = vpop.f32.mrb[0].mxu0
    %v1741 = vadd.f32 %v1654, %v1740
    %v1742 = vpop.f32.mrb[0].mxu0
    %1743 = vdwg.mxu0
    %v1744 = vadd.f32 %v1569, %v1738
    %v1745 = vadd.f32 %v1570, %v1741
    %v1746 = vsel %vm73, %v1744, 0.0
    %1747 = vadd.xlane.f32.xlu0 %v1746
    %v1748 = vpop.xlane.xlu0 %1747
    %v1749 = vsel %vm73, %v1745, 0.0
    %1750 = vadd.xlane.f32.xlu0 %v1749
    %v1751 = vpop.xlane.xlu0 %1750
    %v1752 = vmul.f32 %v1748, %v1538
    %v1753 = vmul.f32 %v1751, %v1538
    %v1754 = vsub.f32 %v1744, %v1752
    %v1755 = vsub.f32 %v1745, %v1753
    %v1756 = vmul.f32 %v1754, %v1754
    %v1757 = vmul.f32 %v1755, %v1755
    %v1758 = vsel %vm73, %v1756, 0.0
    %1759 = vadd.xlane.f32.xlu0 %v1758
    %v1760 = vpop.xlane.xlu0 %1759
    %v1761 = vsel %vm73, %v1757, 0.0
    %1762 = vadd.xlane.f32.xlu0 %v1761
    %v1763 = vpop.xlane.xlu0 %1762
    %v1764 = vmul.f32 %v1760, %v1538
    %v1765 = vmul.f32 %v1763, %v1538
    %v1766 = vadd.f32 %v1764, 1e-12
    %v1767 = vadd.f32 %v1765, 1e-12
    %v1768 = vrsqrt.pop %v1766
    %v1769 = vrsqrt.pop %v1767
    %v1770 = vmul.f32 %v1754, %v1768
    %v1771 = vmul.f32 %v1755, %v1769
    %v1772 = vlaneseq
    %v1773 = vshrl.u32 %v1772, 7
    %v1774 = vsub.s32 6, %v1773
    %v1775 = vrot.slane %v55, %v1774
    %v1776 = vmul.f32 %v1770, %v1775
    %v1777 = vmul.f32 %v1771, %v1775
    %v1778 = vlaneseq
    %v1779 = vshrl.u32 %v1778, 7
    %v1780 = vsub.s32 7, %v1779
    %v1781 = vrot.slane %v55, %v1780
    %v1782 = vadd.f32 %v1776, %v1781
    %v1783 = vadd.f32 %v1777, %v1781
    %s1784 = scalar_lea.vmem %s1, 16
    %v1785 = vld [vmem:[%s1784] sm:$0xf]
    %v1786 = vld [vmem:[%s1784 + $0x4] sm:$0xf]
    %v1787 = vld [vmem:[%s1784 + $0x8] sm:$0xf]
    %v1788 = vld [vmem:[%s1784 + $0xc] sm:$0xf]
    %s1789 = scalar_lea.vmem %s2, 16
    %v1790 = vld [vmem:[%s1789] sm:$0xf]
    %v1791 = vld [vmem:[%s1789 + $0x4] sm:$0xf]
    %v1792 = vld [vmem:[%s1789 + $0x8] sm:$0xf]
    %v1793 = vld [vmem:[%s1789 + $0xc] sm:$0xf]
    %s1794 = scalar_lea.vmem %s3, 16
    %v1795 = vld [vmem:[%s1794] sm:$0xf]
    %v1796 = vld [vmem:[%s1794 + $0x4] sm:$0xf]
    %v1797 = vld [vmem:[%s1794 + $0x8] sm:$0xf]
    %v1798 = vld [vmem:[%s1794 + $0xc] sm:$0xf]
    %s1799 = scalar_lea.vmem %s4, 64
    %v1800 = vld [vmem:[%s1799] sm:$0xf]
    %v1801 = vld [vmem:[%s1799 + $0x4] sm:$0xf]
    %v1802 = vld [vmem:[%s1799 + $0x8] sm:$0xf]
    %v1803 = vld [vmem:[%s1799 + $0xc] sm:$0xf]
    %v1804 = vld [vmem:[%s1799 + $0x10] sm:$0xf]
    %v1805 = vld [vmem:[%s1799 + $0x14] sm:$0xf]
    %v1806 = vld [vmem:[%s1799 + $0x18] sm:$0xf]
    %v1807 = vld [vmem:[%s1799 + $0x1c] sm:$0xf]
    %v1808 = vld [vmem:[%s1799 + $0x20] sm:$0xf]
    %v1809 = vld [vmem:[%s1799 + $0x24] sm:$0xf]
    %v1810 = vld [vmem:[%s1799 + $0x28] sm:$0xf]
    %v1811 = vld [vmem:[%s1799 + $0x2c] sm:$0xf]
    %v1812 = vld [vmem:[%s1799 + $0x30] sm:$0xf]
    %v1813 = vld [vmem:[%s1799 + $0x34] sm:$0xf]
    %v1814 = vld [vmem:[%s1799 + $0x38] sm:$0xf]
    %v1815 = vld [vmem:[%s1799 + $0x3c] sm:$0xf]
    %s1816 = scalar_lea.vmem %s5, 8
    %v1817 = vld [vmem:[%s1816] sm:$0xff]
    %v1818 = vpack.c.bf16 %v1783, %v1782
    %v1819 = vlaneseq
    %v1820 = vshrl.u32 %v1819, 7
    %v1821 = vsub.s32 0, %v1820
    %v1822 = vrot.slane %v1817, %v1821
    %v1827 = vunpack.c.l.b16 %v1785
    %v1828 = vunpack.c.l.b16 %v1786
    %v1829 = vunpack.c.l.b16 %v1787
    %v1830 = vunpack.c.l.b16 %v1788
    %v1831 = vpack.c.b16 %v1828, %v1827
    %v1832 = vpack.c.b16 %v1830, %v1829
    %v1836 = vsel %vm73, %v1818, 0
    %1838 = vmatprep.subr.bf16.mxu0 0
    %1839 = vmatpush1.bf16.msra.mxu0 %v1831
    %1840 = vmatprep.subr.bf16.mxu0 0
    %1841 = vmatpush1.bf16.msra.mxu0 %v1832
    %1842 = vmatprep.subr.bf16.mxu0 0
    %1843 = vmatpush1.bf16.msra.mxu0 0
    %1844 = vmatprep.subr.bf16.mxu0 0
    %1845 = vmatpush1.bf16.msra.mxu0 0
    %1846 = vmatprep.subr.bf16.mxu0 0
    %1847 = vmatpush1.bf16.msra.mxu0 0
    %1848 = vmatprep.subr.bf16.mxu0 0
    %1849 = vmatpush1.bf16.msra.mxu0 0
    %1850 = vmatprep.subr.bf16.mxu0 0
    %1851 = vmatpush1.bf16.msra.mxu0 0
    %1852 = vmatprep.subr.bf16.mxu0 0
    %1853 = vmatpush1.bf16.msra.mxu0 0
    %1854 = vmatprep.subr.bf16.mxu0 0
    %1855 = vmatpush1.bf16.msra.mxu0 0
    %1856 = vmatprep.subr.bf16.mxu0 0
    %1857 = vmatpush1.bf16.msra.mxu0 0
    %1858 = vmatprep.subr.bf16.mxu0 0
    %1859 = vmatpush1.bf16.msra.mxu0 0
    %1860 = vmatprep.subr.bf16.mxu0 0
    %1861 = vmatpush1.bf16.msra.mxu0 0
    %1862 = vmatprep.subr.bf16.mxu0 0
    %1863 = vmatpush1.bf16.msra.mxu0 0
    %1864 = vmatprep.subr.bf16.mxu0 0
    %1865 = vmatpush1.bf16.msra.mxu0 0
    %1866 = vmatprep.subr.bf16.mxu0 0
    %1867 = vmatpush1.bf16.msra.mxu0 0
    %1868 = vmatprep.subr.bf16.mxu0 0
    %1869 = vmatpush1.bf16.msra.mxu0 0
    %1870 = vmatprep.mubr.bf16.mxu0 0
    %1871 = vmatmul.mubr.bf16.gmra.mrb[0].mxu0 %v1836
    %v1872 = vpop.f32.mrb[0].mxu0
    %v1873 = vadd.f32 %v1822, %v1872
    %v1874 = vpop.f32.mrb[0].mxu0
    %v1875 = vpop.f32.mrb[0].mxu0
    %v1876 = vadd.f32 %v1822, %v1875
    %v1877 = vpop.f32.mrb[0].mxu0
    %1878 = vdwg.mxu0
    %1881 = vrot.lane.b32.xlu0 %v1873, 120
    %v1882 = vpop.permute.xlu0 %1881
    %1883 = vrot.lane.b32.xlu0 %v1876, 120
    %v1884 = vpop.permute.xlu0 %1883
    %1885 = vrot.lane.b32.xlu0 %v1873, 112
    %v1886 = vpop.permute.xlu0 %1885
    %1887 = vrot.lane.b32.xlu0 %v1876, 112
    %v1888 = vpop.permute.xlu0 %1887
    %1889 = vrot.lane.b32.xlu0 %v1873, 104
    %v1890 = vpop.permute.xlu0 %1889
    %1891 = vrot.lane.b32.xlu0 %v1876, 104
    %v1892 = vpop.permute.xlu0 %1891
    %1893 = vrot.lane.b32.xlu0 %v1873, 96
    %v1894 = vpop.permute.xlu0 %1893
    %v1895 = vsel %vm134, %v1873, 0
    %v1897 = vsel %vm134, %v1894, 0
    %1899 = vmatprep.subr.mxu0 0.0
    %1900 = vmatpush1.xpose.msra.mxu0 %v1897
    %1901 = vmatprep.subr.mxu0 0.0
    %1902 = vmatpush1.xpose.msra.mxu0 0.0
    %1903 = vmatprep.subr.mxu0 0.0
    %1904 = vmatpush1.xpose.msra.mxu0 0.0
    %1905 = vmatprep.subr.mxu0 0.0
    %1906 = vmatpush1.xpose.msra.mxu0 0.0
    %1907 = vmatprep.subr.mxu0 0.0
    %1908 = vmatpush1.xpose.msra.mxu0 0.0
    %1909 = vmatprep.subr.mxu0 0.0
    %1910 = vmatpush1.xpose.msra.mxu0 0.0
    %1911 = vmatprep.subr.mxu0 0.0
    %1912 = vmatpush1.xpose.msra.mxu0 0.0
    %1913 = vmatprep.subr.mxu0 0.0
    %1914 = vmatpush1.xpose.msra.mxu0 0.0
    %1915 = vmatprep.subr.mxu0 0.0
    %1916 = vmatpush1.xpose.msra.mxu0 0.0
    %1917 = vmatprep.subr.mxu0 0.0
    %1918 = vmatpush1.xpose.msra.mxu0 0.0
    %1919 = vmatprep.subr.mxu0 0.0
    %1920 = vmatpush1.xpose.msra.mxu0 0.0
    %1921 = vmatprep.subr.mxu0 0.0
    %1922 = vmatpush1.xpose.msra.mxu0 0.0
    %1923 = vmatprep.subr.mxu0 0.0
    %1924 = vmatpush1.xpose.msra.mxu0 0.0
    %1925 = vmatprep.subr.mxu0 0.0
    %1926 = vmatpush1.xpose.msra.mxu0 0.0
    %1927 = vmatprep.subr.mxu0 0.0
    %1928 = vmatpush1.xpose.msra.mxu0 0.0
    %1929 = vmatprep.subr.mxu0 0.0
    %1930 = vmatpush1.xpose.msra.mxu0 0.0
    %1931 = vmatprep.subr.mxu0 0.0
    %1932 = vmatpush1.xpose.msra.mxu0 0.0
    %1933 = vmatprep.subr.mxu0 0.0
    %1934 = vmatpush1.xpose.msra.mxu0 0.0
    %1935 = vmatprep.subr.mxu0 0.0
    %1936 = vmatpush1.xpose.msra.mxu0 0.0
    %1937 = vmatprep.subr.mxu0 0.0
    %1938 = vmatpush1.xpose.msra.mxu0 0.0
    %1939 = vmatprep.subr.mxu0 0.0
    %1940 = vmatpush1.xpose.msra.mxu0 0.0
    %1941 = vmatprep.subr.mxu0 0.0
    %1942 = vmatpush1.xpose.msra.mxu0 0.0
    %1943 = vmatprep.subr.mxu0 0.0
    %1944 = vmatpush1.xpose.msra.mxu0 0.0
    %1945 = vmatprep.subr.mxu0 0.0
    %1946 = vmatpush1.xpose.msra.mxu0 0.0
    %1947 = vmatprep.subr.mxu0 0.0
    %1948 = vmatpush1.xpose.msra.mxu0 0.0
    %1949 = vmatprep.subr.mxu0 0.0
    %1950 = vmatpush1.xpose.msra.mxu0 0.0
    %1951 = vmatprep.subr.mxu0 0.0
    %1952 = vmatpush1.xpose.msra.mxu0 0.0
    %1953 = vmatprep.subr.mxu0 0.0
    %1954 = vmatpush1.xpose.msra.mxu0 0.0
    %1955 = vmatprep.subr.mxu0 0.0
    %1956 = vmatpush1.xpose.msra.mxu0 0.0
    %1957 = vmatprep.subr.mxu0 0.0
    %1958 = vmatpush1.xpose.msra.mxu0 0.0
    %1959 = vmatprep.subr.mxu0 0.0
    %1960 = vmatpush1.xpose.msra.mxu0 0.0
    %1961 = vmatprep.subr.mxu0 0.0
    %1962 = vmatpush1.xpose.msra.mxu0 0.0
    %1963 = vmatprep.mubr.f32.mxu0 0.0
    %1964 = vmatmul.mubr.f32.gmra.mrb[0].mxu0 %v1895
    %v1965 = vpop.f32.mrb[0].mxu0
    %v1966 = vadd.f32 0.0, %v1965
    %v1967 = vpop.f32.mrb[0].mxu0
    %1968 = vdwg.mxu0
    %1969 = vrot.lane.b32.xlu0 %v1876, 96
    %v1970 = vpop.permute.xlu0 %1969
    %v1971 = vsel %vm134, %v1876, 0
    %v1973 = vsel %vm134, %v1970, 0
    %1975 = vmatprep.subr.mxu0 0.0
    %1976 = vmatpush1.xpose.msra.mxu0 %v1973
    %1977 = vmatprep.subr.mxu0 0.0
    %1978 = vmatpush1.xpose.msra.mxu0 0.0
    %1979 = vmatprep.subr.mxu0 0.0
    %1980 = vmatpush1.xpose.msra.mxu0 0.0
    %1981 = vmatprep.subr.mxu0 0.0
    %1982 = vmatpush1.xpose.msra.mxu0 0.0
    %1983 = vmatprep.subr.mxu0 0.0
    %1984 = vmatpush1.xpose.msra.mxu0 0.0
    %1985 = vmatprep.subr.mxu0 0.0
    %1986 = vmatpush1.xpose.msra.mxu0 0.0
    %1987 = vmatprep.subr.mxu0 0.0
    %1988 = vmatpush1.xpose.msra.mxu0 0.0
    %1989 = vmatprep.subr.mxu0 0.0
    %1990 = vmatpush1.xpose.msra.mxu0 0.0
    %1991 = vmatprep.subr.mxu0 0.0
    %1992 = vmatpush1.xpose.msra.mxu0 0.0
    %1993 = vmatprep.subr.mxu0 0.0
    %1994 = vmatpush1.xpose.msra.mxu0 0.0
    %1995 = vmatprep.subr.mxu0 0.0
    %1996 = vmatpush1.xpose.msra.mxu0 0.0
    %1997 = vmatprep.subr.mxu0 0.0
    %1998 = vmatpush1.xpose.msra.mxu0 0.0
    %1999 = vmatprep.subr.mxu0 0.0
    %2000 = vmatpush1.xpose.msra.mxu0 0.0
    %2001 = vmatprep.subr.mxu0 0.0
    %2002 = vmatpush1.xpose.msra.mxu0 0.0
    %2003 = vmatprep.subr.mxu0 0.0
    %2004 = vmatpush1.xpose.msra.mxu0 0.0
    %2005 = vmatprep.subr.mxu0 0.0
    %2006 = vmatpush1.xpose.msra.mxu0 0.0
    %2007 = vmatprep.subr.mxu0 0.0
    %2008 = vmatpush1.xpose.msra.mxu0 0.0
    %2009 = vmatprep.subr.mxu0 0.0
    %2010 = vmatpush1.xpose.msra.mxu0 0.0
    %2011 = vmatprep.subr.mxu0 0.0
    %2012 = vmatpush1.xpose.msra.mxu0 0.0
    %2013 = vmatprep.subr.mxu0 0.0
    %2014 = vmatpush1.xpose.msra.mxu0 0.0
    %2015 = vmatprep.subr.mxu0 0.0
    %2016 = vmatpush1.xpose.msra.mxu0 0.0
    %2017 = vmatprep.subr.mxu0 0.0
    %2018 = vmatpush1.xpose.msra.mxu0 0.0
    %2019 = vmatprep.subr.mxu0 0.0
    %2020 = vmatpush1.xpose.msra.mxu0 0.0
    %2021 = vmatprep.subr.mxu0 0.0
    %2022 = vmatpush1.xpose.msra.mxu0 0.0
    %2023 = vmatprep.subr.mxu0 0.0
    %2024 = vmatpush1.xpose.msra.mxu0 0.0
    %2025 = vmatprep.subr.mxu0 0.0
    %2026 = vmatpush1.xpose.msra.mxu0 0.0
    %2027 = vmatprep.subr.mxu0 0.0
    %2028 = vmatpush1.xpose.msra.mxu0 0.0
    %2029 = vmatprep.subr.mxu0 0.0
    %2030 = vmatpush1.xpose.msra.mxu0 0.0
    %2031 = vmatprep.subr.mxu0 0.0
    %2032 = vmatpush1.xpose.msra.mxu0 0.0
    %2033 = vmatprep.subr.mxu0 0.0
    %2034 = vmatpush1.xpose.msra.mxu0 0.0
    %2035 = vmatprep.subr.mxu0 0.0
    %2036 = vmatpush1.xpose.msra.mxu0 0.0
    %2037 = vmatprep.subr.mxu0 0.0
    %2038 = vmatpush1.xpose.msra.mxu0 0.0
    %2039 = vmatprep.mubr.f32.mxu0 0.0
    %2040 = vmatmul.mubr.f32.gmra.mrb[0].mxu0 %v1971
    %v2041 = vpop.f32.mrb[0].mxu0
    %v2042 = vadd.f32 0.0, %v2041
    %v2043 = vpop.f32.mrb[0].mxu0
    %2044 = vdwg.mxu0
    %2045 = vrot.lane.b32.xlu0 %v1882, 96
    %v2046 = vpop.permute.xlu0 %2045
    %v2047 = vsel %vm134, %v1882, 0
    %v2049 = vsel %vm134, %v2046, 0
    %2051 = vmatprep.subr.mxu0 0.0
    %2052 = vmatpush1.xpose.msra.mxu0 %v2049
    %2053 = vmatprep.subr.mxu0 0.0
    %2054 = vmatpush1.xpose.msra.mxu0 0.0
    %2055 = vmatprep.subr.mxu0 0.0
    %2056 = vmatpush1.xpose.msra.mxu0 0.0
    %2057 = vmatprep.subr.mxu0 0.0
    %2058 = vmatpush1.xpose.msra.mxu0 0.0
    %2059 = vmatprep.subr.mxu0 0.0
    %2060 = vmatpush1.xpose.msra.mxu0 0.0
    %2061 = vmatprep.subr.mxu0 0.0
    %2062 = vmatpush1.xpose.msra.mxu0 0.0
    %2063 = vmatprep.subr.mxu0 0.0
    %2064 = vmatpush1.xpose.msra.mxu0 0.0
    %2065 = vmatprep.subr.mxu0 0.0
    %2066 = vmatpush1.xpose.msra.mxu0 0.0
    %2067 = vmatprep.subr.mxu0 0.0
    %2068 = vmatpush1.xpose.msra.mxu0 0.0
    %2069 = vmatprep.subr.mxu0 0.0
    %2070 = vmatpush1.xpose.msra.mxu0 0.0
    %2071 = vmatprep.subr.mxu0 0.0
    %2072 = vmatpush1.xpose.msra.mxu0 0.0
    %2073 = vmatprep.subr.mxu0 0.0
    %2074 = vmatpush1.xpose.msra.mxu0 0.0
    %2075 = vmatprep.subr.mxu0 0.0
    %2076 = vmatpush1.xpose.msra.mxu0 0.0
    %2077 = vmatprep.subr.mxu0 0.0
    %2078 = vmatpush1.xpose.msra.mxu0 0.0
    %2079 = vmatprep.subr.mxu0 0.0
    %2080 = vmatpush1.xpose.msra.mxu0 0.0
    %2081 = vmatprep.subr.mxu0 0.0
    %2082 = vmatpush1.xpose.msra.mxu0 0.0
    %2083 = vmatprep.subr.mxu0 0.0
    %2084 = vmatpush1.xpose.msra.mxu0 0.0
    %2085 = vmatprep.subr.mxu0 0.0
    %2086 = vmatpush1.xpose.msra.mxu0 0.0
    %2087 = vmatprep.subr.mxu0 0.0
    %2088 = vmatpush1.xpose.msra.mxu0 0.0
    %2089 = vmatprep.subr.mxu0 0.0
    %2090 = vmatpush1.xpose.msra.mxu0 0.0
    %2091 = vmatprep.subr.mxu0 0.0
    %2092 = vmatpush1.xpose.msra.mxu0 0.0
    %2093 = vmatprep.subr.mxu0 0.0
    %2094 = vmatpush1.xpose.msra.mxu0 0.0
    %2095 = vmatprep.subr.mxu0 0.0
    %2096 = vmatpush1.xpose.msra.mxu0 0.0
    %2097 = vmatprep.subr.mxu0 0.0
    %2098 = vmatpush1.xpose.msra.mxu0 0.0
    %2099 = vmatprep.subr.mxu0 0.0
    %2100 = vmatpush1.xpose.msra.mxu0 0.0
    %2101 = vmatprep.subr.mxu0 0.0
    %2102 = vmatpush1.xpose.msra.mxu0 0.0
    %2103 = vmatprep.subr.mxu0 0.0
    %2104 = vmatpush1.xpose.msra.mxu0 0.0
    %2105 = vmatprep.subr.mxu0 0.0
    %2106 = vmatpush1.xpose.msra.mxu0 0.0
    %2107 = vmatprep.subr.mxu0 0.0
    %2108 = vmatpush1.xpose.msra.mxu0 0.0
    %2109 = vmatprep.subr.mxu0 0.0
    %2110 = vmatpush1.xpose.msra.mxu0 0.0
    %2111 = vmatprep.subr.mxu0 0.0
    %2112 = vmatpush1.xpose.msra.mxu0 0.0
    %2113 = vmatprep.subr.mxu0 0.0
    %2114 = vmatpush1.xpose.msra.mxu0 0.0
    %2115 = vmatprep.mubr.f32.mxu0 0.0
    %2116 = vmatmul.mubr.f32.gmra.mrb[0].mxu0 %v2047
    %v2117 = vpop.f32.mrb[0].mxu0
    %v2118 = vadd.f32 0.0, %v2117
    %v2119 = vpop.f32.mrb[0].mxu0
    %2120 = vdwg.mxu0
    %2121 = vrot.lane.b32.xlu0 %v1884, 96
    %v2122 = vpop.permute.xlu0 %2121
    %v2123 = vsel %vm134, %v1884, 0
    %v2125 = vsel %vm134, %v2122, 0
    %2127 = vmatprep.subr.mxu0 0.0
    %2128 = vmatpush1.xpose.msra.mxu0 %v2125
    %2129 = vmatprep.subr.mxu0 0.0
    %2130 = vmatpush1.xpose.msra.mxu0 0.0
    %2131 = vmatprep.subr.mxu0 0.0
    %2132 = vmatpush1.xpose.msra.mxu0 0.0
    %2133 = vmatprep.subr.mxu0 0.0
    %2134 = vmatpush1.xpose.msra.mxu0 0.0
    %2135 = vmatprep.subr.mxu0 0.0
    %2136 = vmatpush1.xpose.msra.mxu0 0.0
    %2137 = vmatprep.subr.mxu0 0.0
    %2138 = vmatpush1.xpose.msra.mxu0 0.0
    %2139 = vmatprep.subr.mxu0 0.0
    %2140 = vmatpush1.xpose.msra.mxu0 0.0
    %2141 = vmatprep.subr.mxu0 0.0
    %2142 = vmatpush1.xpose.msra.mxu0 0.0
    %2143 = vmatprep.subr.mxu0 0.0
    %2144 = vmatpush1.xpose.msra.mxu0 0.0
    %2145 = vmatprep.subr.mxu0 0.0
    %2146 = vmatpush1.xpose.msra.mxu0 0.0
    %2147 = vmatprep.subr.mxu0 0.0
    %2148 = vmatpush1.xpose.msra.mxu0 0.0
    %2149 = vmatprep.subr.mxu0 0.0
    %2150 = vmatpush1.xpose.msra.mxu0 0.0
    %2151 = vmatprep.subr.mxu0 0.0
    %2152 = vmatpush1.xpose.msra.mxu0 0.0
    %2153 = vmatprep.subr.mxu0 0.0
    %2154 = vmatpush1.xpose.msra.mxu0 0.0
    %2155 = vmatprep.subr.mxu0 0.0
    %2156 = vmatpush1.xpose.msra.mxu0 0.0
    %2157 = vmatprep.subr.mxu0 0.0
    %2158 = vmatpush1.xpose.msra.mxu0 0.0
    %2159 = vmatprep.subr.mxu0 0.0
    %2160 = vmatpush1.xpose.msra.mxu0 0.0
    %2161 = vmatprep.subr.mxu0 0.0
    %2162 = vmatpush1.xpose.msra.mxu0 0.0
    %2163 = vmatprep.subr.mxu0 0.0
    %2164 = vmatpush1.xpose.msra.mxu0 0.0
    %2165 = vmatprep.subr.mxu0 0.0
    %2166 = vmatpush1.xpose.msra.mxu0 0.0
    %2167 = vmatprep.subr.mxu0 0.0
    %2168 = vmatpush1.xpose.msra.mxu0 0.0
    %2169 = vmatprep.subr.mxu0 0.0
    %2170 = vmatpush1.xpose.msra.mxu0 0.0
    %2171 = vmatprep.subr.mxu0 0.0
    %2172 = vmatpush1.xpose.msra.mxu0 0.0
    %2173 = vmatprep.subr.mxu0 0.0
    %2174 = vmatpush1.xpose.msra.mxu0 0.0
    %2175 = vmatprep.subr.mxu0 0.0
    %2176 = vmatpush1.xpose.msra.mxu0 0.0
    %2177 = vmatprep.subr.mxu0 0.0
    %2178 = vmatpush1.xpose.msra.mxu0 0.0
    %2179 = vmatprep.subr.mxu0 0.0
    %2180 = vmatpush1.xpose.msra.mxu0 0.0
    %2181 = vmatprep.subr.mxu0 0.0
    %2182 = vmatpush1.xpose.msra.mxu0 0.0
    %2183 = vmatprep.subr.mxu0 0.0
    %2184 = vmatpush1.xpose.msra.mxu0 0.0
    %2185 = vmatprep.subr.mxu0 0.0
    %2186 = vmatpush1.xpose.msra.mxu0 0.0
    %2187 = vmatprep.subr.mxu0 0.0
    %2188 = vmatpush1.xpose.msra.mxu0 0.0
    %2189 = vmatprep.subr.mxu0 0.0
    %2190 = vmatpush1.xpose.msra.mxu0 0.0
    %2191 = vmatprep.mubr.f32.mxu0 0.0
    %2192 = vmatmul.mubr.f32.gmra.mrb[0].mxu0 %v2123
    %v2193 = vpop.f32.mrb[0].mxu0
    %v2194 = vadd.f32 0.0, %v2193
    %v2195 = vpop.f32.mrb[0].mxu0
    %2196 = vdwg.mxu0
    %2197 = vrot.lane.b32.xlu0 %v1886, 96
    %v2198 = vpop.permute.xlu0 %2197
    %v2199 = vsel %vm134, %v1886, 0
    %v2201 = vsel %vm134, %v2198, 0
    %2203 = vmatprep.subr.mxu0 0.0
    %2204 = vmatpush1.xpose.msra.mxu0 %v2201
    %2205 = vmatprep.subr.mxu0 0.0
    %2206 = vmatpush1.xpose.msra.mxu0 0.0
    %2207 = vmatprep.subr.mxu0 0.0
    %2208 = vmatpush1.xpose.msra.mxu0 0.0
    %2209 = vmatprep.subr.mxu0 0.0
    %2210 = vmatpush1.xpose.msra.mxu0 0.0
    %2211 = vmatprep.subr.mxu0 0.0
    %2212 = vmatpush1.xpose.msra.mxu0 0.0
    %2213 = vmatprep.subr.mxu0 0.0
    %2214 = vmatpush1.xpose.msra.mxu0 0.0
    %2215 = vmatprep.subr.mxu0 0.0
    %2216 = vmatpush1.xpose.msra.mxu0 0.0
    %2217 = vmatprep.subr.mxu0 0.0
    %2218 = vmatpush1.xpose.msra.mxu0 0.0
    %2219 = vmatprep.subr.mxu0 0.0
    %2220 = vmatpush1.xpose.msra.mxu0 0.0
    %2221 = vmatprep.subr.mxu0 0.0
    %2222 = vmatpush1.xpose.msra.mxu0 0.0
    %2223 = vmatprep.subr.mxu0 0.0
    %2224 = vmatpush1.xpose.msra.mxu0 0.0
    %2225 = vmatprep.subr.mxu0 0.0
    %2226 = vmatpush1.xpose.msra.mxu0 0.0
    %2227 = vmatprep.subr.mxu0 0.0
    %2228 = vmatpush1.xpose.msra.mxu0 0.0
    %2229 = vmatprep.subr.mxu0 0.0
    %2230 = vmatpush1.xpose.msra.mxu0 0.0
    %2231 = vmatprep.subr.mxu0 0.0
    %2232 = vmatpush1.xpose.msra.mxu0 0.0
    %2233 = vmatprep.subr.mxu0 0.0
    %2234 = vmatpush1.xpose.msra.mxu0 0.0
    %2235 = vmatprep.subr.mxu0 0.0
    %2236 = vmatpush1.xpose.msra.mxu0 0.0
    %2237 = vmatprep.subr.mxu0 0.0
    %2238 = vmatpush1.xpose.msra.mxu0 0.0
    %2239 = vmatprep.subr.mxu0 0.0
    %2240 = vmatpush1.xpose.msra.mxu0 0.0
    %2241 = vmatprep.subr.mxu0 0.0
    %2242 = vmatpush1.xpose.msra.mxu0 0.0
    %2243 = vmatprep.subr.mxu0 0.0
    %2244 = vmatpush1.xpose.msra.mxu0 0.0
    %2245 = vmatprep.subr.mxu0 0.0
    %2246 = vmatpush1.xpose.msra.mxu0 0.0
    %2247 = vmatprep.subr.mxu0 0.0
    %2248 = vmatpush1.xpose.msra.mxu0 0.0
    %2249 = vmatprep.subr.mxu0 0.0
    %2250 = vmatpush1.xpose.msra.mxu0 0.0
    %2251 = vmatprep.subr.mxu0 0.0
    %2252 = vmatpush1.xpose.msra.mxu0 0.0
    %2253 = vmatprep.subr.mxu0 0.0
    %2254 = vmatpush1.xpose.msra.mxu0 0.0
    %2255 = vmatprep.subr.mxu0 0.0
    %2256 = vmatpush1.xpose.msra.mxu0 0.0
    %2257 = vmatprep.subr.mxu0 0.0
    %2258 = vmatpush1.xpose.msra.mxu0 0.0
    %2259 = vmatprep.subr.mxu0 0.0
    %2260 = vmatpush1.xpose.msra.mxu0 0.0
    %2261 = vmatprep.subr.mxu0 0.0
    %2262 = vmatpush1.xpose.msra.mxu0 0.0
    %2263 = vmatprep.subr.mxu0 0.0
    %2264 = vmatpush1.xpose.msra.mxu0 0.0
    %2265 = vmatprep.subr.mxu0 0.0
    %2266 = vmatpush1.xpose.msra.mxu0 0.0
    %2267 = vmatprep.mubr.f32.mxu0 0.0
    %2268 = vmatmul.mubr.f32.gmra.mrb[0].mxu0 %v2199
    %v2269 = vpop.f32.mrb[0].mxu0
    %v2270 = vadd.f32 0.0, %v2269
    %v2271 = vpop.f32.mrb[0].mxu0
    %2272 = vdwg.mxu0
    %2273 = vrot.lane.b32.xlu0 %v1888, 96
    %v2274 = vpop.permute.xlu0 %2273
    %v2275 = vsel %vm134, %v1888, 0
    %v2277 = vsel %vm134, %v2274, 0
    %2279 = vmatprep.subr.mxu0 0.0
    %2280 = vmatpush1.xpose.msra.mxu0 %v2277
    %2281 = vmatprep.subr.mxu0 0.0
    %2282 = vmatpush1.xpose.msra.mxu0 0.0
    %2283 = vmatprep.subr.mxu0 0.0
    %2284 = vmatpush1.xpose.msra.mxu0 0.0
    %2285 = vmatprep.subr.mxu0 0.0
    %2286 = vmatpush1.xpose.msra.mxu0 0.0
    %2287 = vmatprep.subr.mxu0 0.0
    %2288 = vmatpush1.xpose.msra.mxu0 0.0
    %2289 = vmatprep.subr.mxu0 0.0
    %2290 = vmatpush1.xpose.msra.mxu0 0.0
    %2291 = vmatprep.subr.mxu0 0.0
    %2292 = vmatpush1.xpose.msra.mxu0 0.0
    %2293 = vmatprep.subr.mxu0 0.0
    %2294 = vmatpush1.xpose.msra.mxu0 0.0
    %2295 = vmatprep.subr.mxu0 0.0
    %2296 = vmatpush1.xpose.msra.mxu0 0.0
    %2297 = vmatprep.subr.mxu0 0.0
    %2298 = vmatpush1.xpose.msra.mxu0 0.0
    %2299 = vmatprep.subr.mxu0 0.0
    %2300 = vmatpush1.xpose.msra.mxu0 0.0
    %2301 = vmatprep.subr.mxu0 0.0
    %2302 = vmatpush1.xpose.msra.mxu0 0.0
    %2303 = vmatprep.subr.mxu0 0.0
    %2304 = vmatpush1.xpose.msra.mxu0 0.0
    %2305 = vmatprep.subr.mxu0 0.0
    %2306 = vmatpush1.xpose.msra.mxu0 0.0
    %2307 = vmatprep.subr.mxu0 0.0
    %2308 = vmatpush1.xpose.msra.mxu0 0.0
    %2309 = vmatprep.subr.mxu0 0.0
    %2310 = vmatpush1.xpose.msra.mxu0 0.0
    %2311 = vmatprep.subr.mxu0 0.0
    %2312 = vmatpush1.xpose.msra.mxu0 0.0
    %2313 = vmatprep.subr.mxu0 0.0
    %2314 = vmatpush1.xpose.msra.mxu0 0.0
    %2315 = vmatprep.subr.mxu0 0.0
    %2316 = vmatpush1.xpose.msra.mxu0 0.0
    %2317 = vmatprep.subr.mxu0 0.0
    %2318 = vmatpush1.xpose.msra.mxu0 0.0
    %2319 = vmatprep.subr.mxu0 0.0
    %2320 = vmatpush1.xpose.msra.mxu0 0.0
    %2321 = vmatprep.subr.mxu0 0.0
    %2322 = vmatpush1.xpose.msra.mxu0 0.0
    %2323 = vmatprep.subr.mxu0 0.0
    %2324 = vmatpush1.xpose.msra.mxu0 0.0
    %2325 = vmatprep.subr.mxu0 0.0
    %2326 = vmatpush1.xpose.msra.mxu0 0.0
    %2327 = vmatprep.subr.mxu0 0.0
    %2328 = vmatpush1.xpose.msra.mxu0 0.0
    %2329 = vmatprep.subr.mxu0 0.0
    %2330 = vmatpush1.xpose.msra.mxu0 0.0
    %2331 = vmatprep.subr.mxu0 0.0
    %2332 = vmatpush1.xpose.msra.mxu0 0.0
    %2333 = vmatprep.subr.mxu0 0.0
    %2334 = vmatpush1.xpose.msra.mxu0 0.0
    %2335 = vmatprep.subr.mxu0 0.0
    %2336 = vmatpush1.xpose.msra.mxu0 0.0
    %2337 = vmatprep.subr.mxu0 0.0
    %2338 = vmatpush1.xpose.msra.mxu0 0.0
    %2339 = vmatprep.subr.mxu0 0.0
    %2340 = vmatpush1.xpose.msra.mxu0 0.0
    %2341 = vmatprep.subr.mxu0 0.0
    %2342 = vmatpush1.xpose.msra.mxu0 0.0
    %2343 = vmatprep.mubr.f32.mxu0 0.0
    %2344 = vmatmul.mubr.f32.gmra.mrb[0].mxu0 %v2275
    %v2345 = vpop.f32.mrb[0].mxu0
    %v2346 = vadd.f32 0.0, %v2345
    %v2347 = vpop.f32.mrb[0].mxu0
    %2348 = vdwg.mxu0
    %2349 = vrot.lane.b32.xlu0 %v1890, 96
    %v2350 = vpop.permute.xlu0 %2349
    %v2351 = vsel %vm134, %v1890, 0
    %v2353 = vsel %vm134, %v2350, 0
    %2355 = vmatprep.subr.mxu0 0.0
    %2356 = vmatpush1.xpose.msra.mxu0 %v2353
    %2357 = vmatprep.subr.mxu0 0.0
    %2358 = vmatpush1.xpose.msra.mxu0 0.0
    %2359 = vmatprep.subr.mxu0 0.0
    %2360 = vmatpush1.xpose.msra.mxu0 0.0
    %2361 = vmatprep.subr.mxu0 0.0
    %2362 = vmatpush1.xpose.msra.mxu0 0.0
    %2363 = vmatprep.subr.mxu0 0.0
    %2364 = vmatpush1.xpose.msra.mxu0 0.0
    %2365 = vmatprep.subr.mxu0 0.0
    %2366 = vmatpush1.xpose.msra.mxu0 0.0
    %2367 = vmatprep.subr.mxu0 0.0
    %2368 = vmatpush1.xpose.msra.mxu0 0.0
    %2369 = vmatprep.subr.mxu0 0.0
    %2370 = vmatpush1.xpose.msra.mxu0 0.0
    %2371 = vmatprep.subr.mxu0 0.0
    %2372 = vmatpush1.xpose.msra.mxu0 0.0
    %2373 = vmatprep.subr.mxu0 0.0
    %2374 = vmatpush1.xpose.msra.mxu0 0.0
    %2375 = vmatprep.subr.mxu0 0.0
    %2376 = vmatpush1.xpose.msra.mxu0 0.0
    %2377 = vmatprep.subr.mxu0 0.0
    %2378 = vmatpush1.xpose.msra.mxu0 0.0
    %2379 = vmatprep.subr.mxu0 0.0
    %2380 = vmatpush1.xpose.msra.mxu0 0.0
    %2381 = vmatprep.subr.mxu0 0.0
    %2382 = vmatpush1.xpose.msra.mxu0 0.0
    %2383 = vmatprep.subr.mxu0 0.0
    %2384 = vmatpush1.xpose.msra.mxu0 0.0
    %2385 = vmatprep.subr.mxu0 0.0
    %2386 = vmatpush1.xpose.msra.mxu0 0.0
    %2387 = vmatprep.subr.mxu0 0.0
    %2388 = vmatpush1.xpose.msra.mxu0 0.0
    %2389 = vmatprep.subr.mxu0 0.0
    %2390 = vmatpush1.xpose.msra.mxu0 0.0
    %2391 = vmatprep.subr.mxu0 0.0
    %2392 = vmatpush1.xpose.msra.mxu0 0.0
    %2393 = vmatprep.subr.mxu0 0.0
    %2394 = vmatpush1.xpose.msra.mxu0 0.0
    %2395 = vmatprep.subr.mxu0 0.0
    %2396 = vmatpush1.xpose.msra.mxu0 0.0
    %2397 = vmatprep.subr.mxu0 0.0
    %2398 = vmatpush1.xpose.msra.mxu0 0.0
    %2399 = vmatprep.subr.mxu0 0.0
    %2400 = vmatpush1.xpose.msra.mxu0 0.0
    %2401 = vmatprep.subr.mxu0 0.0
    %2402 = vmatpush1.xpose.msra.mxu0 0.0
    %2403 = vmatprep.subr.mxu0 0.0
    %2404 = vmatpush1.xpose.msra.mxu0 0.0
    %2405 = vmatprep.subr.mxu0 0.0
    %2406 = vmatpush1.xpose.msra.mxu0 0.0
    %2407 = vmatprep.subr.mxu0 0.0
    %2408 = vmatpush1.xpose.msra.mxu0 0.0
    %2409 = vmatprep.subr.mxu0 0.0
    %2410 = vmatpush1.xpose.msra.mxu0 0.0
    %2411 = vmatprep.subr.mxu0 0.0
    %2412 = vmatpush1.xpose.msra.mxu0 0.0
    %2413 = vmatprep.subr.mxu0 0.0
    %2414 = vmatpush1.xpose.msra.mxu0 0.0
    %2415 = vmatprep.subr.mxu0 0.0
    %2416 = vmatpush1.xpose.msra.mxu0 0.0
    %2417 = vmatprep.subr.mxu0 0.0
    %2418 = vmatpush1.xpose.msra.mxu0 0.0
    %2419 = vmatprep.mubr.f32.mxu0 0.0
    %2420 = vmatmul.mubr.f32.gmra.mrb[0].mxu0 %v2351
    %v2421 = vpop.f32.mrb[0].mxu0
    %v2422 = vadd.f32 0.0, %v2421
    %v2423 = vpop.f32.mrb[0].mxu0
    %2424 = vdwg.mxu0
    %2425 = vrot.lane.b32.xlu0 %v1892, 96
    %v2426 = vpop.permute.xlu0 %2425
    %v2427 = vsel %vm134, %v1892, 0
    %v2429 = vsel %vm134, %v2426, 0
    %2431 = vmatprep.subr.mxu0 0.0
    %2432 = vmatpush1.xpose.msra.mxu0 %v2429
    %2433 = vmatprep.subr.mxu0 0.0
    %2434 = vmatpush1.xpose.msra.mxu0 0.0
    %2435 = vmatprep.subr.mxu0 0.0
    %2436 = vmatpush1.xpose.msra.mxu0 0.0
    %2437 = vmatprep.subr.mxu0 0.0
    %2438 = vmatpush1.xpose.msra.mxu0 0.0
    %2439 = vmatprep.subr.mxu0 0.0
    %2440 = vmatpush1.xpose.msra.mxu0 0.0
    %2441 = vmatprep.subr.mxu0 0.0
    %2442 = vmatpush1.xpose.msra.mxu0 0.0
    %2443 = vmatprep.subr.mxu0 0.0
    %2444 = vmatpush1.xpose.msra.mxu0 0.0
    %2445 = vmatprep.subr.mxu0 0.0
    %2446 = vmatpush1.xpose.msra.mxu0 0.0
    %2447 = vmatprep.subr.mxu0 0.0
    %2448 = vmatpush1.xpose.msra.mxu0 0.0
    %2449 = vmatprep.subr.mxu0 0.0
    %2450 = vmatpush1.xpose.msra.mxu0 0.0
    %2451 = vmatprep.subr.mxu0 0.0
    %2452 = vmatpush1.xpose.msra.mxu0 0.0
    %2453 = vmatprep.subr.mxu0 0.0
    %2454 = vmatpush1.xpose.msra.mxu0 0.0
    %2455 = vmatprep.subr.mxu0 0.0
    %2456 = vmatpush1.xpose.msra.mxu0 0.0
    %2457 = vmatprep.subr.mxu0 0.0
    %2458 = vmatpush1.xpose.msra.mxu0 0.0
    %2459 = vmatprep.subr.mxu0 0.0
    %2460 = vmatpush1.xpose.msra.mxu0 0.0
    %2461 = vmatprep.subr.mxu0 0.0
    %2462 = vmatpush1.xpose.msra.mxu0 0.0
    %2463 = vmatprep.subr.mxu0 0.0
    %2464 = vmatpush1.xpose.msra.mxu0 0.0
    %2465 = vmatprep.subr.mxu0 0.0
    %2466 = vmatpush1.xpose.msra.mxu0 0.0
    %2467 = vmatprep.subr.mxu0 0.0
    %2468 = vmatpush1.xpose.msra.mxu0 0.0
    %2469 = vmatprep.subr.mxu0 0.0
    %2470 = vmatpush1.xpose.msra.mxu0 0.0
    %2471 = vmatprep.subr.mxu0 0.0
    %2472 = vmatpush1.xpose.msra.mxu0 0.0
    %2473 = vmatprep.subr.mxu0 0.0
    %2474 = vmatpush1.xpose.msra.mxu0 0.0
    %2475 = vmatprep.subr.mxu0 0.0
    %2476 = vmatpush1.xpose.msra.mxu0 0.0
    %2477 = vmatprep.subr.mxu0 0.0
    %2478 = vmatpush1.xpose.msra.mxu0 0.0
    %2479 = vmatprep.subr.mxu0 0.0
    %2480 = vmatpush1.xpose.msra.mxu0 0.0
    %2481 = vmatprep.subr.mxu0 0.0
    %2482 = vmatpush1.xpose.msra.mxu0 0.0
    %2483 = vmatprep.subr.mxu0 0.0
    %2484 = vmatpush1.xpose.msra.mxu0 0.0
    %2485 = vmatprep.subr.mxu0 0.0
    %2486 = vmatpush1.xpose.msra.mxu0 0.0
    %2487 = vmatprep.subr.mxu0 0.0
    %2488 = vmatpush1.xpose.msra.mxu0 0.0
    %2489 = vmatprep.subr.mxu0 0.0
    %2490 = vmatpush1.xpose.msra.mxu0 0.0
    %2491 = vmatprep.subr.mxu0 0.0
    %2492 = vmatpush1.xpose.msra.mxu0 0.0
    %2493 = vmatprep.subr.mxu0 0.0
    %2494 = vmatpush1.xpose.msra.mxu0 0.0
    %2495 = vmatprep.mubr.f32.mxu0 0.0
    %2496 = vmatmul.mubr.f32.gmra.mrb[0].mxu0 %v2427
    %v2497 = vpop.f32.mrb[0].mxu0
    %v2498 = vadd.f32 0.0, %v2497
    %v2499 = vpop.f32.mrb[0].mxu0
    %2500 = vdwg.mxu0
    %v2501 = vsel %vm134, %v1966, -inf
    %2502 = vmax.xlane.f32.xlu0 %v2501
    %v2503 = vpop.xlane.xlu0 %2502
    %v2504 = vsel %vm134, %v2042, -inf
    %2505 = vmax.xlane.f32.xlu0 %v2504
    %v2506 = vpop.xlane.xlu0 %2505
    %v2507 = vsel %vm134, %v2118, -inf
    %2508 = vmax.xlane.f32.xlu0 %v2507
    %v2509 = vpop.xlane.xlu0 %2508
    %v2510 = vsel %vm134, %v2194, -inf
    %2511 = vmax.xlane.f32.xlu0 %v2510
    %v2512 = vpop.xlane.xlu0 %2511
    %v2513 = vsel %vm134, %v2270, -inf
    %2514 = vmax.xlane.f32.xlu0 %v2513
    %v2515 = vpop.xlane.xlu0 %2514
    %v2516 = vsel %vm134, %v2346, -inf
    %2517 = vmax.xlane.f32.xlu0 %v2516
    %v2518 = vpop.xlane.xlu0 %2517
    %v2519 = vsel %vm134, %v2422, -inf
    %2520 = vmax.xlane.f32.xlu0 %v2519
    %v2521 = vpop.xlane.xlu0 %2520
    %v2522 = vsel %vm134, %v2498, -inf
    %2523 = vmax.xlane.f32.xlu0 %v2522
    %v2524 = vpop.xlane.xlu0 %2523
    %v2525 = vsub.f32 %v1966, %v2503
    %v2526 = vsub.f32 %v2042, %v2506
    %v2527 = vsub.f32 %v2118, %v2509
    %v2528 = vsub.f32 %v2194, %v2512
    %v2529 = vsub.f32 %v2270, %v2515
    %v2530 = vsub.f32 %v2346, %v2518
    %v2531 = vsub.f32 %v2422, %v2521
    %v2532 = vsub.f32 %v2498, %v2524
    %v2533 = vmul.f32 %v2525, 1.442695
    %v2534 = vpow.pop %v2533
    %v2535 = vmul.f32 %v2526, 1.442695
    %v2536 = vpow.pop %v2535
    %v2537 = vmul.f32 %v2527, 1.442695
    %v2538 = vpow.pop %v2537
    %v2539 = vmul.f32 %v2528, 1.442695
    %v2540 = vpow.pop %v2539
    %v2541 = vmul.f32 %v2529, 1.442695
    %v2542 = vpow.pop %v2541
    %v2543 = vmul.f32 %v2530, 1.442695
    %v2544 = vpow.pop %v2543
    %v2545 = vmul.f32 %v2531, 1.442695
    %v2546 = vpow.pop %v2545
    %v2547 = vmul.f32 %v2532, 1.442695
    %v2548 = vpow.pop %v2547
    %v2549 = vsel %vm134, %v2534, 0.0
    %2550 = vadd.xlane.f32.xlu0 %v2549
    %v2551 = vpop.xlane.xlu0 %2550
    %v2552 = vsel %vm134, %v2536, 0.0
    %2553 = vadd.xlane.f32.xlu0 %v2552
    %v2554 = vpop.xlane.xlu0 %2553
    %v2555 = vsel %vm134, %v2538, 0.0
    %2556 = vadd.xlane.f32.xlu0 %v2555
    %v2557 = vpop.xlane.xlu0 %2556
    %v2558 = vsel %vm134, %v2540, 0.0
    %2559 = vadd.xlane.f32.xlu0 %v2558
    %v2560 = vpop.xlane.xlu0 %2559
    %v2561 = vsel %vm134, %v2542, 0.0
    %2562 = vadd.xlane.f32.xlu0 %v2561
    %v2563 = vpop.xlane.xlu0 %2562
    %v2564 = vsel %vm134, %v2544, 0.0
    %2565 = vadd.xlane.f32.xlu0 %v2564
    %v2566 = vpop.xlane.xlu0 %2565
    %v2567 = vsel %vm134, %v2546, 0.0
    %2568 = vadd.xlane.f32.xlu0 %v2567
    %v2569 = vpop.xlane.xlu0 %2568
    %v2570 = vsel %vm134, %v2548, 0.0
    %2571 = vadd.xlane.f32.xlu0 %v2570
    %v2572 = vpop.xlane.xlu0 %2571
    %v2573 = vrcp.pop %v2551
    %v2574 = vrcp.pop %v2554
    %v2575 = vrcp.pop %v2557
    %v2576 = vrcp.pop %v2560
    %v2577 = vrcp.pop %v2563
    %v2578 = vrcp.pop %v2566
    %v2579 = vrcp.pop %v2569
    %v2580 = vrcp.pop %v2572
    %v2581 = vmul.f32 %v2534, %v2573
    %v2582 = vmul.f32 %v2536, %v2574
    %v2583 = vmul.f32 %v2538, %v2575
    %v2584 = vmul.f32 %v2540, %v2576
    %v2585 = vmul.f32 %v2542, %v2577
    %v2586 = vmul.f32 %v2544, %v2578
    %v2587 = vmul.f32 %v2546, %v2579
    %v2588 = vmul.f32 %v2548, %v2580
    %2589 = vrot.lane.b32.xlu0 %v1873, 64
    %v2590 = vpop.permute.xlu0 %2589
    %v2593 = vsel %vm134, %v2581, 0
    %2595 = vmatprep.subr.mxu0 0.0
    %2596 = vmatpush1.msra.mxu0 %v2590
    %2597 = vmatprep.subr.mxu0 0.0
    %2598 = vmatpush1.msra.mxu0 0.0
    %2599 = vmatprep.subr.mxu0 0.0
    %2600 = vmatpush1.msra.mxu0 0.0
    %2601 = vmatprep.subr.mxu0 0.0
    %2602 = vmatpush1.msra.mxu0 0.0
    %2603 = vmatprep.subr.mxu0 0.0
    %2604 = vmatpush1.msra.mxu0 0.0
    %2605 = vmatprep.subr.mxu0 0.0
    %2606 = vmatpush1.msra.mxu0 0.0
    %2607 = vmatprep.subr.mxu0 0.0
    %2608 = vmatpush1.msra.mxu0 0.0
    %2609 = vmatprep.subr.mxu0 0.0
    %2610 = vmatpush1.msra.mxu0 0.0
    %2611 = vmatprep.subr.mxu0 0.0
    %2612 = vmatpush1.msra.mxu0 0.0
    %2613 = vmatprep.subr.mxu0 0.0
    %2614 = vmatpush1.msra.mxu0 0.0
    %2615 = vmatprep.subr.mxu0 0.0
    %2616 = vmatpush1.msra.mxu0 0.0
    %2617 = vmatprep.subr.mxu0 0.0
    %2618 = vmatpush1.msra.mxu0 0.0
    %2619 = vmatprep.subr.mxu0 0.0
    %2620 = vmatpush1.msra.mxu0 0.0
    %2621 = vmatprep.subr.mxu0 0.0
    %2622 = vmatpush1.msra.mxu0 0.0
    %2623 = vmatprep.subr.mxu0 0.0
    %2624 = vmatpush1.msra.mxu0 0.0
    %2625 = vmatprep.subr.mxu0 0.0
    %2626 = vmatpush1.msra.mxu0 0.0
    %2627 = vmatprep.subr.mxu0 0.0
    %2628 = vmatpush1.msra.mxu0 0.0
    %2629 = vmatprep.subr.mxu0 0.0
    %2630 = vmatpush1.msra.mxu0 0.0
    %2631 = vmatprep.subr.mxu0 0.0
    %2632 = vmatpush1.msra.mxu0 0.0
    %2633 = vmatprep.subr.mxu0 0.0
    %2634 = vmatpush1.msra.mxu0 0.0
    %2635 = vmatprep.subr.mxu0 0.0
    %2636 = vmatpush1.msra.mxu0 0.0
    %2637 = vmatprep.subr.mxu0 0.0
    %2638 = vmatpush1.msra.mxu0 0.0
    %2639 = vmatprep.subr.mxu0 0.0
    %2640 = vmatpush1.msra.mxu0 0.0
    %2641 = vmatprep.subr.mxu0 0.0
    %2642 = vmatpush1.msra.mxu0 0.0
    %2643 = vmatprep.subr.mxu0 0.0
    %2644 = vmatpush1.msra.mxu0 0.0
    %2645 = vmatprep.subr.mxu0 0.0
    %2646 = vmatpush1.msra.mxu0 0.0
    %2647 = vmatprep.subr.mxu0 0.0
    %2648 = vmatpush1.msra.mxu0 0.0
    %2649 = vmatprep.subr.mxu0 0.0
    %2650 = vmatpush1.msra.mxu0 0.0
    %2651 = vmatprep.subr.mxu0 0.0
    %2652 = vmatpush1.msra.mxu0 0.0
    %2653 = vmatprep.subr.mxu0 0.0
    %2654 = vmatpush1.msra.mxu0 0.0
    %2655 = vmatprep.subr.mxu0 0.0
    %2656 = vmatpush1.msra.mxu0 0.0
    %2657 = vmatprep.subr.mxu0 0.0
    %2658 = vmatpush1.msra.mxu0 0.0
    %2659 = vmatprep.mubr.f32.mxu0 0.0
    %2660 = vmatmul.mubr.f32.gmra.mrb[0].mxu0 %v2593
    %v2661 = vpop.f32.mrb[0].mxu0
    %v2662 = vadd.f32 0.0, %v2661
    %v2663 = vpop.f32.mrb[0].mxu0
    %2664 = vdwg.mxu0
    %2665 = vrot.lane.b32.xlu0 %v1876, 64
    %v2666 = vpop.permute.xlu0 %2665
    %v2669 = vsel %vm134, %v2582, 0
    %2671 = vmatprep.subr.mxu0 0.0
    %2672 = vmatpush1.msra.mxu0 %v2666
    %2673 = vmatprep.subr.mxu0 0.0
    %2674 = vmatpush1.msra.mxu0 0.0
    %2675 = vmatprep.subr.mxu0 0.0
    %2676 = vmatpush1.msra.mxu0 0.0
    %2677 = vmatprep.subr.mxu0 0.0
    %2678 = vmatpush1.msra.mxu0 0.0
    %2679 = vmatprep.subr.mxu0 0.0
    %2680 = vmatpush1.msra.mxu0 0.0
    %2681 = vmatprep.subr.mxu0 0.0
    %2682 = vmatpush1.msra.mxu0 0.0
    %2683 = vmatprep.subr.mxu0 0.0
    %2684 = vmatpush1.msra.mxu0 0.0
    %2685 = vmatprep.subr.mxu0 0.0
    %2686 = vmatpush1.msra.mxu0 0.0
    %2687 = vmatprep.subr.mxu0 0.0
    %2688 = vmatpush1.msra.mxu0 0.0
    %2689 = vmatprep.subr.mxu0 0.0
    %2690 = vmatpush1.msra.mxu0 0.0
    %2691 = vmatprep.subr.mxu0 0.0
    %2692 = vmatpush1.msra.mxu0 0.0
    %2693 = vmatprep.subr.mxu0 0.0
    %2694 = vmatpush1.msra.mxu0 0.0
    %2695 = vmatprep.subr.mxu0 0.0
    %2696 = vmatpush1.msra.mxu0 0.0
    %2697 = vmatprep.subr.mxu0 0.0
    %2698 = vmatpush1.msra.mxu0 0.0
    %2699 = vmatprep.subr.mxu0 0.0
    %2700 = vmatpush1.msra.mxu0 0.0
    %2701 = vmatprep.subr.mxu0 0.0
    %2702 = vmatpush1.msra.mxu0 0.0
    %2703 = vmatprep.subr.mxu0 0.0
    %2704 = vmatpush1.msra.mxu0 0.0
    %2705 = vmatprep.subr.mxu0 0.0
    %2706 = vmatpush1.msra.mxu0 0.0
    %2707 = vmatprep.subr.mxu0 0.0
    %2708 = vmatpush1.msra.mxu0 0.0
    %2709 = vmatprep.subr.mxu0 0.0
    %2710 = vmatpush1.msra.mxu0 0.0
    %2711 = vmatprep.subr.mxu0 0.0
    %2712 = vmatpush1.msra.mxu0 0.0
    %2713 = vmatprep.subr.mxu0 0.0
    %2714 = vmatpush1.msra.mxu0 0.0
    %2715 = vmatprep.subr.mxu0 0.0
    %2716 = vmatpush1.msra.mxu0 0.0
    %2717 = vmatprep.subr.mxu0 0.0
    %2718 = vmatpush1.msra.mxu0 0.0
    %2719 = vmatprep.subr.mxu0 0.0
    %2720 = vmatpush1.msra.mxu0 0.0
    %2721 = vmatprep.subr.mxu0 0.0
    %2722 = vmatpush1.msra.mxu0 0.0
    %2723 = vmatprep.subr.mxu0 0.0
    %2724 = vmatpush1.msra.mxu0 0.0
    %2725 = vmatprep.subr.mxu0 0.0
    %2726 = vmatpush1.msra.mxu0 0.0
    %2727 = vmatprep.subr.mxu0 0.0
    %2728 = vmatpush1.msra.mxu0 0.0
    %2729 = vmatprep.subr.mxu0 0.0
    %2730 = vmatpush1.msra.mxu0 0.0
    %2731 = vmatprep.subr.mxu0 0.0
    %2732 = vmatpush1.msra.mxu0 0.0
    %2733 = vmatprep.subr.mxu0 0.0
    %2734 = vmatpush1.msra.mxu0 0.0
    %2735 = vmatprep.mubr.f32.mxu0 0.0
    %2736 = vmatmul.mubr.f32.gmra.mrb[0].mxu0 %v2669
    %v2737 = vpop.f32.mrb[0].mxu0
    %v2738 = vadd.f32 0.0, %v2737
    %v2739 = vpop.f32.mrb[0].mxu0
    %2740 = vdwg.mxu0
    %2741 = vrot.lane.b32.xlu0 %v1882, 64
    %v2742 = vpop.permute.xlu0 %2741
    %v2745 = vsel %vm134, %v2583, 0
    %2747 = vmatprep.subr.mxu0 0.0
    %2748 = vmatpush1.msra.mxu0 %v2742
    %2749 = vmatprep.subr.mxu0 0.0
    %2750 = vmatpush1.msra.mxu0 0.0
    %2751 = vmatprep.subr.mxu0 0.0
    %2752 = vmatpush1.msra.mxu0 0.0
    %2753 = vmatprep.subr.mxu0 0.0
    %2754 = vmatpush1.msra.mxu0 0.0
    %2755 = vmatprep.subr.mxu0 0.0
    %2756 = vmatpush1.msra.mxu0 0.0
    %2757 = vmatprep.subr.mxu0 0.0
    %2758 = vmatpush1.msra.mxu0 0.0
    %2759 = vmatprep.subr.mxu0 0.0
    %2760 = vmatpush1.msra.mxu0 0.0
    %2761 = vmatprep.subr.mxu0 0.0
    %2762 = vmatpush1.msra.mxu0 0.0
    %2763 = vmatprep.subr.mxu0 0.0
    %2764 = vmatpush1.msra.mxu0 0.0
    %2765 = vmatprep.subr.mxu0 0.0
    %2766 = vmatpush1.msra.mxu0 0.0
    %2767 = vmatprep.subr.mxu0 0.0
    %2768 = vmatpush1.msra.mxu0 0.0
    %2769 = vmatprep.subr.mxu0 0.0
    %2770 = vmatpush1.msra.mxu0 0.0
    %2771 = vmatprep.subr.mxu0 0.0
    %2772 = vmatpush1.msra.mxu0 0.0
    %2773 = vmatprep.subr.mxu0 0.0
    %2774 = vmatpush1.msra.mxu0 0.0
    %2775 = vmatprep.subr.mxu0 0.0
    %2776 = vmatpush1.msra.mxu0 0.0
    %2777 = vmatprep.subr.mxu0 0.0
    %2778 = vmatpush1.msra.mxu0 0.0
    %2779 = vmatprep.subr.mxu0 0.0
    %2780 = vmatpush1.msra.mxu0 0.0
    %2781 = vmatprep.subr.mxu0 0.0
    %2782 = vmatpush1.msra.mxu0 0.0
    %2783 = vmatprep.subr.mxu0 0.0
    %2784 = vmatpush1.msra.mxu0 0.0
    %2785 = vmatprep.subr.mxu0 0.0
    %2786 = vmatpush1.msra.mxu0 0.0
    %2787 = vmatprep.subr.mxu0 0.0
    %2788 = vmatpush1.msra.mxu0 0.0
    %2789 = vmatprep.subr.mxu0 0.0
    %2790 = vmatpush1.msra.mxu0 0.0
    %2791 = vmatprep.subr.mxu0 0.0
    %2792 = vmatpush1.msra.mxu0 0.0
    %2793 = vmatprep.subr.mxu0 0.0
    %2794 = vmatpush1.msra.mxu0 0.0
    %2795 = vmatprep.subr.mxu0 0.0
    %2796 = vmatpush1.msra.mxu0 0.0
    %2797 = vmatprep.subr.mxu0 0.0
    %2798 = vmatpush1.msra.mxu0 0.0
    %2799 = vmatprep.subr.mxu0 0.0
    %2800 = vmatpush1.msra.mxu0 0.0
    %2801 = vmatprep.subr.mxu0 0.0
    %2802 = vmatpush1.msra.mxu0 0.0
    %2803 = vmatprep.subr.mxu0 0.0
    %2804 = vmatpush1.msra.mxu0 0.0
    %2805 = vmatprep.subr.mxu0 0.0
    %2806 = vmatpush1.msra.mxu0 0.0
    %2807 = vmatprep.subr.mxu0 0.0
    %2808 = vmatpush1.msra.mxu0 0.0
    %2809 = vmatprep.subr.mxu0 0.0
    %2810 = vmatpush1.msra.mxu0 0.0
    %2811 = vmatprep.mubr.f32.mxu0 0.0
    %2812 = vmatmul.mubr.f32.gmra.mrb[0].mxu0 %v2745
    %v2813 = vpop.f32.mrb[0].mxu0
    %v2814 = vadd.f32 0.0, %v2813
    %v2815 = vpop.f32.mrb[0].mxu0
    %2816 = vdwg.mxu0
    %2817 = vrot.lane.b32.xlu0 %v1884, 64
    %v2818 = vpop.permute.xlu0 %2817
    %v2821 = vsel %vm134, %v2584, 0
    %2823 = vmatprep.subr.mxu0 0.0
    %2824 = vmatpush1.msra.mxu0 %v2818
    %2825 = vmatprep.subr.mxu0 0.0
    %2826 = vmatpush1.msra.mxu0 0.0
    %2827 = vmatprep.subr.mxu0 0.0
    %2828 = vmatpush1.msra.mxu0 0.0
    %2829 = vmatprep.subr.mxu0 0.0
    %2830 = vmatpush1.msra.mxu0 0.0
    %2831 = vmatprep.subr.mxu0 0.0
    %2832 = vmatpush1.msra.mxu0 0.0
    %2833 = vmatprep.subr.mxu0 0.0
    %2834 = vmatpush1.msra.mxu0 0.0
    %2835 = vmatprep.subr.mxu0 0.0
    %2836 = vmatpush1.msra.mxu0 0.0
    %2837 = vmatprep.subr.mxu0 0.0
    %2838 = vmatpush1.msra.mxu0 0.0
    %2839 = vmatprep.subr.mxu0 0.0
    %2840 = vmatpush1.msra.mxu0 0.0
    %2841 = vmatprep.subr.mxu0 0.0
    %2842 = vmatpush1.msra.mxu0 0.0
    %2843 = vmatprep.subr.mxu0 0.0
    %2844 = vmatpush1.msra.mxu0 0.0
    %2845 = vmatprep.subr.mxu0 0.0
    %2846 = vmatpush1.msra.mxu0 0.0
    %2847 = vmatprep.subr.mxu0 0.0
    %2848 = vmatpush1.msra.mxu0 0.0
    %2849 = vmatprep.subr.mxu0 0.0
    %2850 = vmatpush1.msra.mxu0 0.0
    %2851 = vmatprep.subr.mxu0 0.0
    %2852 = vmatpush1.msra.mxu0 0.0
    %2853 = vmatprep.subr.mxu0 0.0
    %2854 = vmatpush1.msra.mxu0 0.0
    %2855 = vmatprep.subr.mxu0 0.0
    %2856 = vmatpush1.msra.mxu0 0.0
    %2857 = vmatprep.subr.mxu0 0.0
    %2858 = vmatpush1.msra.mxu0 0.0
    %2859 = vmatprep.subr.mxu0 0.0
    %2860 = vmatpush1.msra.mxu0 0.0
    %2861 = vmatprep.subr.mxu0 0.0
    %2862 = vmatpush1.msra.mxu0 0.0
    %2863 = vmatprep.subr.mxu0 0.0
    %2864 = vmatpush1.msra.mxu0 0.0
    %2865 = vmatprep.subr.mxu0 0.0
    %2866 = vmatpush1.msra.mxu0 0.0
    %2867 = vmatprep.subr.mxu0 0.0
    %2868 = vmatpush1.msra.mxu0 0.0
    %2869 = vmatprep.subr.mxu0 0.0
    %2870 = vmatpush1.msra.mxu0 0.0
    %2871 = vmatprep.subr.mxu0 0.0
    %2872 = vmatpush1.msra.mxu0 0.0
    %2873 = vmatprep.subr.mxu0 0.0
    %2874 = vmatpush1.msra.mxu0 0.0
    %2875 = vmatprep.subr.mxu0 0.0
    %2876 = vmatpush1.msra.mxu0 0.0
    %2877 = vmatprep.subr.mxu0 0.0
    %2878 = vmatpush1.msra.mxu0 0.0
    %2879 = vmatprep.subr.mxu0 0.0
    %2880 = vmatpush1.msra.mxu0 0.0
    %2881 = vmatprep.subr.mxu0 0.0
    %2882 = vmatpush1.msra.mxu0 0.0
    %2883 = vmatprep.subr.mxu0 0.0
    %2884 = vmatpush1.msra.mxu0 0.0
    %2885 = vmatprep.subr.mxu0 0.0
    %2886 = vmatpush1.msra.mxu0 0.0
    %2887 = vmatprep.mubr.f32.mxu0 0.0
    %2888 = vmatmul.mubr.f32.gmra.mrb[0].mxu0 %v2821
    %v2889 = vpop.f32.mrb[0].mxu0
    %v2890 = vadd.f32 0.0, %v2889
    %v2891 = vpop.f32.mrb[0].mxu0
    %2892 = vdwg.mxu0
    %2893 = vrot.lane.b32.xlu0 %v1886, 64
    %v2894 = vpop.permute.xlu0 %2893
    %v2897 = vsel %vm134, %v2585, 0
    %2899 = vmatprep.subr.mxu0 0.0
    %2900 = vmatpush1.msra.mxu0 %v2894
    %2901 = vmatprep.subr.mxu0 0.0
    %2902 = vmatpush1.msra.mxu0 0.0
    %2903 = vmatprep.subr.mxu0 0.0
    %2904 = vmatpush1.msra.mxu0 0.0
    %2905 = vmatprep.subr.mxu0 0.0
    %2906 = vmatpush1.msra.mxu0 0.0
    %2907 = vmatprep.subr.mxu0 0.0
    %2908 = vmatpush1.msra.mxu0 0.0
    %2909 = vmatprep.subr.mxu0 0.0
    %2910 = vmatpush1.msra.mxu0 0.0
    %2911 = vmatprep.subr.mxu0 0.0
    %2912 = vmatpush1.msra.mxu0 0.0
    %2913 = vmatprep.subr.mxu0 0.0
    %2914 = vmatpush1.msra.mxu0 0.0
    %2915 = vmatprep.subr.mxu0 0.0
    %2916 = vmatpush1.msra.mxu0 0.0
    %2917 = vmatprep.subr.mxu0 0.0
    %2918 = vmatpush1.msra.mxu0 0.0
    %2919 = vmatprep.subr.mxu0 0.0
    %2920 = vmatpush1.msra.mxu0 0.0
    %2921 = vmatprep.subr.mxu0 0.0
    %2922 = vmatpush1.msra.mxu0 0.0
    %2923 = vmatprep.subr.mxu0 0.0
    %2924 = vmatpush1.msra.mxu0 0.0
    %2925 = vmatprep.subr.mxu0 0.0
    %2926 = vmatpush1.msra.mxu0 0.0
    %2927 = vmatprep.subr.mxu0 0.0
    %2928 = vmatpush1.msra.mxu0 0.0
    %2929 = vmatprep.subr.mxu0 0.0
    %2930 = vmatpush1.msra.mxu0 0.0
    %2931 = vmatprep.subr.mxu0 0.0
    %2932 = vmatpush1.msra.mxu0 0.0
    %2933 = vmatprep.subr.mxu0 0.0
    %2934 = vmatpush1.msra.mxu0 0.0
    %2935 = vmatprep.subr.mxu0 0.0
    %2936 = vmatpush1.msra.mxu0 0.0
    %2937 = vmatprep.subr.mxu0 0.0
    %2938 = vmatpush1.msra.mxu0 0.0
    %2939 = vmatprep.subr.mxu0 0.0
    %2940 = vmatpush1.msra.mxu0 0.0
    %2941 = vmatprep.subr.mxu0 0.0
    %2942 = vmatpush1.msra.mxu0 0.0
    %2943 = vmatprep.subr.mxu0 0.0
    %2944 = vmatpush1.msra.mxu0 0.0
    %2945 = vmatprep.subr.mxu0 0.0
    %2946 = vmatpush1.msra.mxu0 0.0
    %2947 = vmatprep.subr.mxu0 0.0
    %2948 = vmatpush1.msra.mxu0 0.0
    %2949 = vmatprep.subr.mxu0 0.0
    %2950 = vmatpush1.msra.mxu0 0.0
    %2951 = vmatprep.subr.mxu0 0.0
    %2952 = vmatpush1.msra.mxu0 0.0
    %2953 = vmatprep.subr.mxu0 0.0
    %2954 = vmatpush1.msra.mxu0 0.0
    %2955 = vmatprep.subr.mxu0 0.0
    %2956 = vmatpush1.msra.mxu0 0.0
    %2957 = vmatprep.subr.mxu0 0.0
    %2958 = vmatpush1.msra.mxu0 0.0
    %2959 = vmatprep.subr.mxu0 0.0
    %2960 = vmatpush1.msra.mxu0 0.0
    %2961 = vmatprep.subr.mxu0 0.0
    %2962 = vmatpush1.msra.mxu0 0.0
    %2963 = vmatprep.mubr.f32.mxu0 0.0
    %2964 = vmatmul.mubr.f32.gmra.mrb[0].mxu0 %v2897
    %v2965 = vpop.f32.mrb[0].mxu0
    %v2966 = vadd.f32 0.0, %v2965
    %v2967 = vpop.f32.mrb[0].mxu0
    %2968 = vdwg.mxu0
    %2969 = vrot.lane.b32.xlu0 %v1888, 64
    %v2970 = vpop.permute.xlu0 %2969
    %v2973 = vsel %vm134, %v2586, 0
    %2975 = vmatprep.subr.mxu0 0.0
    %2976 = vmatpush1.msra.mxu0 %v2970
    %2977 = vmatprep.subr.mxu0 0.0
    %2978 = vmatpush1.msra.mxu0 0.0
    %2979 = vmatprep.subr.mxu0 0.0
    %2980 = vmatpush1.msra.mxu0 0.0
    %2981 = vmatprep.subr.mxu0 0.0
    %2982 = vmatpush1.msra.mxu0 0.0
    %2983 = vmatprep.subr.mxu0 0.0
    %2984 = vmatpush1.msra.mxu0 0.0
    %2985 = vmatprep.subr.mxu0 0.0
    %2986 = vmatpush1.msra.mxu0 0.0
    %2987 = vmatprep.subr.mxu0 0.0
    %2988 = vmatpush1.msra.mxu0 0.0
    %2989 = vmatprep.subr.mxu0 0.0
    %2990 = vmatpush1.msra.mxu0 0.0
    %2991 = vmatprep.subr.mxu0 0.0
    %2992 = vmatpush1.msra.mxu0 0.0
    %2993 = vmatprep.subr.mxu0 0.0
    %2994 = vmatpush1.msra.mxu0 0.0
    %2995 = vmatprep.subr.mxu0 0.0
    %2996 = vmatpush1.msra.mxu0 0.0
    %2997 = vmatprep.subr.mxu0 0.0
    %2998 = vmatpush1.msra.mxu0 0.0
    %2999 = vmatprep.subr.mxu0 0.0
    %3000 = vmatpush1.msra.mxu0 0.0
    %3001 = vmatprep.subr.mxu0 0.0
    %3002 = vmatpush1.msra.mxu0 0.0
    %3003 = vmatprep.subr.mxu0 0.0
    %3004 = vmatpush1.msra.mxu0 0.0
    %3005 = vmatprep.subr.mxu0 0.0
    %3006 = vmatpush1.msra.mxu0 0.0
    %3007 = vmatprep.subr.mxu0 0.0
    %3008 = vmatpush1.msra.mxu0 0.0
    %3009 = vmatprep.subr.mxu0 0.0
    %3010 = vmatpush1.msra.mxu0 0.0
    %3011 = vmatprep.subr.mxu0 0.0
    %3012 = vmatpush1.msra.mxu0 0.0
    %3013 = vmatprep.subr.mxu0 0.0
    %3014 = vmatpush1.msra.mxu0 0.0
    %3015 = vmatprep.subr.mxu0 0.0
    %3016 = vmatpush1.msra.mxu0 0.0
    %3017 = vmatprep.subr.mxu0 0.0
    %3018 = vmatpush1.msra.mxu0 0.0
    %3019 = vmatprep.subr.mxu0 0.0
    %3020 = vmatpush1.msra.mxu0 0.0
    %3021 = vmatprep.subr.mxu0 0.0
    %3022 = vmatpush1.msra.mxu0 0.0
    %3023 = vmatprep.subr.mxu0 0.0
    %3024 = vmatpush1.msra.mxu0 0.0
    %3025 = vmatprep.subr.mxu0 0.0
    %3026 = vmatpush1.msra.mxu0 0.0
    %3027 = vmatprep.subr.mxu0 0.0
    %3028 = vmatpush1.msra.mxu0 0.0
    %3029 = vmatprep.subr.mxu0 0.0
    %3030 = vmatpush1.msra.mxu0 0.0
    %3031 = vmatprep.subr.mxu0 0.0
    %3032 = vmatpush1.msra.mxu0 0.0
    %3033 = vmatprep.subr.mxu0 0.0
    %3034 = vmatpush1.msra.mxu0 0.0
    %3035 = vmatprep.subr.mxu0 0.0
    %3036 = vmatpush1.msra.mxu0 0.0
    %3037 = vmatprep.subr.mxu0 0.0
    %3038 = vmatpush1.msra.mxu0 0.0
    %3039 = vmatprep.mubr.f32.mxu0 0.0
    %3040 = vmatmul.mubr.f32.gmra.mrb[0].mxu0 %v2973
    %v3041 = vpop.f32.mrb[0].mxu0
    %v3042 = vadd.f32 0.0, %v3041
    %v3043 = vpop.f32.mrb[0].mxu0
    %3044 = vdwg.mxu0
    %3045 = vrot.lane.b32.xlu0 %v1890, 64
    %v3046 = vpop.permute.xlu0 %3045
    %v3049 = vsel %vm134, %v2587, 0
    %3051 = vmatprep.subr.mxu0 0.0
    %3052 = vmatpush1.msra.mxu0 %v3046
    %3053 = vmatprep.subr.mxu0 0.0
    %3054 = vmatpush1.msra.mxu0 0.0
    %3055 = vmatprep.subr.mxu0 0.0
    %3056 = vmatpush1.msra.mxu0 0.0
    %3057 = vmatprep.subr.mxu0 0.0
    %3058 = vmatpush1.msra.mxu0 0.0
    %3059 = vmatprep.subr.mxu0 0.0
    %3060 = vmatpush1.msra.mxu0 0.0
    %3061 = vmatprep.subr.mxu0 0.0
    %3062 = vmatpush1.msra.mxu0 0.0
    %3063 = vmatprep.subr.mxu0 0.0
    %3064 = vmatpush1.msra.mxu0 0.0
    %3065 = vmatprep.subr.mxu0 0.0
    %3066 = vmatpush1.msra.mxu0 0.0
    %3067 = vmatprep.subr.mxu0 0.0
    %3068 = vmatpush1.msra.mxu0 0.0
    %3069 = vmatprep.subr.mxu0 0.0
    %3070 = vmatpush1.msra.mxu0 0.0
    %3071 = vmatprep.subr.mxu0 0.0
    %3072 = vmatpush1.msra.mxu0 0.0
    %3073 = vmatprep.subr.mxu0 0.0
    %3074 = vmatpush1.msra.mxu0 0.0
    %3075 = vmatprep.subr.mxu0 0.0
    %3076 = vmatpush1.msra.mxu0 0.0
    %3077 = vmatprep.subr.mxu0 0.0
    %3078 = vmatpush1.msra.mxu0 0.0
    %3079 = vmatprep.subr.mxu0 0.0
    %3080 = vmatpush1.msra.mxu0 0.0
    %3081 = vmatprep.subr.mxu0 0.0
    %3082 = vmatpush1.msra.mxu0 0.0
    %3083 = vmatprep.subr.mxu0 0.0
    %3084 = vmatpush1.msra.mxu0 0.0
    %3085 = vmatprep.subr.mxu0 0.0
    %3086 = vmatpush1.msra.mxu0 0.0
    %3087 = vmatprep.subr.mxu0 0.0
    %3088 = vmatpush1.msra.mxu0 0.0
    %3089 = vmatprep.subr.mxu0 0.0
    %3090 = vmatpush1.msra.mxu0 0.0
    %3091 = vmatprep.subr.mxu0 0.0
    %3092 = vmatpush1.msra.mxu0 0.0
    %3093 = vmatprep.subr.mxu0 0.0
    %3094 = vmatpush1.msra.mxu0 0.0
    %3095 = vmatprep.subr.mxu0 0.0
    %3096 = vmatpush1.msra.mxu0 0.0
    %3097 = vmatprep.subr.mxu0 0.0
    %3098 = vmatpush1.msra.mxu0 0.0
    %3099 = vmatprep.subr.mxu0 0.0
    %3100 = vmatpush1.msra.mxu0 0.0
    %3101 = vmatprep.subr.mxu0 0.0
    %3102 = vmatpush1.msra.mxu0 0.0
    %3103 = vmatprep.subr.mxu0 0.0
    %3104 = vmatpush1.msra.mxu0 0.0
    %3105 = vmatprep.subr.mxu0 0.0
    %3106 = vmatpush1.msra.mxu0 0.0
    %3107 = vmatprep.subr.mxu0 0.0
    %3108 = vmatpush1.msra.mxu0 0.0
    %3109 = vmatprep.subr.mxu0 0.0
    %3110 = vmatpush1.msra.mxu0 0.0
    %3111 = vmatprep.subr.mxu0 0.0
    %3112 = vmatpush1.msra.mxu0 0.0
    %3113 = vmatprep.subr.mxu0 0.0
    %3114 = vmatpush1.msra.mxu0 0.0
    %3115 = vmatprep.mubr.f32.mxu0 0.0
    %3116 = vmatmul.mubr.f32.gmra.mrb[0].mxu0 %v3049
    %v3117 = vpop.f32.mrb[0].mxu0
    %v3118 = vadd.f32 0.0, %v3117
    %v3119 = vpop.f32.mrb[0].mxu0
    %3120 = vdwg.mxu0
    %3121 = vrot.lane.b32.xlu0 %v1892, 64
    %v3122 = vpop.permute.xlu0 %3121
    %v3125 = vsel %vm134, %v2588, 0
    %3127 = vmatprep.subr.mxu0 0.0
    %3128 = vmatpush1.msra.mxu0 %v3122
    %3129 = vmatprep.subr.mxu0 0.0
    %3130 = vmatpush1.msra.mxu0 0.0
    %3131 = vmatprep.subr.mxu0 0.0
    %3132 = vmatpush1.msra.mxu0 0.0
    %3133 = vmatprep.subr.mxu0 0.0
    %3134 = vmatpush1.msra.mxu0 0.0
    %3135 = vmatprep.subr.mxu0 0.0
    %3136 = vmatpush1.msra.mxu0 0.0
    %3137 = vmatprep.subr.mxu0 0.0
    %3138 = vmatpush1.msra.mxu0 0.0
    %3139 = vmatprep.subr.mxu0 0.0
    %3140 = vmatpush1.msra.mxu0 0.0
    %3141 = vmatprep.subr.mxu0 0.0
    %3142 = vmatpush1.msra.mxu0 0.0
    %3143 = vmatprep.subr.mxu0 0.0
    %3144 = vmatpush1.msra.mxu0 0.0
    %3145 = vmatprep.subr.mxu0 0.0
    %3146 = vmatpush1.msra.mxu0 0.0
    %3147 = vmatprep.subr.mxu0 0.0
    %3148 = vmatpush1.msra.mxu0 0.0
    %3149 = vmatprep.subr.mxu0 0.0
    %3150 = vmatpush1.msra.mxu0 0.0
    %3151 = vmatprep.subr.mxu0 0.0
    %3152 = vmatpush1.msra.mxu0 0.0
    %3153 = vmatprep.subr.mxu0 0.0
    %3154 = vmatpush1.msra.mxu0 0.0
    %3155 = vmatprep.subr.mxu0 0.0
    %3156 = vmatpush1.msra.mxu0 0.0
    %3157 = vmatprep.subr.mxu0 0.0
    %3158 = vmatpush1.msra.mxu0 0.0
    %3159 = vmatprep.subr.mxu0 0.0
    %3160 = vmatpush1.msra.mxu0 0.0
    %3161 = vmatprep.subr.mxu0 0.0
    %3162 = vmatpush1.msra.mxu0 0.0
    %3163 = vmatprep.subr.mxu0 0.0
    %3164 = vmatpush1.msra.mxu0 0.0
    %3165 = vmatprep.subr.mxu0 0.0
    %3166 = vmatpush1.msra.mxu0 0.0
    %3167 = vmatprep.subr.mxu0 0.0
    %3168 = vmatpush1.msra.mxu0 0.0
    %3169 = vmatprep.subr.mxu0 0.0
    %3170 = vmatpush1.msra.mxu0 0.0
    %3171 = vmatprep.subr.mxu0 0.0
    %3172 = vmatpush1.msra.mxu0 0.0
    %3173 = vmatprep.subr.mxu0 0.0
    %3174 = vmatpush1.msra.mxu0 0.0
    %3175 = vmatprep.subr.mxu0 0.0
    %3176 = vmatpush1.msra.mxu0 0.0
    %3177 = vmatprep.subr.mxu0 0.0
    %3178 = vmatpush1.msra.mxu0 0.0
    %3179 = vmatprep.subr.mxu0 0.0
    %3180 = vmatpush1.msra.mxu0 0.0
    %3181 = vmatprep.subr.mxu0 0.0
    %3182 = vmatpush1.msra.mxu0 0.0
    %3183 = vmatprep.subr.mxu0 0.0
    %3184 = vmatpush1.msra.mxu0 0.0
    %3185 = vmatprep.subr.mxu0 0.0
    %3186 = vmatpush1.msra.mxu0 0.0
    %3187 = vmatprep.subr.mxu0 0.0
    %3188 = vmatpush1.msra.mxu0 0.0
    %3189 = vmatprep.subr.mxu0 0.0
    %3190 = vmatpush1.msra.mxu0 0.0
    %3191 = vmatprep.mubr.f32.mxu0 0.0
    %3192 = vmatmul.mubr.f32.gmra.mrb[0].mxu0 %v3125
    %v3193 = vpop.f32.mrb[0].mxu0
    %v3194 = vadd.f32 0.0, %v3193
    %v3195 = vpop.f32.mrb[0].mxu0
    %3196 = vdwg.mxu0
    %3199 = vrot.lane.b32.xlu0 %v2814, 8
    %v3200 = vpop.permute.xlu0 %3199
    %3201 = vrot.lane.b32.xlu0 %v2890, 8
    %v3202 = vpop.permute.xlu0 %3201
    %3207 = vrot.lane.b32.xlu0 %v2966, 16
    %v3208 = vpop.permute.xlu0 %3207
    %3209 = vrot.lane.b32.xlu0 %v3042, 16
    %v3210 = vpop.permute.xlu0 %3209
    %3215 = vrot.lane.b32.xlu0 %v3118, 24
    %v3216 = vpop.permute.xlu0 %3215
    %3217 = vrot.lane.b32.xlu0 %v3194, 24
    %v3218 = vpop.permute.xlu0 %3217
    %v3221 = vsel %vm134, %v2662, %v3200
    %v3222 = vsel %vm134, %v2738, %v3202
    %v3223 = vsel %vm1463, %v3221, %v3208
    %v3224 = vsel %vm1463, %v3222, %v3210
    %v3225 = vsel %vm1466, %v3223, %v3216
    %v3226 = vsel %vm1466, %v3224, %v3218
    %v3227 = vpack.c.bf16 %v3226, %v3225
    %v3228 = vlaneseq
    %v3229 = vshrl.u32 %v3228, 7
    %v3230 = vsub.s32 1, %v3229
    %v3231 = vrot.slane %v1817, %v3230
    %v3236 = vunpack.c.l.b16 %v1790
    %v3237 = vunpack.c.l.b16 %v1791
    %v3238 = vunpack.c.l.b16 %v1792
    %v3239 = vunpack.c.l.b16 %v1793
    %v3240 = vpack.c.b16 %v3237, %v3236
    %v3241 = vpack.c.b16 %v3239, %v3238
    %v3245 = vsel %vm73, %v3227, 0
    %3247 = vmatprep.subr.bf16.mxu0 0
    %3248 = vmatpush1.bf16.msra.mxu0 %v3240
    %3249 = vmatprep.subr.bf16.mxu0 0
    %3250 = vmatpush1.bf16.msra.mxu0 %v3241
    %3251 = vmatprep.subr.bf16.mxu0 0
    %3252 = vmatpush1.bf16.msra.mxu0 0
    %3253 = vmatprep.subr.bf16.mxu0 0
    %3254 = vmatpush1.bf16.msra.mxu0 0
    %3255 = vmatprep.subr.bf16.mxu0 0
    %3256 = vmatpush1.bf16.msra.mxu0 0
    %3257 = vmatprep.subr.bf16.mxu0 0
    %3258 = vmatpush1.bf16.msra.mxu0 0
    %3259 = vmatprep.subr.bf16.mxu0 0
    %3260 = vmatpush1.bf16.msra.mxu0 0
    %3261 = vmatprep.subr.bf16.mxu0 0
    %3262 = vmatpush1.bf16.msra.mxu0 0
    %3263 = vmatprep.subr.bf16.mxu0 0
    %3264 = vmatpush1.bf16.msra.mxu0 0
    %3265 = vmatprep.subr.bf16.mxu0 0
    %3266 = vmatpush1.bf16.msra.mxu0 0
    %3267 = vmatprep.subr.bf16.mxu0 0
    %3268 = vmatpush1.bf16.msra.mxu0 0
    %3269 = vmatprep.subr.bf16.mxu0 0
    %3270 = vmatpush1.bf16.msra.mxu0 0
    %3271 = vmatprep.subr.bf16.mxu0 0
    %3272 = vmatpush1.bf16.msra.mxu0 0
    %3273 = vmatprep.subr.bf16.mxu0 0
    %3274 = vmatpush1.bf16.msra.mxu0 0
    %3275 = vmatprep.subr.bf16.mxu0 0
    %3276 = vmatpush1.bf16.msra.mxu0 0
    %3277 = vmatprep.subr.bf16.mxu0 0
    %3278 = vmatpush1.bf16.msra.mxu0 0
    %3279 = vmatprep.mubr.bf16.mxu0 0
    %3280 = vmatmul.mubr.bf16.gmra.mrb[0].mxu0 %v3245
    %v3281 = vpop.f32.mrb[0].mxu0
    %v3282 = vadd.f32 %v3231, %v3281
    %v3283 = vpop.f32.mrb[0].mxu0
    %v3284 = vpop.f32.mrb[0].mxu0
    %v3285 = vadd.f32 %v3231, %v3284
    %v3286 = vpop.f32.mrb[0].mxu0
    %3287 = vdwg.mxu0
    %v3288 = vadd.f32 %v1782, %v3282
    %v3289 = vadd.f32 %v1783, %v3285
    %v3290 = vsel %vm73, %v3288, 0.0
    %3291 = vadd.xlane.f32.xlu0 %v3290
    %v3292 = vpop.xlane.xlu0 %3291
    %v3293 = vsel %vm73, %v3289, 0.0
    %3294 = vadd.xlane.f32.xlu0 %v3293
    %v3295 = vpop.xlane.xlu0 %3294
    %v3296 = vmul.f32 %v3292, %v1538
    %v3297 = vmul.f32 %v3295, %v1538
    %v3298 = vsub.f32 %v3288, %v3296
    %v3299 = vsub.f32 %v3289, %v3297
    %v3300 = vmul.f32 %v3298, %v3298
    %v3301 = vmul.f32 %v3299, %v3299
    %v3302 = vsel %vm73, %v3300, 0.0
    %3303 = vadd.xlane.f32.xlu0 %v3302
    %v3304 = vpop.xlane.xlu0 %3303
    %v3305 = vsel %vm73, %v3301, 0.0
    %3306 = vadd.xlane.f32.xlu0 %v3305
    %v3307 = vpop.xlane.xlu0 %3306
    %v3308 = vmul.f32 %v3304, %v1538
    %v3309 = vmul.f32 %v3307, %v1538
    %v3310 = vadd.f32 %v3308, 1e-12
    %v3311 = vadd.f32 %v3309, 1e-12
    %v3312 = vrsqrt.pop %v3310
    %v3313 = vrsqrt.pop %v3311
    %v3314 = vmul.f32 %v3298, %v3312
    %v3315 = vmul.f32 %v3299, %v3313
    %v3316 = vlaneseq
    %v3317 = vshrl.u32 %v3316, 7
    %v3318 = vsub.s32 2, %v3317
    %v3319 = vrot.slane %v1817, %v3318
    %v3320 = vmul.f32 %v3314, %v3319
    %v3321 = vmul.f32 %v3315, %v3319
    %v3322 = vlaneseq
    %v3323 = vshrl.u32 %v3322, 7
    %v3324 = vsub.s32 3, %v3323
    %v3325 = vrot.slane %v1817, %v3324
    %v3326 = vadd.f32 %v3320, %v3325
    %v3327 = vadd.f32 %v3321, %v3325
    %v3328 = vpack.c.bf16 %v3327, %v3326
    %v3329 = vlaneseq
    %v3330 = vshrl.u32 %v3329, 7
    %v3331 = vsub.s32 4, %v3330
    %v3332 = vrot.slane %v1817, %v3331
    %v3337 = vunpack.c.l.b16 %v1795
    %v3338 = vunpack.c.l.b16 %v1796
    %v3339 = vunpack.c.l.b16 %v1797
    %v3340 = vunpack.c.l.b16 %v1798
    %v3341 = vpack.c.b16 %v3338, %v3337
    %v3342 = vpack.c.b16 %v3340, %v3339
    %v3346 = vsel %vm73, %v3328, 0
    %3348 = vmatprep.subr.bf16.mxu0 0
    %3349 = vmatpush1.bf16.msra.mxu0 %v3341
    %3350 = vmatprep.subr.bf16.mxu0 0
    %3351 = vmatpush1.bf16.msra.mxu0 %v3342
    %3352 = vmatprep.subr.bf16.mxu0 0
    %3353 = vmatpush1.bf16.msra.mxu0 0
    %3354 = vmatprep.subr.bf16.mxu0 0
    %3355 = vmatpush1.bf16.msra.mxu0 0
    %3356 = vmatprep.subr.bf16.mxu0 0
    %3357 = vmatpush1.bf16.msra.mxu0 0
    %3358 = vmatprep.subr.bf16.mxu0 0
    %3359 = vmatpush1.bf16.msra.mxu0 0
    %3360 = vmatprep.subr.bf16.mxu0 0
    %3361 = vmatpush1.bf16.msra.mxu0 0
    %3362 = vmatprep.subr.bf16.mxu0 0
    %3363 = vmatpush1.bf16.msra.mxu0 0
    %3364 = vmatprep.subr.bf16.mxu0 0
    %3365 = vmatpush1.bf16.msra.mxu0 0
    %3366 = vmatprep.subr.bf16.mxu0 0
    %3367 = vmatpush1.bf16.msra.mxu0 0
    %3368 = vmatprep.subr.bf16.mxu0 0
    %3369 = vmatpush1.bf16.msra.mxu0 0
    %3370 = vmatprep.subr.bf16.mxu0 0
    %3371 = vmatpush1.bf16.msra.mxu0 0
    %3372 = vmatprep.subr.bf16.mxu0 0
    %3373 = vmatpush1.bf16.msra.mxu0 0
    %3374 = vmatprep.subr.bf16.mxu0 0
    %3375 = vmatpush1.bf16.msra.mxu0 0
    %3376 = vmatprep.subr.bf16.mxu0 0
    %3377 = vmatpush1.bf16.msra.mxu0 0
    %3378 = vmatprep.subr.bf16.mxu0 0
    %3379 = vmatpush1.bf16.msra.mxu0 0
    %3380 = vmatprep.mubr.bf16.mxu0 0
    %3381 = vmatmul.mubr.bf16.gmra.mrb[0].mxu0 %v3346
    %v3382 = vpop.f32.mrb[0].mxu0
    %v3383 = vadd.f32 %v3332, %v3382
    %v3384 = vpop.f32.mrb[0].mxu0
    %v3385 = vpop.f32.mrb[0].mxu0
    %v3386 = vadd.f32 %v3332, %v3385
    %v3387 = vpop.f32.mrb[0].mxu0
    %3388 = vdwg.mxu0
    %v3389 = vmul.f32 %v3383, %v3383
    %v3390 = vmul.f32 %v3386, %v3386
    %v3391 = vmul.f32 %v3383, %v3389
    %v3392 = vmul.f32 %v3386, %v3390
    %v3393 = vmul.f32 %v3391, 0.044715
    %v3394 = vmul.f32 %v3392, 0.044715
    %v3395 = vadd.f32 %v3383, %v3393
    %v3396 = vadd.f32 %v3386, %v3394
    %v3397 = vmul.f32 %v3395, 0.7978846
    %v3398 = vmul.f32 %v3396, 0.7978846
    %v3399 = vtanh.pop %v3397
    %v3400 = vtanh.pop %v3398
    %v3401 = vadd.f32 %v3399, 1.0
    %v3402 = vadd.f32 %v3400, 1.0
    %v3403 = vmul.f32 %v3401, 0.5
    %v3404 = vmul.f32 %v3402, 0.5
    %v3405 = vmul.f32 %v3383, %v3403
    %v3406 = vmul.f32 %v3386, %v3404
    %v3407 = vpack.c.bf16 %v3406, %v3405
    %v3408 = vlaneseq
    %v3409 = vshrl.u32 %v3408, 7
    %v3410 = vsub.s32 5, %v3409
    %v3411 = vrot.slane %v1817, %v3410
    %v3428 = vunpack.c.l.b16 %v1800
    %v3429 = vunpack.c.l.b16 %v1801
    %v3430 = vunpack.c.l.b16 %v1802
    %v3431 = vunpack.c.l.b16 %v1803
    %v3432 = vunpack.c.l.b16 %v1804
    %v3433 = vunpack.c.l.b16 %v1805
    %v3434 = vunpack.c.l.b16 %v1806
    %v3435 = vunpack.c.l.b16 %v1807
    %v3436 = vunpack.c.l.b16 %v1808
    %v3437 = vunpack.c.l.b16 %v1809
    %v3438 = vunpack.c.l.b16 %v1810
    %v3439 = vunpack.c.l.b16 %v1811
    %v3440 = vunpack.c.l.b16 %v1812
    %v3441 = vunpack.c.l.b16 %v1813
    %v3442 = vunpack.c.l.b16 %v1814
    %v3443 = vunpack.c.l.b16 %v1815
    %v3444 = vpack.c.b16 %v3429, %v3428
    %v3445 = vpack.c.b16 %v3431, %v3430
    %v3446 = vpack.c.b16 %v3433, %v3432
    %v3447 = vpack.c.b16 %v3435, %v3434
    %v3448 = vpack.c.b16 %v3437, %v3436
    %v3449 = vpack.c.b16 %v3439, %v3438
    %v3450 = vpack.c.b16 %v3441, %v3440
    %v3451 = vpack.c.b16 %v3443, %v3442
    %3460 = vmatprep.subr.bf16.mxu0 0
    %3461 = vmatpush1.bf16.msra.mxu0 %v3444
    %3462 = vmatprep.subr.bf16.mxu0 0
    %3463 = vmatpush1.bf16.msra.mxu0 %v3445
    %3464 = vmatprep.subr.bf16.mxu0 0
    %3465 = vmatpush1.bf16.msra.mxu0 %v3446
    %3466 = vmatprep.subr.bf16.mxu0 0
    %3467 = vmatpush1.bf16.msra.mxu0 %v3447
    %3468 = vmatprep.subr.bf16.mxu0 0
    %3469 = vmatpush1.bf16.msra.mxu0 %v3448
    %3470 = vmatprep.subr.bf16.mxu0 0
    %3471 = vmatpush1.bf16.msra.mxu0 %v3449
    %3472 = vmatprep.subr.bf16.mxu0 0
    %3473 = vmatpush1.bf16.msra.mxu0 %v3450
    %3474 = vmatprep.subr.bf16.mxu0 0
    %3475 = vmatpush1.bf16.msra.mxu0 %v3451
    %3476 = vmatprep.subr.bf16.mxu0 0
    %3477 = vmatpush1.bf16.msra.mxu0 0
    %3478 = vmatprep.subr.bf16.mxu0 0
    %3479 = vmatpush1.bf16.msra.mxu0 0
    %3480 = vmatprep.subr.bf16.mxu0 0
    %3481 = vmatpush1.bf16.msra.mxu0 0
    %3482 = vmatprep.subr.bf16.mxu0 0
    %3483 = vmatpush1.bf16.msra.mxu0 0
    %3484 = vmatprep.subr.bf16.mxu0 0
    %3485 = vmatpush1.bf16.msra.mxu0 0
    %3486 = vmatprep.subr.bf16.mxu0 0
    %3487 = vmatpush1.bf16.msra.mxu0 0
    %3488 = vmatprep.subr.bf16.mxu0 0
    %3489 = vmatpush1.bf16.msra.mxu0 0
    %3490 = vmatprep.subr.bf16.mxu0 0
    %3491 = vmatpush1.bf16.msra.mxu0 0
    %3492 = vmatprep.mubr.bf16.mxu0 0
    %3493 = vmatmul.mubr.bf16.gmra.mrb[0].mxu0 %v3407
    %v3494 = vpop.f32.mrb[0].mxu0
    %v3495 = vadd.f32 %v3411, %v3494
    %v3496 = vpop.f32.mrb[0].mxu0
    %v3497 = vpop.f32.mrb[0].mxu0
    %v3498 = vadd.f32 %v3411, %v3497
    %v3499 = vpop.f32.mrb[0].mxu0
    %3500 = vdwg.mxu0
    %v3501 = vadd.f32 %v3326, %v3495
    %v3502 = vadd.f32 %v3327, %v3498
    %v3503 = vsel %vm73, %v3501, 0.0
    %3504 = vadd.xlane.f32.xlu0 %v3503
    %v3505 = vpop.xlane.xlu0 %3504
    %v3506 = vsel %vm73, %v3502, 0.0
    %3507 = vadd.xlane.f32.xlu0 %v3506
    %v3508 = vpop.xlane.xlu0 %3507
    %v3509 = vmul.f32 %v3505, %v1538
    %v3510 = vmul.f32 %v3508, %v1538
    %v3511 = vsub.f32 %v3501, %v3509
    %v3512 = vsub.f32 %v3502, %v3510
    %v3513 = vmul.f32 %v3511, %v3511
    %v3514 = vmul.f32 %v3512, %v3512
    %v3515 = vsel %vm73, %v3513, 0.0
    %3516 = vadd.xlane.f32.xlu0 %v3515
    %v3517 = vpop.xlane.xlu0 %3516
    %v3518 = vsel %vm73, %v3514, 0.0
    %3519 = vadd.xlane.f32.xlu0 %v3518
    %v3520 = vpop.xlane.xlu0 %3519
    %v3521 = vmul.f32 %v3517, %v1538
    %v3522 = vmul.f32 %v3520, %v1538
    %v3523 = vadd.f32 %v3521, 1e-12
    %v3524 = vadd.f32 %v3522, 1e-12
    %v3525 = vrsqrt.pop %v3523
    %v3526 = vrsqrt.pop %v3524
    %v3527 = vmul.f32 %v3511, %v3525
    %v3528 = vmul.f32 %v3512, %v3526
    %v3529 = vlaneseq
    %v3530 = vshrl.u32 %v3529, 7
    %v3531 = vsub.s32 6, %v3530
    %v3532 = vrot.slane %v1817, %v3531
    %v3533 = vmul.f32 %v3527, %v3532
    %v3534 = vmul.f32 %v3528, %v3532
    %v3535 = vlaneseq
    %v3536 = vshrl.u32 %v3535, 7
    %v3537 = vsub.s32 7, %v3536
    %v3538 = vrot.slane %v1817, %v3537
    %v3539 = vadd.f32 %v3533, %v3538
    %v3540 = vadd.f32 %v3534, %v3538
    %3541 = vst.msk [vmem:[#allocation2] sm:$0xff] %vm73, %v3539
    %3542 = vst.msk [vmem:[#allocation2 + $0x8] sm:$0xff] %vm73, %v3540
    // Predicated region
    $region26: #{bert_encoder.1} parent=1 // pred_check
      _
    $region27: #{bert_encoder.1} parent=1 // pred_check_branch
      %3544 = sbr.rel (0) target = $region29
    $region28: #{bert_encoder.1} parent=1 // pred_region
      %s3546 = ssub.s32 256, 256
      %3547 = vsyncadd [#allocation3], %s3546
      %s3548 = sshll.u32 [#allocation2], 4
      %s3549 = int_to_ptr.vmem [resolvable:$true] %s3548
      %3554 = dma.vmem_to_hbm [thread:$0]  %s3549, 256, %s6, [#allocation3], 128, 128, 8
    $region29: #{bert_encoder.1} parent=1 // pred_fallthru
      _
    // Predicated region
    $region30: #{bert_encoder.1} parent=1 // pred_check
      _
    $region31: #{bert_encoder.1} parent=1 // pred_check_branch
      %3556 = sbr.rel (0) target = $region33
    $region32: #{bert_encoder.1} parent=1 // pred_region
      %3557 = dma.done [#allocation3], 256
    $region33: #{bert_encoder.1} parent=1 // pred_fallthru
      _
    %3558 = vsyncpa [#allocation3], 1

</llo_original>
